<compile_context>
chip_gen: v7x
topology: tpu7x:2x2x1
jax: 0.10.0
libtpu: 0.0.40
codegen_flags: <defaults>
</compile_context>

<pallas_src>
import math

import jax
import jax.numpy as jnp
from jax.experimental import pallas as pl
from jax.experimental.pallas import tpu as pltpu

# ---- small, forward-consistent shapes -------------------------------------
HIDDEN = 128         # module default hidden size (lane-dense)
N_LAYERS = 2         # transformer blocks (stand-in for 12)
N_HEADS = 4          # attention heads (HIDDEN % N_HEADS == 0)
HEAD_DIM = HIDDEN // N_HEADS
FF_HIDDEN = HIDDEN * 4
SEQ = 8
BATCH = 2
B_SPLITS = 1         # set to 2 on v7x to occupy both TensorCores
LN_EPS = 1e-6        # BERT-pytorch LayerNorm eps

# vocab sizes for the 4 token-feature columns of PieceSquareEmbedding
PIECE_VOCAB, SQUARE_VOCAB, ATTR2_VOCAB, ATTR3_VOCAB = 13, 64, 2, 4

# row layout of the packed per-layer vector tile (L, 8, FF_HIDDEN):
#   row 0: qkv bias (3H lanes)   row 1: ffn bias 1 (F lanes)
#   row 2: ln1 gamma             row 3: ln1 beta
#   row 4: attn output bias      row 5: ln2 gamma
#   row 6: ln2 beta              row 7: ffn bias 2


# ---------------------------------------------------------------------------
# shared math helpers (used both inside the kernel and in the JAX reference)
# ---------------------------------------------------------------------------
def _gelu(v):
    # BERT-pytorch GELU (tanh approximation)
    return 0.5 * v * (1.0 + jnp.tanh(
        math.sqrt(2.0 / math.pi) * (v + 0.044715 * v ** 3)))


def _layernorm(v, g, b):
    # matches BERT-pytorch LayerNorm: a_2 * (x - mean) / (std + eps) + b_2,
    # where torch.std uses the unbiased estimator (ddof = 1).
    mean = jnp.mean(v, axis=-1, keepdims=True)
    var = jnp.sum((v - mean) ** 2, axis=-1, keepdims=True) / (v.shape[-1] - 1)
    return g * (v - mean) / (jnp.sqrt(var) + LN_EPS) + b


# ---------------------------------------------------------------------------
# Pallas kernel: one (batch-group, layer) transformer block per grid step
# ---------------------------------------------------------------------------
def transformer_stack_kernel(emb_ref, bias_ref,
                             wattn_ref, w1_ref, w2_ref, vec_ref,
                             o_ref):
    layer = pl.program_id(1)
    H, F, HD = HIDDEN, FF_HIDDEN, HEAD_DIM

    # layer 0: seed the residual stream (carried in the resident output block)
    @pl.when(layer == 0)
    def _():
        o_ref[...] = emb_ref[...]

    x = o_ref[...]                               # (BB, S, H) residual stream
    BB, S = x.shape[0], x.shape[1]
    x2 = x.reshape(BB * S, H)                    # flatten batch for matmuls

    # ---- unpack the fused per-layer parameters (loaded once per step) ------
    vec = vec_ref[0]                             # (8, F) f32
    b_qkv = vec[0:1, :3 * H]                     # (1, 3H)
    b_1 = vec[1:2, :F]                           # (1, F)
    ln1_g = vec[2:3, :H]
    ln1_b = vec[3:4, :H]
    b_o = vec[4:5, :H]
    ln2_g = vec[5:6, :H]
    ln2_b = vec[6:7, :H]
    b_2 = vec[7:8, :H]

    w_attn = wattn_ref[0].astype(jnp.float32)    # (H, 4H): [wq | wk | wv | wo]
    w_qkv = w_attn[:, :3 * H]
    w_o = w_attn[:, 3 * H:]
    w_1 = w1_ref[0].astype(jnp.float32)          # (H, F)
    w_2 = w2_ref[0].astype(jnp.float32)          # (F, H)

    key_bias = bias_ref[...]                     # (BB, 1, S): 0 / -1e9, hoisted
    scale = 1.0 / math.sqrt(HD)

    # ---- attention sublayer: x + MHA(LayerNorm(x)) --------------------------
    h = _layernorm(x2, ln1_g, ln1_b)             # (BB*S, H)
    qkv = jnp.dot(h, w_qkv, preferred_element_type=jnp.float32) + b_qkv
    q = qkv[:, :H].reshape(BB, S, H)
    k = qkv[:, H:2 * H].reshape(BB, S, H)
    v = qkv[:, 2 * H:].reshape(BB, S, H)

    attn = jnp.zeros((BB * S, H), jnp.float32)
    for hd in range(N_HEADS):                    # static unroll over heads
        lo = hd * HD
        qh = q[:, :, lo:lo + HD]                 # (BB, S, HD)
        kh = k[:, :, lo:lo + HD]
        vh = v[:, :, lo:lo + HD]
        s = jnp.einsum('bqd,bkd->bqk', qh, kh,
                       preferred_element_type=jnp.float32) * scale
        s = s + key_bias                         # additive mask (== masked_fill -1e9)
        s = s - jnp.max(s, axis=-1, keepdims=True)
        p = jnp.exp(s)
        p = p * pl.reciprocal(jnp.sum(p, axis=-1, keepdims=True), approx=True)
        ctx = jnp.einsum('bqk,bkd->bqd', p, vh,
                         preferred_element_type=jnp.float32)
        # accumulate directly through the matching rows of wo (no concatenate)
        attn = attn + jnp.dot(ctx.reshape(BB * S, HD), w_o[lo:lo + HD, :],
                              preferred_element_type=jnp.float32)
    x2 = x2 + attn + b_o                         # dropout == identity at inference

    # ---- feed-forward sublayer: x + FFN(LayerNorm(x)) ------------------------
    h2 = _layernorm(x2, ln2_g, ln2_b)
    ff = _gelu(jnp.dot(h2, w_1, preferred_element_type=jnp.float32) + b_1)
    ff = jnp.dot(ff, w_2, preferred_element_type=jnp.float32) + b_2
    x2 = x2 + ff

    o_ref[...] = x2.reshape(BB, S, H)


# ---------------------------------------------------------------------------
# parameters
# ---------------------------------------------------------------------------
def init_params(key):
    ks = jax.random.split(key, 16)
    std = 0.02
    L, H, F = N_LAYERS, HIDDEN, FF_HIDDEN

    def nrm(k, shape):
        return (std * jax.random.normal(k, shape)).astype(jnp.float32)

    # packed per-layer small vectors (f32): see row layout at top of file.
    vecs = jnp.zeros((L, 8, F), jnp.float32)
    vecs = vecs.at[:, 0, :3 * H].set(nrm(ks[7], (L, 3 * H)))      # b_qkv
    vecs = vecs.at[:, 1, :].set(nrm(ks[8], (L, F)))               # b_1
    vecs = vecs.at[:, 2, :H].set(1.0 + nrm(ks[9], (L, H)))        # ln1 gamma
    vecs = vecs.at[:, 3, :H].set(nrm(ks[10], (L, H)))             # ln1 beta
    vecs = vecs.at[:, 4, :H].set(nrm(ks[11], (L, H)))             # b_o
    vecs = vecs.at[:, 5, :H].set(1.0 + nrm(ks[12], (L, H)))       # ln2 gamma
    vecs = vecs.at[:, 6, :H].set(nrm(ks[13], (L, H)))             # ln2 beta
    vecs = vecs.at[:, 7, :H].set(nrm(ks[14], (L, H)))             # b_2

    params = {
        # embedding tables (one per token-feature column, summed), f32
        "emb_piece":  nrm(ks[0], (PIECE_VOCAB, H)),
        "emb_square": nrm(ks[1], (SQUARE_VOCAB, H)),
        "emb_attr2":  nrm(ks[2], (ATTR2_VOCAB, H)),
        "emb_attr3":  nrm(ks[3], (ATTR3_VOCAB, H)),
        # fused, bf16-streamed transformer weights (f32 accumulation in-kernel)
        "w_attn": nrm(ks[4], (L, H, 4 * H)).astype(jnp.bfloat16),  # [wq|wk|wv|wo]
        "w1":     nrm(ks[5], (L, H, F)).astype(jnp.bfloat16),
        "w2":     nrm(ks[6], (L, F, H)).astype(jnp.bfloat16),
        "vecs":   vecs,
    }
    return params


# TODO(synk): exact PieceSquareEmbedding internals are not given in the spec;
# we assume the standard pattern of summing one embedding table per input
# feature column (piece, square, two auxiliary attributes), dropout = identity.
def embed(x_tokens, params):
    e = (params["emb_piece"][x_tokens[:, :, 0]]
         + params["emb_square"][x_tokens[:, :, 1]]
         + params["emb_attr2"][x_tokens[:, :, 2]]
         + params["emb_attr3"][x_tokens[:, :, 3]])
    return e.astype(jnp.float32)


# ---------------------------------------------------------------------------
# wrapper around pallas_call
# ---------------------------------------------------------------------------
def chessbert_forward(x_tokens, params):
    B, S, H, F, L = BATCH, SEQ, HIDDEN, FF_HIDDEN, N_LAYERS
    assert B % B_SPLITS == 0
    BB = B // B_SPLITS

    emb = embed(x_tokens, params)                                   # (B, S, H)
    # key-only additive mask bias: 0 where a piece is present, -1e9 at padding.
    # Equivalent to masked_fill(mask == 0, -1e9) in the original module.
    key_bias = jnp.where(x_tokens[:, :, 0] > 0, 0.0, -1e9)
    key_bias = key_bias.astype(jnp.float32)[:, None, :]             # (B, 1, S)

    def per_bgroup(shape):
        return pl.BlockSpec(shape, lambda g, l: (g, 0, 0))

    def per_layer(shape):
        return pl.BlockSpec(shape, lambda g, l: (l, 0, 0))

    io_spec = per_bgroup((BB, S, H))
    in_specs = [
        io_spec,                          # embeddings (consumed at layer 0 only)
        per_bgroup((BB, 1, S)),           # additive attention mask bias
        per_layer((1, H, 4 * H)),         # fused [wq|wk|wv|wo], bf16
        per_layer((1, H, F)),             # w1, bf16
        per_layer((1, F, H)),             # w2, bf16
        per_layer((1, 8, F)),             # packed LN params + biases, f32
    ]

    return pl.pallas_call(
        transformer_stack_kernel,
        out_shape=jax.ShapeDtypeStruct((B, S, H), jnp.float32),
        grid_spec=pltpu.PrefetchScalarGridSpec(
            num_scalar_prefetch=0,
            grid=(B_SPLITS, L),           # layer (carry) axis last
            in_specs=in_specs,
            out_specs=io_spec,            # same block across layers => residual carry
        ),
        compiler_params=pltpu.CompilerParams(
            dimension_semantics=("parallel", "arbitrary")),
    )(emb, key_bias, params["w_attn"], params["w1"], params["w2"], params["vecs"])


# ---------------------------------------------------------------------------
# pure-JAX reference (same math, batched) for a correctness check
# ---------------------------------------------------------------------------
def reference_forward(x_tokens, params):
    B, S, H, F = BATCH, SEQ, HIDDEN, FF_HIDDEN
    NH, HD = N_HEADS, HEAD_DIM
    x = embed(x_tokens, params)
    mask = (x_tokens[:, :, 0] > 0)[:, None, None, :]                # (B,1,1,S)

    for l in range(N_LAYERS):
        vec = params["vecs"][l]
        b_q, b_k, b_v = vec[0, :H], vec[0, H:2 * H], vec[0, 2 * H:3 * H]
        b_1 = vec[1, :]
        ln1_g, ln1_b = vec[2, :H], vec[3, :H]
        b_o = vec[4, :H]
        ln2_g, ln2_b = vec[5, :H], vec[6, :H]
        b_2 = vec[7, :H]
        w_attn = params["w_attn"][l].astype(jnp.float32)
        wq, wk = w_attn[:, :H], w_attn[:, H:2 * H]
        wv, wo = w_attn[:, 2 * H:3 * H], w_attn[:, 3 * H:]
        w1 = params["w1"][l].astype(jnp.float32)
        w2 = params["w2"][l].astype(jnp.float32)

        h = _layernorm(x, ln1_g, ln1_b)
        q = h @ wq + b_q
        k = h @ wk + b_k
        v = h @ wv + b_v
        qh = q.reshape(B, S, NH, HD).transpose(0, 2, 1, 3)
        kh = k.reshape(B, S, NH, HD).transpose(0, 2, 1, 3)
        vh = v.reshape(B, S, NH, HD).transpose(0, 2, 1, 3)
        s = jnp.einsum("bhqd,bhkd->bhqk", qh, kh) / math.sqrt(HD)
        s = jnp.where(mask, s, -1e9)
        p = jax.nn.softmax(s, axis=-1)
        ctx = jnp.einsum("bhqk,bhkd->bhqd", p, vh)
        ctx = ctx.transpose(0, 2, 1, 3).reshape(B, S, H)
        x = x + ctx @ wo + b_o

        h2 = _layernorm(x, ln2_g, ln2_b)
        ff = _gelu(h2 @ w1 + b_1)
        x = x + ff @ w2 + b_2
    return x


# ---------------------------------------------------------------------------
if __name__ == "__main__":
    key = jax.random.PRNGKey(0)
    kp, kt = jax.random.split(key)
    params = init_params(kp)

    k0, k1, k2, k3 = jax.random.split(kt, 4)
    x_tokens = jnp.stack([
        jax.random.randint(k0, (BATCH, SEQ), 0, PIECE_VOCAB),   # piece (0 = pad)
        jax.random.randint(k1, (BATCH, SEQ), 0, SQUARE_VOCAB),  # square
        jax.random.randint(k2, (BATCH, SEQ), 0, ATTR2_VOCAB),   # attr (e.g. color)
        jax.random.randint(k3, (BATCH, SEQ), 0, ATTR3_VOCAB),   # attr (e.g. castle)
    ], axis=-1).astype(jnp.int32)                               # (B, S, 4)

    out = chessbert_forward(x_tokens, params)
    out = jax.block_until_ready(out)

    ref = reference_forward(x_tokens, params)
    assert out.shape == (BATCH, SEQ, HIDDEN)
    # tolerance 1e-3: allows for the EUP approx-reciprocal softmax denominator;
    # weights are identical (bf16-rounded) on both sides so there is no
    # quantization mismatch.
    assert jnp.allclose(out, ref, rtol=1e-3, atol=1e-3), (
        float(jnp.max(jnp.abs(out - ref))))

    print("KERNEL_OK")
</pallas_src>

<mosaic_0001>
module attributes {stable_mosaic.version = 11 : i64} {
  func.func @transformer_stack_kernel(%arg0: i32, %arg1: i32, %arg2: memref<2x8x128xf32, #tpu.memory_space<vmem>>, %arg3: memref<2x1x8xf32, #tpu.memory_space<vmem>>, %arg4: memref<1x128x512xbf16, #tpu.memory_space<vmem>>, %arg5: memref<1x128x512xbf16, #tpu.memory_space<vmem>>, %arg6: memref<1x512x128xbf16, #tpu.memory_space<vmem>>, %arg7: memref<1x8x512xf32, #tpu.memory_space<vmem>>, %arg8: memref<2x8x128xf32, #tpu.memory_space<vmem>>) attributes {dimension_semantics = [#tpu.dimension_semantics<parallel>, #tpu.dimension_semantics<arbitrary>], iteration_bounds = array<i64: 1, 2>, scalar_prefetch = 0 : i64, scratch_operands = 0 : i64, tpu.core_type = #tpu.core_type<tc>, window_params = [{transform_indices = @transform_0, window_bounds = array<i64: 2, 8, 128>}, {transform_indices = @transform_1, window_bounds = array<i64: 2, 1, 8>}, {transform_indices = @transform_2, window_bounds = array<i64: 1, 128, 512>}, {transform_indices = @transform_3, window_bounds = array<i64: 1, 128, 512>}, {transform_indices = @transform_4, window_bounds = array<i64: 1, 512, 128>}, {transform_indices = @transform_5, window_bounds = array<i64: 1, 8, 512>}, {transform_indices = @transform_6, window_bounds = array<i64: 2, 8, 128>}]} {
    %c0_i32 = arith.constant 0 : i32
    %0 = arith.cmpi eq, %arg1, %c0_i32 : i32
    %1 = arith.extui %0 : i1 to i32
    %c0_i32_0 = arith.constant 0 : i32
    %2 = arith.cmpi ne, %1, %c0_i32_0 : i32
    scf.if %2 {
      %c0_62 = arith.constant 0 : index
      %c0_63 = arith.constant 0 : index
      %c0_64 = arith.constant 0 : index
      %198 = vector.load %arg2[%c0_62, %c0_63, %c0_64] : memref<2x8x128xf32, #tpu.memory_space<vmem>>, vector<2x8x128xf32>
      %c0_65 = arith.constant 0 : index
      %c0_66 = arith.constant 0 : index
      %c0_67 = arith.constant 0 : index
      %199 = vector.load %arg8[%c0_65, %c0_66, %c0_67] : memref<2x8x128xf32, #tpu.memory_space<vmem>>, vector<2x8x128xf32>
      tpu.vector_store %arg8[%c0_65, %c0_66, %c0_67], %198 {strides = array<i32>} : memref<2x8x128xf32, #tpu.memory_space<vmem>>, vector<2x8x128xf32>,
    } else {
    }
    %c0 = arith.constant 0 : index
    %c0_1 = arith.constant 0 : index
    %c0_2 = arith.constant 0 : index
    %3 = vector.load %arg8[%c0, %c0_1, %c0_2] : memref<2x8x128xf32, #tpu.memory_space<vmem>>, vector<2x8x128xf32>
    %4 = vector.shape_cast %3 : vector<2x8x128xf32> to vector<16x128xf32>
    %c0_3 = arith.constant 0 : index
    %c0_4 = arith.constant 0 : index
    %c0_5 = arith.constant 0 : index
    %5 = vector.load %arg7[%c0_3, %c0_4, %c0_5] : memref<1x8x512xf32, #tpu.memory_space<vmem>>, vector<1x8x512xf32>
    %6 = vector.shape_cast %5 : vector<1x8x512xf32> to vector<8x512xf32>
    %7 = vector.extract_strided_slice %6 {offsets = [0, 0], sizes = [1, 384], strides = [1, 1]} : vector<8x512xf32> to vector<1x384xf32>
    %8 = vector.extract_strided_slice %6 {offsets = [1, 0], sizes = [1, 512], strides = [1, 1]} : vector<8x512xf32> to vector<1x512xf32>
    %9 = vector.extract_strided_slice %6 {offsets = [2, 0], sizes = [1, 128], strides = [1, 1]} : vector<8x512xf32> to vector<1x128xf32>
    %10 = vector.extract_strided_slice %6 {offsets = [3, 0], sizes = [1, 128], strides = [1, 1]} : vector<8x512xf32> to vector<1x128xf32>
    %11 = vector.extract_strided_slice %6 {offsets = [4, 0], sizes = [1, 128], strides = [1, 1]} : vector<8x512xf32> to vector<1x128xf32>
    %12 = vector.extract_strided_slice %6 {offsets = [5, 0], sizes = [1, 128], strides = [1, 1]} : vector<8x512xf32> to vector<1x128xf32>
    %13 = vector.extract_strided_slice %6 {offsets = [6, 0], sizes = [1, 128], strides = [1, 1]} : vector<8x512xf32> to vector<1x128xf32>
    %14 = vector.extract_strided_slice %6 {offsets = [7, 0], sizes = [1, 128], strides = [1, 1]} : vector<8x512xf32> to vector<1x128xf32>
    %c0_6 = arith.constant 0 : index
    %c0_7 = arith.constant 0 : index
    %c0_8 = arith.constant 0 : index
    %15 = vector.load %arg4[%c0_6, %c0_7, %c0_8] : memref<1x128x512xbf16, #tpu.memory_space<vmem>>, vector<1x128x512xbf16>
    %16 = vector.shape_cast %15 : vector<1x128x512xbf16> to vector<128x512xbf16>
    %17 = arith.extf %16 : vector<128x512xbf16> to vector<128x512xf32>
    %18 = vector.extract_strided_slice %17 {offsets = [0, 0], sizes = [128, 384], strides = [1, 1]} : vector<128x512xf32> to vector<128x384xf32>
    %19 = vector.extract_strided_slice %17 {offsets = [0, 384], sizes = [128, 128], strides = [1, 1]} : vector<128x512xf32> to vector<128x128xf32>
    %c0_9 = arith.constant 0 : index
    %c0_10 = arith.constant 0 : index
    %c0_11 = arith.constant 0 : index
    %20 = vector.load %arg5[%c0_9, %c0_10, %c0_11] : memref<1x128x512xbf16, #tpu.memory_space<vmem>>, vector<1x128x512xbf16>
    %21 = vector.shape_cast %20 : vector<1x128x512xbf16> to vector<128x512xbf16>
    %22 = arith.extf %21 : vector<128x512xbf16> to vector<128x512xf32>
    %c0_12 = arith.constant 0 : index
    %c0_13 = arith.constant 0 : index
    %c0_14 = arith.constant 0 : index
    %23 = vector.load %arg6[%c0_12, %c0_13, %c0_14] : memref<1x512x128xbf16, #tpu.memory_space<vmem>>, vector<1x512x128xbf16>
    %24 = vector.shape_cast %23 : vector<1x512x128xbf16> to vector<512x128xbf16>
    %25 = arith.extf %24 : vector<512x128xbf16> to vector<512x128xf32>
    %c0_15 = arith.constant 0 : index
    %c0_16 = arith.constant 0 : index
    %c0_17 = arith.constant 0 : index
    %26 = vector.load %arg3[%c0_15, %c0_16, %c0_17] : memref<2x1x8xf32, #tpu.memory_space<vmem>>, vector<2x1x8xf32>
    %cst = arith.constant dense<0.000000e+00> : vector<16xf32>
    %27 = vector.multi_reduction <add>, %4, %cst [1] : vector<16x128xf32> to vector<16xf32>
    %28 = vector.shape_cast %27 : vector<16xf32> to vector<16x1xf32>
    %cst_18 = arith.constant 1.280000e+02 : f32
    %29 = vector.broadcast %cst_18 : f32 to vector<16x1xf32>
    %30 = arith.divf %28, %29 : vector<16x1xf32>
    %31 = vector.broadcast %30 : vector<16x1xf32> to vector<16x128xf32>
    %32 = arith.subf %4, %31 : vector<16x128xf32>
    %33 = arith.mulf %32, %32 : vector<16x128xf32>
    %cst_19 = arith.constant dense<0.000000e+00> : vector<16xf32>
    %34 = vector.multi_reduction <add>, %33, %cst_19 [1] : vector<16x128xf32> to vector<16xf32>
    %35 = vector.shape_cast %34 : vector<16xf32> to vector<16x1xf32>
    %cst_20 = arith.constant 1.270000e+02 : f32
    %36 = vector.broadcast %cst_20 : f32 to vector<16x1xf32>
    %37 = arith.divf %35, %36 : vector<16x1xf32>
    %38 = vector.broadcast %30 : vector<16x1xf32> to vector<16x128xf32>
    %39 = arith.subf %4, %38 : vector<16x128xf32>
    %40 = vector.broadcast %9 : vector<1x128xf32> to vector<16x128xf32>
    %41 = arith.mulf %40, %39 : vector<16x128xf32>
    %42 = math.sqrt %37 : vector<16x1xf32>
    %cst_21 = arith.constant 9.99999997E-7 : f32
    %43 = vector.broadcast %cst_21 : f32 to vector<16x1xf32>
    %44 = arith.addf %42, %43 : vector<16x1xf32>
    %45 = vector.broadcast %44 : vector<16x1xf32> to vector<16x128xf32>
    %46 = arith.divf %41, %45 : vector<16x128xf32>
    %47 = vector.broadcast %10 : vector<1x128xf32> to vector<16x128xf32>
    %48 = arith.addf %46, %47 : vector<16x128xf32>
    %cst_22 = arith.constant dense<0.000000e+00> : vector<16x384xf32>
    %49 = tpu.matmul %48, %18, %cst_22 {dimension_numbers = #tpu.dot_dimension_numbers<[1], [0], [0], [1], [0, 0, 1, 1], [], []>} : vector<16x128xf32>, vector<128x384xf32>, vector<16x384xf32> -> vector<16x384xf32>
    %50 = vector.broadcast %7 : vector<1x384xf32> to vector<16x384xf32>
    %51 = arith.addf %49, %50 : vector<16x384xf32>
    %52 = vector.extract_strided_slice %51 {offsets = [0, 0], sizes = [16, 128], strides = [1, 1]} : vector<16x384xf32> to vector<16x128xf32>
    %53 = vector.shape_cast %52 : vector<16x128xf32> to vector<2x8x128xf32>
    %54 = vector.extract_strided_slice %51 {offsets = [0, 128], sizes = [16, 128], strides = [1, 1]} : vector<16x384xf32> to vector<16x128xf32>
    %55 = vector.shape_cast %54 : vector<16x128xf32> to vector<2x8x128xf32>
    %56 = vector.extract_strided_slice %51 {offsets = [0, 256], sizes = [16, 128], strides = [1, 1]} : vector<16x384xf32> to vector<16x128xf32>
    %57 = vector.shape_cast %56 : vector<16x128xf32> to vector<2x8x128xf32>
    %cst_23 = arith.constant 0.000000e+00 : f32
    %58 = vector.broadcast %cst_23 : f32 to vector<16x128xf32>
    %59 = vector.extract_strided_slice %53 {offsets = [0, 0, 0], sizes = [2, 8, 32], strides = [1, 1, 1]} : vector<2x8x128xf32> to vector<2x8x32xf32>
    %60 = vector.extract_strided_slice %55 {offsets = [0, 0, 0], sizes = [2, 8, 32], strides = [1, 1, 1]} : vector<2x8x128xf32> to vector<2x8x32xf32>
    %61 = vector.extract_strided_slice %57 {offsets = [0, 0, 0], sizes = [2, 8, 32], strides = [1, 1, 1]} : vector<2x8x128xf32> to vector<2x8x32xf32>
    "tpu.trace_start"() <{level = 10 : i32, message = "bqd,bkd->bqk"}> : () -> ()
    %cst_24 = arith.constant dense<0.000000e+00> : vector<2x8x8xf32>
    %62 = tpu.matmul %59, %60, %cst_24 {dimension_numbers = #tpu.dot_dimension_numbers<[2], [2], [1], [1], [0, 0, 0, 1, 1, 1], [0], [0]>} : vector<2x8x32xf32>, vector<2x8x32xf32>, vector<2x8x8xf32> -> vector<2x8x8xf32>
    "tpu.trace_stop"() : () -> ()
    %cst_25 = arith.constant 0.176776692 : f32
    %63 = vector.broadcast %cst_25 : f32 to vector<2x8x8xf32>
    %64 = arith.mulf %62, %63 : vector<2x8x8xf32>
    %65 = vector.broadcast %26 : vector<2x1x8xf32> to vector<2x8x8xf32>
    %66 = arith.addf %64, %65 : vector<2x8x8xf32>
    %cst_26 = arith.constant dense<0xFF800000> : vector<2x8xf32>
    %67 = vector.multi_reduction <maximumf>, %66, %cst_26 [2] : vector<2x8x8xf32> to vector<2x8xf32>
    %68 = vector.shape_cast %67 : vector<2x8xf32> to vector<2x8x1xf32>
    %69 = vector.broadcast %68 : vector<2x8x1xf32> to vector<2x8x8xf32>
    %70 = arith.subf %66, %69 : vector<2x8x8xf32>
    %71 = math.exp %70 : vector<2x8x8xf32>
    %cst_27 = arith.constant dense<0.000000e+00> : vector<2x8xf32>
    %72 = vector.multi_reduction <add>, %71, %cst_27 [2] : vector<2x8x8xf32> to vector<2x8xf32>
    %73 = vector.shape_cast %72 : vector<2x8xf32> to vector<2x8x1xf32>
    %74 = tpu.reciprocal %73 {approx = true} : vector<2x8x1xf32> -> vector<2x8x1xf32>
    %75 = vector.broadcast %74 : vector<2x8x1xf32> to vector<2x8x8xf32>
    %76 = arith.mulf %71, %75 : vector<2x8x8xf32>
    "tpu.trace_start"() <{level = 10 : i32, message = "bqk,bkd->bqd"}> : () -> ()
    %cst_28 = arith.constant dense<0.000000e+00> : vector<2x8x32xf32>
    %77 = tpu.matmul %76, %61, %cst_28 {dimension_numbers = #tpu.dot_dimension_numbers<[2], [1], [1], [2], [0, 0, 0, 1, 1, 2], [0], [0]>} : vector<2x8x8xf32>, vector<2x8x32xf32>, vector<2x8x32xf32> -> vector<2x8x32xf32>
    "tpu.trace_stop"() : () -> ()
    %78 = vector.shape_cast %77 : vector<2x8x32xf32> to vector<16x32xf32>
    %79 = vector.extract_strided_slice %19 {offsets = [0, 0], sizes = [32, 128], strides = [1, 1]} : vector<128x128xf32> to vector<32x128xf32>
    %cst_29 = arith.constant dense<0.000000e+00> : vector<16x128xf32>
    %80 = tpu.matmul %78, %79, %cst_29 {dimension_numbers = #tpu.dot_dimension_numbers<[1], [0], [0], [1], [0, 0, 1, 1], [], []>} : vector<16x32xf32>, vector<32x128xf32>, vector<16x128xf32> -> vector<16x128xf32>
    %81 = arith.addf %58, %80 : vector<16x128xf32>
    %82 = vector.extract_strided_slice %53 {offsets = [0, 0, 32], sizes = [2, 8, 32], strides = [1, 1, 1]} : vector<2x8x128xf32> to vector<2x8x32xf32>
    %83 = vector.extract_strided_slice %55 {offsets = [0, 0, 32], sizes = [2, 8, 32], strides = [1, 1, 1]} : vector<2x8x128xf32> to vector<2x8x32xf32>
    %84 = vector.extract_strided_slice %57 {offsets = [0, 0, 32], sizes = [2, 8, 32], strides = [1, 1, 1]} : vector<2x8x128xf32> to vector<2x8x32xf32>
    "tpu.trace_start"() <{level = 10 : i32, message = "bqd,bkd->bqk"}> : () -> ()
    %cst_30 = arith.constant dense<0.000000e+00> : vector<2x8x8xf32>
    %85 = tpu.matmul %82, %83, %cst_30 {dimension_numbers = #tpu.dot_dimension_numbers<[2], [2], [1], [1], [0, 0, 0, 1, 1, 1], [0], [0]>} : vector<2x8x32xf32>, vector<2x8x32xf32>, vector<2x8x8xf32> -> vector<2x8x8xf32>
    "tpu.trace_stop"() : () -> ()
    %cst_31 = arith.constant 0.176776692 : f32
    %86 = vector.broadcast %cst_31 : f32 to vector<2x8x8xf32>
    %87 = arith.mulf %85, %86 : vector<2x8x8xf32>
    %88 = vector.broadcast %26 : vector<2x1x8xf32> to vector<2x8x8xf32>
    %89 = arith.addf %87, %88 : vector<2x8x8xf32>
    %cst_32 = arith.constant dense<0xFF800000> : vector<2x8xf32>
    %90 = vector.multi_reduction <maximumf>, %89, %cst_32 [2] : vector<2x8x8xf32> to vector<2x8xf32>
    %91 = vector.shape_cast %90 : vector<2x8xf32> to vector<2x8x1xf32>
    %92 = vector.broadcast %91 : vector<2x8x1xf32> to vector<2x8x8xf32>
    %93 = arith.subf %89, %92 : vector<2x8x8xf32>
    %94 = math.exp %93 : vector<2x8x8xf32>
    %cst_33 = arith.constant dense<0.000000e+00> : vector<2x8xf32>
    %95 = vector.multi_reduction <add>, %94, %cst_33 [2] : vector<2x8x8xf32> to vector<2x8xf32>
    %96 = vector.shape_cast %95 : vector<2x8xf32> to vector<2x8x1xf32>
    %97 = tpu.reciprocal %96 {approx = true} : vector<2x8x1xf32> -> vector<2x8x1xf32>
    %98 = vector.broadcast %97 : vector<2x8x1xf32> to vector<2x8x8xf32>
    %99 = arith.mulf %94, %98 : vector<2x8x8xf32>
    "tpu.trace_start"() <{level = 10 : i32, message = "bqk,bkd->bqd"}> : () -> ()
    %cst_34 = arith.constant dense<0.000000e+00> : vector<2x8x32xf32>
    %100 = tpu.matmul %99, %84, %cst_34 {dimension_numbers = #tpu.dot_dimension_numbers<[2], [1], [1], [2], [0, 0, 0, 1, 1, 2], [0], [0]>} : vector<2x8x8xf32>, vector<2x8x32xf32>, vector<2x8x32xf32> -> vector<2x8x32xf32>
    "tpu.trace_stop"() : () -> ()
    %101 = vector.shape_cast %100 : vector<2x8x32xf32> to vector<16x32xf32>
    %102 = vector.extract_strided_slice %19 {offsets = [32, 0], sizes = [32, 128], strides = [1, 1]} : vector<128x128xf32> to vector<32x128xf32>
    %cst_35 = arith.constant dense<0.000000e+00> : vector<16x128xf32>
    %103 = tpu.matmul %101, %102, %cst_35 {dimension_numbers = #tpu.dot_dimension_numbers<[1], [0], [0], [1], [0, 0, 1, 1], [], []>} : vector<16x32xf32>, vector<32x128xf32>, vector<16x128xf32> -> vector<16x128xf32>
    %104 = arith.addf %81, %103 : vector<16x128xf32>
    %105 = vector.extract_strided_slice %53 {offsets = [0, 0, 64], sizes = [2, 8, 32], strides = [1, 1, 1]} : vector<2x8x128xf32> to vector<2x8x32xf32>
    %106 = vector.extract_strided_slice %55 {offsets = [0, 0, 64], sizes = [2, 8, 32], strides = [1, 1, 1]} : vector<2x8x128xf32> to vector<2x8x32xf32>
    %107 = vector.extract_strided_slice %57 {offsets = [0, 0, 64], sizes = [2, 8, 32], strides = [1, 1, 1]} : vector<2x8x128xf32> to vector<2x8x32xf32>
    "tpu.trace_start"() <{level = 10 : i32, message = "bqd,bkd->bqk"}> : () -> ()
    %cst_36 = arith.constant dense<0.000000e+00> : vector<2x8x8xf32>
    %108 = tpu.matmul %105, %106, %cst_36 {dimension_numbers = #tpu.dot_dimension_numbers<[2], [2], [1], [1], [0, 0, 0, 1, 1, 1], [0], [0]>} : vector<2x8x32xf32>, vector<2x8x32xf32>, vector<2x8x8xf32> -> vector<2x8x8xf32>
    "tpu.trace_stop"() : () -> ()
    %cst_37 = arith.constant 0.176776692 : f32
    %109 = vector.broadcast %cst_37 : f32 to vector<2x8x8xf32>
    %110 = arith.mulf %108, %109 : vector<2x8x8xf32>
    %111 = vector.broadcast %26 : vector<2x1x8xf32> to vector<2x8x8xf32>
    %112 = arith.addf %110, %111 : vector<2x8x8xf32>
    %cst_38 = arith.constant dense<0xFF800000> : vector<2x8xf32>
    %113 = vector.multi_reduction <maximumf>, %112, %cst_38 [2] : vector<2x8x8xf32> to vector<2x8xf32>
    %114 = vector.shape_cast %113 : vector<2x8xf32> to vector<2x8x1xf32>
    %115 = vector.broadcast %114 : vector<2x8x1xf32> to vector<2x8x8xf32>
    %116 = arith.subf %112, %115 : vector<2x8x8xf32>
    %117 = math.exp %116 : vector<2x8x8xf32>
    %cst_39 = arith.constant dense<0.000000e+00> : vector<2x8xf32>
    %118 = vector.multi_reduction <add>, %117, %cst_39 [2] : vector<2x8x8xf32> to vector<2x8xf32>
    %119 = vector.shape_cast %118 : vector<2x8xf32> to vector<2x8x1xf32>
    %120 = tpu.reciprocal %119 {approx = true} : vector<2x8x1xf32> -> vector<2x8x1xf32>
    %121 = vector.broadcast %120 : vector<2x8x1xf32> to vector<2x8x8xf32>
    %122 = arith.mulf %117, %121 : vector<2x8x8xf32>
    "tpu.trace_start"() <{level = 10 : i32, message = "bqk,bkd->bqd"}> : () -> ()
    %cst_40 = arith.constant dense<0.000000e+00> : vector<2x8x32xf32>
    %123 = tpu.matmul %122, %107, %cst_40 {dimension_numbers = #tpu.dot_dimension_numbers<[2], [1], [1], [2], [0, 0, 0, 1, 1, 2], [0], [0]>} : vector<2x8x8xf32>, vector<2x8x32xf32>, vector<2x8x32xf32> -> vector<2x8x32xf32>
    "tpu.trace_stop"() : () -> ()
    %124 = vector.shape_cast %123 : vector<2x8x32xf32> to vector<16x32xf32>
    %125 = vector.extract_strided_slice %19 {offsets = [64, 0], sizes = [32, 128], strides = [1, 1]} : vector<128x128xf32> to vector<32x128xf32>
    %cst_41 = arith.constant dense<0.000000e+00> : vector<16x128xf32>
    %126 = tpu.matmul %124, %125, %cst_41 {dimension_numbers = #tpu.dot_dimension_numbers<[1], [0], [0], [1], [0, 0, 1, 1], [], []>} : vector<16x32xf32>, vector<32x128xf32>, vector<16x128xf32> -> vector<16x128xf32>
    %127 = arith.addf %104, %126 : vector<16x128xf32>
    %128 = vector.extract_strided_slice %53 {offsets = [0, 0, 96], sizes = [2, 8, 32], strides = [1, 1, 1]} : vector<2x8x128xf32> to vector<2x8x32xf32>
    %129 = vector.extract_strided_slice %55 {offsets = [0, 0, 96], sizes = [2, 8, 32], strides = [1, 1, 1]} : vector<2x8x128xf32> to vector<2x8x32xf32>
    %130 = vector.extract_strided_slice %57 {offsets = [0, 0, 96], sizes = [2, 8, 32], strides = [1, 1, 1]} : vector<2x8x128xf32> to vector<2x8x32xf32>
    "tpu.trace_start"() <{level = 10 : i32, message = "bqd,bkd->bqk"}> : () -> ()
    %cst_42 = arith.constant dense<0.000000e+00> : vector<2x8x8xf32>
    %131 = tpu.matmul %128, %129, %cst_42 {dimension_numbers = #tpu.dot_dimension_numbers<[2], [2], [1], [1], [0, 0, 0, 1, 1, 1], [0], [0]>} : vector<2x8x32xf32>, vector<2x8x32xf32>, vector<2x8x8xf32> -> vector<2x8x8xf32>
    "tpu.trace_stop"() : () -> ()
    %cst_43 = arith.constant 0.176776692 : f32
    %132 = vector.broadcast %cst_43 : f32 to vector<2x8x8xf32>
    %133 = arith.mulf %131, %132 : vector<2x8x8xf32>
    %134 = vector.broadcast %26 : vector<2x1x8xf32> to vector<2x8x8xf32>
    %135 = arith.addf %133, %134 : vector<2x8x8xf32>
    %cst_44 = arith.constant dense<0xFF800000> : vector<2x8xf32>
    %136 = vector.multi_reduction <maximumf>, %135, %cst_44 [2] : vector<2x8x8xf32> to vector<2x8xf32>
    %137 = vector.shape_cast %136 : vector<2x8xf32> to vector<2x8x1xf32>
    %138 = vector.broadcast %137 : vector<2x8x1xf32> to vector<2x8x8xf32>
    %139 = arith.subf %135, %138 : vector<2x8x8xf32>
    %140 = math.exp %139 : vector<2x8x8xf32>
    %cst_45 = arith.constant dense<0.000000e+00> : vector<2x8xf32>
    %141 = vector.multi_reduction <add>, %140, %cst_45 [2] : vector<2x8x8xf32> to vector<2x8xf32>
    %142 = vector.shape_cast %141 : vector<2x8xf32> to vector<2x8x1xf32>
    %143 = tpu.reciprocal %142 {approx = true} : vector<2x8x1xf32> -> vector<2x8x1xf32>
    %144 = vector.broadcast %143 : vector<2x8x1xf32> to vector<2x8x8xf32>
    %145 = arith.mulf %140, %144 : vector<2x8x8xf32>
    "tpu.trace_start"() <{level = 10 : i32, message = "bqk,bkd->bqd"}> : () -> ()
    %cst_46 = arith.constant dense<0.000000e+00> : vector<2x8x32xf32>
    %146 = tpu.matmul %145, %130, %cst_46 {dimension_numbers = #tpu.dot_dimension_numbers<[2], [1], [1], [2], [0, 0, 0, 1, 1, 2], [0], [0]>} : vector<2x8x8xf32>, vector<2x8x32xf32>, vector<2x8x32xf32> -> vector<2x8x32xf32>
    "tpu.trace_stop"() : () -> ()
    %147 = vector.shape_cast %146 : vector<2x8x32xf32> to vector<16x32xf32>
    %148 = vector.extract_strided_slice %19 {offsets = [96, 0], sizes = [32, 128], strides = [1, 1]} : vector<128x128xf32> to vector<32x128xf32>
    %cst_47 = arith.constant dense<0.000000e+00> : vector<16x128xf32>
    %149 = tpu.matmul %147, %148, %cst_47 {dimension_numbers = #tpu.dot_dimension_numbers<[1], [0], [0], [1], [0, 0, 1, 1], [], []>} : vector<16x32xf32>, vector<32x128xf32>, vector<16x128xf32> -> vector<16x128xf32>
    %150 = arith.addf %127, %149 : vector<16x128xf32>
    %151 = arith.addf %4, %150 : vector<16x128xf32>
    %152 = vector.broadcast %11 : vector<1x128xf32> to vector<16x128xf32>
    %153 = arith.addf %151, %152 : vector<16x128xf32>
    %cst_48 = arith.constant dense<0.000000e+00> : vector<16xf32>
    %154 = vector.multi_reduction <add>, %153, %cst_48 [1] : vector<16x128xf32> to vector<16xf32>
    %155 = vector.shape_cast %154 : vector<16xf32> to vector<16x1xf32>
    %cst_49 = arith.constant 1.280000e+02 : f32
    %156 = vector.broadcast %cst_49 : f32 to vector<16x1xf32>
    %157 = arith.divf %155, %156 : vector<16x1xf32>
    %158 = vector.broadcast %157 : vector<16x1xf32> to vector<16x128xf32>
    %159 = arith.subf %153, %158 : vector<16x128xf32>
    %160 = arith.mulf %159, %159 : vector<16x128xf32>
    %cst_50 = arith.constant dense<0.000000e+00> : vector<16xf32>
    %161 = vector.multi_reduction <add>, %160, %cst_50 [1] : vector<16x128xf32> to vector<16xf32>
    %162 = vector.shape_cast %161 : vector<16xf32> to vector<16x1xf32>
    %cst_51 = arith.constant 1.270000e+02 : f32
    %163 = vector.broadcast %cst_51 : f32 to vector<16x1xf32>
    %164 = arith.divf %162, %163 : vector<16x1xf32>
    %165 = vector.broadcast %157 : vector<16x1xf32> to vector<16x128xf32>
    %166 = arith.subf %153, %165 : vector<16x128xf32>
    %167 = vector.broadcast %12 : vector<1x128xf32> to vector<16x128xf32>
    %168 = arith.mulf %167, %166 : vector<16x128xf32>
    %169 = math.sqrt %164 : vector<16x1xf32>
    %cst_52 = arith.constant 9.99999997E-7 : f32
    %170 = vector.broadcast %cst_52 : f32 to vector<16x1xf32>
    %171 = arith.addf %169, %170 : vector<16x1xf32>
    %172 = vector.broadcast %171 : vector<16x1xf32> to vector<16x128xf32>
    %173 = arith.divf %168, %172 : vector<16x128xf32>
    %174 = vector.broadcast %13 : vector<1x128xf32> to vector<16x128xf32>
    %175 = arith.addf %173, %174 : vector<16x128xf32>
    %cst_53 = arith.constant dense<0.000000e+00> : vector<16x512xf32>
    %176 = tpu.matmul %175, %22, %cst_53 {dimension_numbers = #tpu.dot_dimension_numbers<[1], [0], [0], [1], [0, 0, 1, 1], [], []>} : vector<16x128xf32>, vector<128x512xf32>, vector<16x512xf32> -> vector<16x512xf32>
    %177 = vector.broadcast %8 : vector<1x512xf32> to vector<16x512xf32>
    %178 = arith.addf %176, %177 : vector<16x512xf32>
    %cst_54 = arith.constant 5.000000e-01 : f32
    %179 = vector.broadcast %cst_54 : f32 to vector<16x512xf32>
    %180 = arith.mulf %179, %178 : vector<16x512xf32>
    %181 = arith.mulf %178, %178 : vector<16x512xf32>
    %182 = arith.mulf %178, %181 : vector<16x512xf32>
    %cst_55 = arith.constant 4.471500e-02 : f32
    %183 = vector.broadcast %cst_55 : f32 to vector<16x512xf32>
    %184 = arith.mulf %183, %182 : vector<16x512xf32>
    %185 = arith.addf %178, %184 : vector<16x512xf32>
    %cst_56 = arith.constant 0.797884583 : f32
    %186 = vector.broadcast %cst_56 : f32 to vector<16x512xf32>
    %187 = arith.mulf %186, %185 : vector<16x512xf32>
    %188 = math.tanh %187 : vector<16x512xf32>
    %cst_57 = arith.constant 1.000000e+00 : f32
    %189 = vector.broadcast %cst_57 : f32 to vector<16x512xf32>
    %190 = arith.addf %189, %188 : vector<16x512xf32>
    %191 = arith.mulf %180, %190 : vector<16x512xf32>
    %cst_58 = arith.constant dense<0.000000e+00> : vector<16x128xf32>
    %192 = tpu.matmul %191, %25, %cst_58 {dimension_numbers = #tpu.dot_dimension_numbers<[1], [0], [0], [1], [0, 0, 1, 1], [], []>} : vector<16x512xf32>, vector<512x128xf32>, vector<16x128xf32> -> vector<16x128xf32>
    %193 = vector.broadcast %14 : vector<1x128xf32> to vector<16x128xf32>
    %194 = arith.addf %192, %193 : vector<16x128xf32>
    %195 = arith.addf %153, %194 : vector<16x128xf32>
    %196 = vector.shape_cast %195 : vector<16x128xf32> to vector<2x8x128xf32>
    %c0_59 = arith.constant 0 : index
    %c0_60 = arith.constant 0 : index
    %c0_61 = arith.constant 0 : index
    %197 = vector.load %arg8[%c0_59, %c0_60, %c0_61] : memref<2x8x128xf32, #tpu.memory_space<vmem>>, vector<2x8x128xf32>
    tpu.vector_store %arg8[%c0_59, %c0_60, %c0_61], %196 {strides = array<i32>} : memref<2x8x128xf32, #tpu.memory_space<vmem>>, vector<2x8x128xf32>,
    return
  }
  func.func @transform_0(%arg0: i32, %arg1: i32) -> (i32, i32, i32) {
    %c0_i32 = arith.constant 0 : i32
    %c0_i32_0 = arith.constant 0 : i32
    %c0_i32_1 = arith.constant 0 : i32
    return %arg0, %c0_i32, %c0_i32_0 : i32, i32, i32
  }
  func.func @transform_1(%arg0: i32, %arg1: i32) -> (i32, i32, i32) {
    %c0_i32 = arith.constant 0 : i32
    %c0_i32_0 = arith.constant 0 : i32
    %c0_i32_1 = arith.constant 0 : i32
    return %arg0, %c0_i32, %c0_i32_0 : i32, i32, i32
  }
  func.func @transform_2(%arg0: i32, %arg1: i32) -> (i32, i32, i32) {
    %c0_i32 = arith.constant 0 : i32
    %c0_i32_0 = arith.constant 0 : i32
    %c0_i32_1 = arith.constant 0 : i32
    return %arg1, %c0_i32, %c0_i32_0 : i32, i32, i32
  }
  func.func @transform_3(%arg0: i32, %arg1: i32) -> (i32, i32, i32) {
    %c0_i32 = arith.constant 0 : i32
    %c0_i32_0 = arith.constant 0 : i32
    %c0_i32_1 = arith.constant 0 : i32
    return %arg1, %c0_i32, %c0_i32_0 : i32, i32, i32
  }
  func.func @transform_4(%arg0: i32, %arg1: i32) -> (i32, i32, i32) {
    %c0_i32 = arith.constant 0 : i32
    %c0_i32_0 = arith.constant 0 : i32
    %c0_i32_1 = arith.constant 0 : i32
    return %arg1, %c0_i32, %c0_i32_0 : i32, i32, i32
  }
  func.func @transform_5(%arg0: i32, %arg1: i32) -> (i32, i32, i32) {
    %c0_i32 = arith.constant 0 : i32
    %c0_i32_0 = arith.constant 0 : i32
    %c0_i32_1 = arith.constant 0 : i32
    return %arg1, %c0_i32, %c0_i32_0 : i32, i32, i32
  }
  func.func @transform_6(%arg0: i32, %arg1: i32) -> (i32, i32, i32) {
    %c0_i32 = arith.constant 0 : i32
    %c0_i32_0 = arith.constant 0 : i32
    %c0_i32_1 = arith.constant 0 : i32
    return %arg0, %c0_i32, %c0_i32_0 : i32, i32, i32
  }
}

</mosaic_0001>

<llo_original>
// kernel: tpu_custom_call.1
$region0: #{tpu_custom_call.1}
  #allocation0 [shape = 'u32[]', space=smem, size = 0x4, offset = 0x4, fixed_abs, tag = 'smem constant byte address 0x4 - core index']
  #allocation1 [shape = 'u32[144,128]{1,0:T(1,128)}', space=vmem, size = 0x12000, scoped, tag = 'internal scratch']
  %s0 = inlined_call_operand.hbm [shape: f32[2,8,128], index: 0, kind: input, shape index: {}]
  %s1 = inlined_call_operand.vmem [shape: f32[2,1,8], index: 1, kind: input, shape index: {}]
  %s2 = inlined_call_operand.hbm [shape: bf16[2,128,512], index: 2, kind: input, shape index: {}]
  %s3 = inlined_call_operand.hbm [shape: bf16[2,128,512], index: 3, kind: input, shape index: {}]
  %s4 = inlined_call_operand.hbm [shape: bf16[2,512,128], index: 4, kind: input, shape index: {}]
  %s5 = inlined_call_operand.hbm [shape: f32[2,8,512], index: 5, kind: input, shape index: {}]
  %s6 = inlined_call_operand.hbm [shape: f32[2,8,128], index: 6, kind: output, shape index: {}]
  %s7 = sld [smem:[#allocation0]]
  $region81: #{tpu_custom_call.1} parent=0
    _
  %s9 = ssub.s32 1, %s7
  %s10 = scalar_select 0, %s9, %s7
  $region1: #{tpu_custom_call.1} parent=0
    #allocation2 [shape = 'u8[8192]{0}', space=vmem, size = 0x2000, scoped, tag = 'input window, operand 0, single buffered']
    #allocation3 [shape = 's32[2]{0}', space=sflag, size = 0x8, scoped, tag = 'scoped memory for tpu_custom_call.1']
    #allocation4 [shape = 's32[2]{0}', space=sflag, size = 0x8, scoped, tag = 'scoped memory for tpu_custom_call.1']
    #allocation5 [shape = 'u8[262144]{0}', space=vmem, size = 0x40000, scoped, tag = 'input window, operand 2']
    #allocation6 [shape = 's32[2]{0}', space=sflag, size = 0x8, scoped, tag = 'scoped memory for tpu_custom_call.1']
    #allocation7 [shape = 'u8[262144]{0}', space=vmem, size = 0x40000, scoped, tag = 'input window, operand 3']
    #allocation8 [shape = 'u8[262144]{0}', space=vmem, size = 0x40000, scoped, tag = 'input window, operand 4']
    #allocation9 [shape = 's32[2]{0}', space=sflag, size = 0x8, scoped, tag = 'scoped memory for tpu_custom_call.1']
    #allocation10 [shape = 'u8[32768]{0}', space=vmem, size = 0x8000, scoped, tag = 'input window, operand 5']
    #allocation11 [shape = 'u8[8192]{0}', space=vmem, size = 0x2000, scoped, tag = 'output window, operand 0, single buffered']
    %11 = vsyncpa [#allocation3], 0
    %12 = vsyncpa [#allocation6], 0
    %s13 = scalar_lea.sflag [#allocation6], 1
    %14 = vsyncpa %s13, 0
    %15 = vsyncpa [#allocation9], 0
    %s16 = scalar_lea.sflag [#allocation9], 1
    %17 = vsyncpa %s16, 0
    %18 = vsyncpa [#allocation4], 0
    loop: start=0, step=1, limit=4
    $region2: #{tpu_custom_call.1} parent=1 // loop_pre_header
      _
    $region3: #{tpu_custom_call.1} parent=1 // loop_header
      %s20 = sphi 0, %s24
      %p21 = scmp.ge.s32.totalorder %s20, 4
      %s27 = sphi 0, %s39
      %s28 = sphi 0, %s35
      %s29 = sphi 0, %s27
      %s30 = sphi 0, %s28
      %s31 = sphi 0, %s29
      %s32 = sphi 0, %s30
      %s42 = sphi 0, %s44
      %s45 = sphi 0, %s42
      %s46 = sphi 0, %s45
      %s62 = sphi 0, %s46
      %s68 = sphi 0, %s70
      %s71 = sphi 0, %s68
      %s72 = sphi 0, %s71
      %s88 = sphi 0, %s72
      %s94 = sphi 0, %s96
      %s97 = sphi 0, %s94
      %s98 = sphi 0, %s97
      %s114 = sphi 0, %s98
      %s120 = sphi 0, %s122
      %s123 = sphi 0, %s120
      %s124 = sphi 0, %s123
      %s140 = sphi 0, %s124
      %s146 = sphi 0, %s148
      %s149 = sphi 0, %s146
      %s150 = sphi 0, %s149
      %s166 = sphi 0, %s150
      %s172 = sphi 0, %s174
      %s175 = sphi 0, %s172
      %s176 = sphi 0, %s175
      %s192 = sphi 0, %s176
      %s198 = sphi 0, %s200
      %s201 = sphi 0, %s198
      %s202 = sphi 0, %s201
      %s218 = sphi 0, %s202
    $region4: #{tpu_custom_call.1} parent=1 // loop_header_branch
      %23 = sbr.rel (%p21) target = $region8
    $region5: #{tpu_custom_call.1} parent=1 // loop_body
      %s25 = ssub.s32 %s20, 1
      %s26 = ssub.s32 %s20, 2
      %s33 = sadd.s32 1, %s28
      %p34 = scmp.ge.s32.totalorder %s33, 2
      %s35 = scalar_select %p34, 0, %s33
      %s36 = sadd.s32 1, %s27
      %s37 = scalar_select %p34, %s36, %s27
      %p38 = scmp.ge.s32.totalorder %s37, 1
      %s39 = scalar_select %p38, 0, %s37
      %s40 = ssub.s32 %s27, %s39
      %p41 = scmp.eq.s32.totalorder %s40, 0
      %s43 = sadd.s32 %s42, 1
      %s44 = scalar_select %p41, %s42, %s43
      %p47 = pneg %p41
      %p48 = scmp.eq.s32.totalorder %s20, 1
      %p49 = por %p47, %p48
      %p50 = scmp.ne.s32.totalorder %s42, %s45
      %p51 = scmp.eq.s32.totalorder %s20, 0
      %p52 = por %p50, %p51
      %p53 = scmp.ne.s32.totalorder %s42, %s45
      %p54 = scmp.eq.s32.totalorder %s25, 1
      %p55 = por %p53, %p54
      %p56 = scmp.ne.s32.totalorder %s45, %s46
      %p57 = scmp.eq.s32.totalorder %s25, 0
      %p58 = por %p56, %p57
      %p59 = scmp.ne.s32.totalorder %s45, %s46
      %p60 = scmp.eq.s32.totalorder %s26, 1
      %p61 = por %p59, %p60
      %p63 = scmp.ne.s32.totalorder %s46, %s62
      %p64 = scmp.eq.s32.totalorder %s26, 0
      %p65 = por %p63, %p64
      %s66 = ssub.s32 %s27, %s39
      %p67 = scmp.eq.s32.totalorder %s66, 0
      %s69 = sadd.s32 %s68, 1
      %s70 = scalar_select %p67, %s68, %s69
      %p73 = pneg %p67
      %p74 = scmp.eq.s32.totalorder %s20, 1
      %p75 = por %p73, %p74
      %p76 = scmp.ne.s32.totalorder %s68, %s71
      %p77 = scmp.eq.s32.totalorder %s20, 0
      %p78 = por %p76, %p77
      %p79 = scmp.ne.s32.totalorder %s68, %s71
      %p80 = scmp.eq.s32.totalorder %s25, 1
      %p81 = por %p79, %p80
      %p82 = scmp.ne.s32.totalorder %s71, %s72
      %p83 = scmp.eq.s32.totalorder %s25, 0
      %p84 = por %p82, %p83
      %p85 = scmp.ne.s32.totalorder %s71, %s72
      %p86 = scmp.eq.s32.totalorder %s26, 1
      %p87 = por %p85, %p86
      %p89 = scmp.ne.s32.totalorder %s72, %s88
      %p90 = scmp.eq.s32.totalorder %s26, 0
      %p91 = por %p89, %p90
      %s92 = ssub.s32 %s28, %s35
      %p93 = scmp.eq.s32.totalorder %s92, 0
      %s95 = sadd.s32 %s94, 1
      %s96 = scalar_select %p93, %s94, %s95
      %p99 = pneg %p93
      %p100 = scmp.eq.s32.totalorder %s20, 1
      %p101 = por %p99, %p100
      %p102 = scmp.ne.s32.totalorder %s94, %s97
      %p103 = scmp.eq.s32.totalorder %s20, 0
      %p104 = por %p102, %p103
      %p105 = scmp.ne.s32.totalorder %s94, %s97
      %p106 = scmp.eq.s32.totalorder %s25, 1
      %p107 = por %p105, %p106
      %p108 = scmp.ne.s32.totalorder %s97, %s98
      %p109 = scmp.eq.s32.totalorder %s25, 0
      %p110 = por %p108, %p109
      %p111 = scmp.ne.s32.totalorder %s97, %s98
      %p112 = scmp.eq.s32.totalorder %s26, 1
      %p113 = por %p111, %p112
      %p115 = scmp.ne.s32.totalorder %s98, %s114
      %p116 = scmp.eq.s32.totalorder %s26, 0
      %p117 = por %p115, %p116
      %s118 = ssub.s32 %s28, %s35
      %p119 = scmp.eq.s32.totalorder %s118, 0
      %s121 = sadd.s32 %s120, 1
      %s122 = scalar_select %p119, %s120, %s121
      %p125 = pneg %p119
      %p126 = scmp.eq.s32.totalorder %s20, 1
      %p127 = por %p125, %p126
      %p128 = scmp.ne.s32.totalorder %s120, %s123
      %p129 = scmp.eq.s32.totalorder %s20, 0
      %p130 = por %p128, %p129
      %p131 = scmp.ne.s32.totalorder %s120, %s123
      %p132 = scmp.eq.s32.totalorder %s25, 1
      %p133 = por %p131, %p132
      %p134 = scmp.ne.s32.totalorder %s123, %s124
      %p135 = scmp.eq.s32.totalorder %s25, 0
      %p136 = por %p134, %p135
      %p137 = scmp.ne.s32.totalorder %s123, %s124
      %p138 = scmp.eq.s32.totalorder %s26, 1
      %p139 = por %p137, %p138
      %p141 = scmp.ne.s32.totalorder %s124, %s140
      %p142 = scmp.eq.s32.totalorder %s26, 0
      %p143 = por %p141, %p142
      %s144 = ssub.s32 %s28, %s35
      %p145 = scmp.eq.s32.totalorder %s144, 0
      %s147 = sadd.s32 %s146, 1
      %s148 = scalar_select %p145, %s146, %s147
      %p151 = pneg %p145
      %p152 = scmp.eq.s32.totalorder %s20, 1
      %p153 = por %p151, %p152
      %p154 = scmp.ne.s32.totalorder %s146, %s149
      %p155 = scmp.eq.s32.totalorder %s20, 0
      %p156 = por %p154, %p155
      %p157 = scmp.ne.s32.totalorder %s146, %s149
      %p158 = scmp.eq.s32.totalorder %s25, 1
      %p159 = por %p157, %p158
      %p160 = scmp.ne.s32.totalorder %s149, %s150
      %p161 = scmp.eq.s32.totalorder %s25, 0
      %p162 = por %p160, %p161
      %p163 = scmp.ne.s32.totalorder %s149, %s150
      %p164 = scmp.eq.s32.totalorder %s26, 1
      %p165 = por %p163, %p164
      %p167 = scmp.ne.s32.totalorder %s150, %s166
      %p168 = scmp.eq.s32.totalorder %s26, 0
      %p169 = por %p167, %p168
      %s170 = ssub.s32 %s28, %s35
      %p171 = scmp.eq.s32.totalorder %s170, 0
      %s173 = sadd.s32 %s172, 1
      %s174 = scalar_select %p171, %s172, %s173
      %p177 = pneg %p171
      %p178 = scmp.eq.s32.totalorder %s20, 1
      %p179 = por %p177, %p178
      %p180 = scmp.ne.s32.totalorder %s172, %s175
      %p181 = scmp.eq.s32.totalorder %s20, 0
      %p182 = por %p180, %p181
      %p183 = scmp.ne.s32.totalorder %s172, %s175
      %p184 = scmp.eq.s32.totalorder %s25, 1
      %p185 = por %p183, %p184
      %p186 = scmp.ne.s32.totalorder %s175, %s176
      %p187 = scmp.eq.s32.totalorder %s25, 0
      %p188 = por %p186, %p187
      %p189 = scmp.ne.s32.totalorder %s175, %s176
      %p190 = scmp.eq.s32.totalorder %s26, 1
      %p191 = por %p189, %p190
      %p193 = scmp.ne.s32.totalorder %s176, %s192
      %p194 = scmp.eq.s32.totalorder %s26, 0
      %p195 = por %p193, %p194
      %s196 = ssub.s32 %s27, %s39
      %p197 = scmp.eq.s32.totalorder %s196, 0
      %s199 = sadd.s32 %s198, 1
      %s200 = scalar_select %p197, %s198, %s199
      %p203 = pneg %p197
      %p204 = scmp.eq.s32.totalorder %s20, 1
      %p205 = por %p203, %p204
      %p206 = scmp.ne.s32.totalorder %s198, %s201
      %p207 = scmp.eq.s32.totalorder %s20, 0
      %p208 = por %p206, %p207
      %p209 = scmp.ne.s32.totalorder %s198, %s201
      %p210 = scmp.eq.s32.totalorder %s25, 1
      %p211 = por %p209, %p210
      %p212 = scmp.ne.s32.totalorder %s201, %s202
      %p213 = scmp.eq.s32.totalorder %s25, 0
      %p214 = por %p212, %p213
      %p215 = scmp.ne.s32.totalorder %s201, %s202
      %p216 = scmp.eq.s32.totalorder %s26, 1
      %p217 = por %p215, %p216
      %p219 = scmp.ne.s32.totalorder %s202, %s218
      %p220 = scmp.eq.s32.totalorder %s26, 0
      %p221 = por %p219, %p220
      %p222 = scmp.le.s32.totalorder 1, %s20
      %p223 = scmp.lt.s32.totalorder %s20, 3
      %p224 = pnand %p222, %p223
      %p225 = pneg %p224
      // Predicated region
      $region9: #{tpu_custom_call.1} parent=5 // pred_check
        _
      $region10: #{tpu_custom_call.1} parent=5 // pred_check_branch
        %227 = sbr.rel (%p224) target = $region12
      $region11: #{tpu_custom_call.1} parent=5 // pred_region
        %s228 = ssub.s32 %s20, 1
        // Predicated region
        $region13: #{tpu_custom_call.1} parent=11 // pred_check
          %p229 = pneg %p58
        $region14: #{tpu_custom_call.1} parent=11 // pred_check_branch
          %231 = sbr.rel (%p229) target = $region16
        $region15: #{tpu_custom_call.1} parent=11 // pred_region
          %s232 = smul.u32 2, %s29
          %s234 = ssub.s32 256, 256
          %235 = vsyncadd [#allocation3], %s234
          %s236 = smul.addr %s232, 128
          %s237 = scalar_lea.hbm %s0, %s236
          %s238 = sshll.u32 [#allocation2], 4
          %s239 = int_to_ptr.vmem [resolvable:$true] %s238
          %244 = dma.hbm_to_vmem [thread:$0]  %s237, 256, %s239, [#allocation3], 128, 128, 8
        $region16: #{tpu_custom_call.1} parent=11 // pred_fallthru
          _
        // Predicated region
        $region17: #{tpu_custom_call.1} parent=11 // pred_check
          %p245 = pneg %p84
        $region18: #{tpu_custom_call.1} parent=11 // pred_check_branch
          %247 = sbr.rel (%p245) target = $region20
        $region19: #{tpu_custom_call.1} parent=11 // pred_region
          %s248 = smul.u32 2, %s29
          %p249 = scmp.lt.s32.totalorder %s248, 1
          %s250 = scalar_select %p249, %s248, 1
          %s251 = scalar_lea.vmem %s1, %s250
          %s252 = smul.u32 2, %s29
        $region20: #{tpu_custom_call.1} parent=11 // pred_fallthru
          _
      $region12: #{tpu_custom_call.1} parent=5 // pred_fallthru
        _
      %p253 = scmp.lt.s32.totalorder %s20, 2
      // Predicated region
      $region21: #{tpu_custom_call.1} parent=5 // pred_check
        %p254 = pneg %p253
      $region22: #{tpu_custom_call.1} parent=5 // pred_check_branch
        %256 = sbr.rel (%p254) target = $region24
      $region23: #{tpu_custom_call.1} parent=5 // pred_region
        // Predicated region
        $region25: #{tpu_custom_call.1} parent=23 // pred_check
          %p257 = pneg %p104
        $region26: #{tpu_custom_call.1} parent=23 // pred_check_branch
          %259 = sbr.rel (%p257) target = $region28
        $region27: #{tpu_custom_call.1} parent=23 // pred_region
          %s260 = sand.u32 %s20, 1
          %s261 = scalar_lea.sflag [#allocation6], %s260
          %s262 = sand.u32 %s94, 1
          %s263 = smul.addr %s262, 256
          %s264 = scalar_lea.vmem [#allocation5], %s263
          %s266 = ssub.s32 4096, 4096
          %267 = vsyncadd %s261, %s266
          %s268 = smul.addr %s28, 64
          %s269 = smul.addr %s268, 64
          %s270 = scalar_lea.hbm %s2, %s269
          %s271 = sshll.u32 %s264, 4
          %s272 = int_to_ptr.vmem [resolvable:$true] %s271
          %277 = dma.hbm_to_vmem [thread:$0]  %s270, 4096, %s272, %s261, 256, 256, 16
        $region28: #{tpu_custom_call.1} parent=23 // pred_fallthru
          _
        // Predicated region
        $region29: #{tpu_custom_call.1} parent=23 // pred_check
          %p278 = pneg %p130
        $region30: #{tpu_custom_call.1} parent=23 // pred_check_branch
          %280 = sbr.rel (%p278) target = $region32
        $region31: #{tpu_custom_call.1} parent=23 // pred_region
          %s281 = sand.u32 %s20, 1
          %s282 = scalar_lea.sflag [#allocation6], %s281
          %s283 = sand.u32 %s120, 1
          %s284 = smul.addr %s283, 256
          %s285 = scalar_lea.vmem [#allocation7], %s284
          %s287 = ssub.s32 4096, 4096
          %288 = vsyncadd %s282, %s287
          %s289 = smul.addr %s28, 64
          %s290 = smul.addr %s289, 64
          %s291 = scalar_lea.hbm %s3, %s290
          %s292 = sshll.u32 %s285, 4
          %s293 = int_to_ptr.vmem [resolvable:$true] %s292
          %298 = dma.hbm_to_vmem [thread:$0]  %s291, 4096, %s293, %s282, 256, 256, 16
        $region32: #{tpu_custom_call.1} parent=23 // pred_fallthru
          _
        // Predicated region
        $region33: #{tpu_custom_call.1} parent=23 // pred_check
          %p299 = pneg %p156
        $region34: #{tpu_custom_call.1} parent=23 // pred_check_branch
          %301 = sbr.rel (%p299) target = $region36
        $region35: #{tpu_custom_call.1} parent=23 // pred_region
          %s302 = sand.u32 %s20, 1
          %s303 = scalar_lea.sflag [#allocation9], %s302
          %s304 = sand.u32 %s146, 1
          %s305 = smul.addr %s304, 256
          %s306 = scalar_lea.vmem [#allocation8], %s305
          %s308 = ssub.s32 4096, 4096
          %309 = vsyncadd %s303, %s308
          %s310 = smul.addr %s28, 64
          %s311 = smul.addr %s310, 64
          %s312 = scalar_lea.hbm %s4, %s311
          %s313 = sshll.u32 %s306, 4
          %s314 = int_to_ptr.vmem [resolvable:$true] %s313
          %319 = dma.hbm_to_vmem [thread:$0]  %s312, 4096, %s314, %s303, 64, 64, 4
        $region36: #{tpu_custom_call.1} parent=23 // pred_fallthru
          _
        // Predicated region
        $region37: #{tpu_custom_call.1} parent=23 // pred_check
          %p320 = pneg %p182
        $region38: #{tpu_custom_call.1} parent=23 // pred_check_branch
          %322 = sbr.rel (%p320) target = $region40
        $region39: #{tpu_custom_call.1} parent=23 // pred_region
          %s323 = sand.u32 %s20, 1
          %s324 = scalar_lea.sflag [#allocation9], %s323
          %s325 = sand.u32 %s172, 1
          %s326 = smul.addr %s325, 32
          %s327 = scalar_lea.vmem [#allocation10], %s326
          %s329 = ssub.s32 512, 512
          %330 = vsyncadd %s324, %s329
          %s331 = smul.addr %s28, 4
          %s332 = smul.addr %s331, 128
          %s333 = scalar_lea.hbm %s5, %s332
          %s335 = sshll.u32 %s327, 4
          %s336 = int_to_ptr.vmem [resolvable:$true] %s335
          %338 = dma.hbm_to_vmem [thread:$0]  %s333, 512, %s336, %s324
        $region40: #{tpu_custom_call.1} parent=23 // pred_fallthru
          _
      $region24: #{tpu_custom_call.1} parent=5 // pred_fallthru
        _
      %p339 = scmp.le.s32.totalorder 1, %s20
      %p340 = scmp.lt.s32.totalorder %s20, 3
      %p341 = pnand %p339, %p340
      %p342 = pneg %p341
      // Predicated region
      $region41: #{tpu_custom_call.1} parent=5 // pred_check
        _
      $region42: #{tpu_custom_call.1} parent=5 // pred_check_branch
        %344 = sbr.rel (%p341) target = $region44
      $region43: #{tpu_custom_call.1} parent=5 // pred_region
        %s345 = ssub.s32 %s20, 1
        // Predicated region
        $region45: #{tpu_custom_call.1} parent=43 // pred_check
          %p346 = pneg %p58
        $region46: #{tpu_custom_call.1} parent=43 // pred_check_branch
          %348 = sbr.rel (%p346) target = $region48
        $region47: #{tpu_custom_call.1} parent=43 // pred_region
          %349 = dma.done [#allocation3], 256
        $region48: #{tpu_custom_call.1} parent=43 // pred_fallthru
          _
        %s350 = sand.u32 %s25, 1
        %s351 = scalar_lea.sflag [#allocation6], %s350
        %s352 = sand.u32 %s97, 1
        %s353 = smul.addr %s352, 256
        %s354 = scalar_lea.vmem [#allocation5], %s353
        // Predicated region
        $region49: #{tpu_custom_call.1} parent=43 // pred_check
          %p355 = pneg %p110
        $region50: #{tpu_custom_call.1} parent=43 // pred_check_branch
          %357 = sbr.rel (%p355) target = $region52
        $region51: #{tpu_custom_call.1} parent=43 // pred_region
          %358 = dma.done %s351, 4096
        $region52: #{tpu_custom_call.1} parent=43 // pred_fallthru
          _
        %s359 = sand.u32 %s25, 1
        %s360 = scalar_lea.sflag [#allocation6], %s359
        %s361 = sand.u32 %s123, 1
        %s362 = smul.addr %s361, 256
        %s363 = scalar_lea.vmem [#allocation7], %s362
        // Predicated region
        $region53: #{tpu_custom_call.1} parent=43 // pred_check
          %p364 = pneg %p136
        $region54: #{tpu_custom_call.1} parent=43 // pred_check_branch
          %366 = sbr.rel (%p364) target = $region56
        $region55: #{tpu_custom_call.1} parent=43 // pred_region
          %367 = dma.done %s360, 4096
        $region56: #{tpu_custom_call.1} parent=43 // pred_fallthru
          _
        %s368 = sand.u32 %s25, 1
        %s369 = scalar_lea.sflag [#allocation9], %s368
        %s370 = sand.u32 %s149, 1
        %s371 = smul.addr %s370, 256
        %s372 = scalar_lea.vmem [#allocation8], %s371
        // Predicated region
        $region57: #{tpu_custom_call.1} parent=43 // pred_check
          %p373 = pneg %p162
        $region58: #{tpu_custom_call.1} parent=43 // pred_check_branch
          %375 = sbr.rel (%p373) target = $region60
        $region59: #{tpu_custom_call.1} parent=43 // pred_region
          %376 = dma.done %s369, 4096
        $region60: #{tpu_custom_call.1} parent=43 // pred_fallthru
          _
        %s377 = sand.u32 %s25, 1
        %s378 = scalar_lea.sflag [#allocation9], %s377
        %s379 = sand.u32 %s175, 1
        %s380 = smul.addr %s379, 32
        %s381 = scalar_lea.vmem [#allocation10], %s380
        // Predicated region
        $region61: #{tpu_custom_call.1} parent=43 // pred_check
          %p382 = pneg %p188
        $region62: #{tpu_custom_call.1} parent=43 // pred_check_branch
          %384 = sbr.rel (%p382) target = $region64
        $region63: #{tpu_custom_call.1} parent=43 // pred_region
          %385 = dma.done %s378, 512
        $region64: #{tpu_custom_call.1} parent=43 // pred_fallthru
          _
        %p386 = pneg %p58
        %p387 = pneg %p55
        %s388 = smul.u32 2, %s29
        %p389 = scmp.lt.s32.totalorder %s388, 1
        %s390 = scalar_select %p389, %s388, 1
        %s391 = scalar_lea.vmem %s1, %s390
        %p392 = pneg %p84
        %p393 = pneg %p81
        %s394 = sand.u32 %s25, 1
        %s395 = scalar_lea.sflag [#allocation6], %s394
        %s396 = sand.u32 %s97, 1
        %s397 = smul.addr %s396, 256
        %s398 = scalar_lea.vmem [#allocation5], %s397
        %p399 = pneg %p110
        %p400 = pneg %p107
        %s401 = sand.u32 %s25, 1
        %s402 = scalar_lea.sflag [#allocation6], %s401
        %s403 = sand.u32 %s123, 1
        %s404 = smul.addr %s403, 256
        %s405 = scalar_lea.vmem [#allocation7], %s404
        %p406 = pneg %p136
        %p407 = pneg %p133
        %s408 = sand.u32 %s25, 1
        %s409 = scalar_lea.sflag [#allocation9], %s408
        %s410 = sand.u32 %s149, 1
        %s411 = smul.addr %s410, 256
        %s412 = scalar_lea.vmem [#allocation8], %s411
        %p413 = pneg %p162
        %p414 = pneg %p159
        %s415 = sand.u32 %s25, 1
        %s416 = scalar_lea.sflag [#allocation9], %s415
        %s417 = sand.u32 %s175, 1
        %s418 = smul.addr %s417, 32
        %s419 = scalar_lea.vmem [#allocation10], %s418
        %p420 = pneg %p188
        %p421 = pneg %p185
        %p422 = pneg %p214
        %p423 = pneg %p211
        %s424 = smul.u32 2, %s29
        %s425 = smul.u32 2, %s29
        %p426 = scmp.lt.s32.totalorder %s425, 1
        %s427 = scalar_select %p426, %s425, 1
        %s428 = scalar_lea.vmem %s1, %s427
        %s429 = smul.u32 2, %s29
        %s430 = smul.u32 2, %s29
        %p431 = scmp.eq.s32.totalorder %s30, 0
        // Predicated region
        $region65: #{tpu_custom_call.1} parent=43 // pred_check
          %p432 = pneg %p431
        $region66: #{tpu_custom_call.1} parent=43 // pred_check_branch
          %434 = sbr.rel (%p432) target = $region68
        $region67: #{tpu_custom_call.1} parent=43 // pred_region
          %v435 = vld [vmem:[#allocation2] sm:$0xff]
          %v436 = vld [vmem:[#allocation2 + $0x8] sm:$0xff]
          %437 = vst [vmem:[#allocation11] sm:$0xff] %v435
          %438 = vst [vmem:[#allocation11 + $0x8] sm:$0xff] %v436
        $region68: #{tpu_custom_call.1} parent=43 // pred_fallthru
          _
        %v439 = vld [vmem:[#allocation11] sm:$0xff]
        %v440 = vld [vmem:[#allocation11 + $0x8] sm:$0xff]
        %v441 = vld [vmem:[%s381] sm:$0xff]
        %v442 = vld [vmem:[%s381 + $0x8] sm:$0xff]
        %v443 = vld [vmem:[%s381 + $0x10] sm:$0xff]
        %v444 = vld [vmem:[%s381 + $0x18] sm:$0xff]
        %v445 = vld [vmem:[%s354] sm:$0xff]
        %v446 = vld [vmem:[%s354 + $0x8] sm:$0xff]
        %v447 = vld [vmem:[%s354 + $0x10] sm:$0xff]
        %v448 = vld [vmem:[%s354 + $0x18] sm:$0xff]
        %v449 = vld [vmem:[%s354 + $0x20] sm:$0xff]
        %v450 = vld [vmem:[%s354 + $0x28] sm:$0xff]
        %v451 = vld [vmem:[%s354 + $0x30] sm:$0xff]
        %v452 = vld [vmem:[%s354 + $0x38] sm:$0xff]
        %v453 = vld [vmem:[%s354 + $0x40] sm:$0xff]
        %v454 = vld [vmem:[%s354 + $0x48] sm:$0xff]
        %v455 = vld [vmem:[%s354 + $0x50] sm:$0xff]
        %v456 = vld [vmem:[%s354 + $0x58] sm:$0xff]
        %v457 = vld [vmem:[%s354 + $0x60] sm:$0xff]
        %v458 = vld [vmem:[%s354 + $0x68] sm:$0xff]
        %v459 = vld [vmem:[%s354 + $0x70] sm:$0xff]
        %v460 = vld [vmem:[%s354 + $0x78] sm:$0xff]
        %v461 = vld [vmem:[%s354 + $0x80] sm:$0xff]
        %v462 = vld [vmem:[%s354 + $0x88] sm:$0xff]
        %v463 = vld [vmem:[%s354 + $0x90] sm:$0xff]
        %v464 = vld [vmem:[%s354 + $0x98] sm:$0xff]
        %v465 = vld [vmem:[%s354 + $0xa0] sm:$0xff]
        %v466 = vld [vmem:[%s354 + $0xa8] sm:$0xff]
        %v467 = vld [vmem:[%s354 + $0xb0] sm:$0xff]
        %v468 = vld [vmem:[%s354 + $0xb8] sm:$0xff]
        %v469 = vld [vmem:[%s354 + $0xc0] sm:$0xff]
        %v470 = vld [vmem:[%s354 + $0xc8] sm:$0xff]
        %v471 = vld [vmem:[%s354 + $0xd0] sm:$0xff]
        %v472 = vld [vmem:[%s354 + $0xd8] sm:$0xff]
        %v473 = vld [vmem:[%s354 + $0xe0] sm:$0xff]
        %v474 = vld [vmem:[%s354 + $0xe8] sm:$0xff]
        %v475 = vld [vmem:[%s354 + $0xf0] sm:$0xff]
        %v476 = vld [vmem:[%s354 + $0xf8] sm:$0xff]
        %v477 = vunpack.c.l.bf16 %v445
        %v478 = vunpack.c.h.bf16 %v445
        %v479 = vunpack.c.l.bf16 %v446
        %v480 = vunpack.c.h.bf16 %v446
        %v481 = vunpack.c.l.bf16 %v447
        %v482 = vunpack.c.h.bf16 %v447
        %v483 = vunpack.c.l.bf16 %v448
        %v484 = vunpack.c.h.bf16 %v448
        %v485 = vunpack.c.l.bf16 %v449
        %v486 = vunpack.c.h.bf16 %v449
        %v487 = vunpack.c.l.bf16 %v450
        %v488 = vunpack.c.h.bf16 %v450
        %v489 = vunpack.c.l.bf16 %v451
        %v490 = vunpack.c.h.bf16 %v451
        %v491 = vunpack.c.l.bf16 %v452
        %v492 = vunpack.c.h.bf16 %v452
        %v493 = vunpack.c.l.bf16 %v453
        %v494 = vunpack.c.h.bf16 %v453
        %v495 = vunpack.c.l.bf16 %v454
        %v496 = vunpack.c.h.bf16 %v454
        %v497 = vunpack.c.l.bf16 %v455
        %v498 = vunpack.c.h.bf16 %v455
        %v499 = vunpack.c.l.bf16 %v456
        %v500 = vunpack.c.h.bf16 %v456
        %v501 = vunpack.c.l.bf16 %v457
        %v502 = vunpack.c.h.bf16 %v457
        %v503 = vunpack.c.l.bf16 %v458
        %v504 = vunpack.c.h.bf16 %v458
        %v505 = vunpack.c.l.bf16 %v459
        %v506 = vunpack.c.h.bf16 %v459
        %v507 = vunpack.c.l.bf16 %v460
        %v508 = vunpack.c.h.bf16 %v460
        %v509 = vunpack.c.l.bf16 %v461
        %v510 = vunpack.c.h.bf16 %v461
        %v511 = vunpack.c.l.bf16 %v462
        %v512 = vunpack.c.h.bf16 %v462
        %v513 = vunpack.c.l.bf16 %v463
        %v514 = vunpack.c.h.bf16 %v463
        %v515 = vunpack.c.l.bf16 %v464
        %v516 = vunpack.c.h.bf16 %v464
        %v517 = vunpack.c.l.bf16 %v465
        %v518 = vunpack.c.h.bf16 %v465
        %v519 = vunpack.c.l.bf16 %v466
        %v520 = vunpack.c.h.bf16 %v466
        %v521 = vunpack.c.l.bf16 %v467
        %v522 = vunpack.c.h.bf16 %v467
        %v523 = vunpack.c.l.bf16 %v468
        %v524 = vunpack.c.h.bf16 %v468
        %v525 = vunpack.c.l.bf16 %v469
        %v526 = vunpack.c.h.bf16 %v469
        %v527 = vunpack.c.l.bf16 %v470
        %v528 = vunpack.c.h.bf16 %v470
        %v529 = vunpack.c.l.bf16 %v471
        %v530 = vunpack.c.h.bf16 %v471
        %v531 = vunpack.c.l.bf16 %v472
        %v532 = vunpack.c.h.bf16 %v472
        %v533 = vunpack.c.l.bf16 %v473
        %v534 = vunpack.c.h.bf16 %v473
        %v535 = vunpack.c.l.bf16 %v474
        %v536 = vunpack.c.h.bf16 %v474
        %v537 = vunpack.c.l.bf16 %v475
        %v538 = vunpack.c.h.bf16 %v475
        %v539 = vunpack.c.l.bf16 %v476
        %v540 = vunpack.c.h.bf16 %v476
        %v541 = vld [vmem:[%s363] sm:$0xff]
        %v542 = vld [vmem:[%s363 + $0x8] sm:$0xff]
        %v543 = vld [vmem:[%s363 + $0x10] sm:$0xff]
        %v544 = vld [vmem:[%s363 + $0x18] sm:$0xff]
        %v545 = vld [vmem:[%s363 + $0x20] sm:$0xff]
        %v546 = vld [vmem:[%s363 + $0x28] sm:$0xff]
        %v547 = vld [vmem:[%s363 + $0x30] sm:$0xff]
        %v548 = vld [vmem:[%s363 + $0x38] sm:$0xff]
        %v549 = vld [vmem:[%s363 + $0x40] sm:$0xff]
        %v550 = vld [vmem:[%s363 + $0x48] sm:$0xff]
        %v551 = vld [vmem:[%s363 + $0x50] sm:$0xff]
        %v552 = vld [vmem:[%s363 + $0x58] sm:$0xff]
        %v553 = vld [vmem:[%s363 + $0x60] sm:$0xff]
        %v554 = vld [vmem:[%s363 + $0x68] sm:$0xff]
        %v555 = vld [vmem:[%s363 + $0x70] sm:$0xff]
        %v556 = vld [vmem:[%s363 + $0x78] sm:$0xff]
        %v557 = vld [vmem:[%s363 + $0x80] sm:$0xff]
        %v558 = vld [vmem:[%s363 + $0x88] sm:$0xff]
        %v559 = vld [vmem:[%s363 + $0x90] sm:$0xff]
        %v560 = vld [vmem:[%s363 + $0x98] sm:$0xff]
        %v561 = vld [vmem:[%s363 + $0xa0] sm:$0xff]
        %v562 = vld [vmem:[%s363 + $0xa8] sm:$0xff]
        %v563 = vld [vmem:[%s363 + $0xb0] sm:$0xff]
        %v564 = vld [vmem:[%s363 + $0xb8] sm:$0xff]
        %v565 = vld [vmem:[%s363 + $0xc0] sm:$0xff]
        %v566 = vld [vmem:[%s363 + $0xc8] sm:$0xff]
        %v567 = vld [vmem:[%s363 + $0xd0] sm:$0xff]
        %v568 = vld [vmem:[%s363 + $0xd8] sm:$0xff]
        %v569 = vld [vmem:[%s363 + $0xe0] sm:$0xff]
        %v570 = vld [vmem:[%s363 + $0xe8] sm:$0xff]
        %v571 = vld [vmem:[%s363 + $0xf0] sm:$0xff]
        %v572 = vld [vmem:[%s363 + $0xf8] sm:$0xff]
        %v573 = vunpack.c.l.bf16 %v541
        %v574 = vunpack.c.h.bf16 %v541
        %v575 = vunpack.c.l.bf16 %v542
        %v576 = vunpack.c.h.bf16 %v542
        %v577 = vunpack.c.l.bf16 %v543
        %v578 = vunpack.c.h.bf16 %v543
        %v579 = vunpack.c.l.bf16 %v544
        %v580 = vunpack.c.h.bf16 %v544
        %v581 = vunpack.c.l.bf16 %v545
        %v582 = vunpack.c.h.bf16 %v545
        %v583 = vunpack.c.l.bf16 %v546
        %v584 = vunpack.c.h.bf16 %v546
        %v585 = vunpack.c.l.bf16 %v547
        %v586 = vunpack.c.h.bf16 %v547
        %v587 = vunpack.c.l.bf16 %v548
        %v588 = vunpack.c.h.bf16 %v548
        %v589 = vunpack.c.l.bf16 %v549
        %v590 = vunpack.c.h.bf16 %v549
        %v591 = vunpack.c.l.bf16 %v550
        %v592 = vunpack.c.h.bf16 %v550
        %v593 = vunpack.c.l.bf16 %v551
        %v594 = vunpack.c.h.bf16 %v551
        %v595 = vunpack.c.l.bf16 %v552
        %v596 = vunpack.c.h.bf16 %v552
        %v597 = vunpack.c.l.bf16 %v553
        %v598 = vunpack.c.h.bf16 %v553
        %v599 = vunpack.c.l.bf16 %v554
        %v600 = vunpack.c.h.bf16 %v554
        %v601 = vunpack.c.l.bf16 %v555
        %v602 = vunpack.c.h.bf16 %v555
        %v603 = vunpack.c.l.bf16 %v556
        %v604 = vunpack.c.h.bf16 %v556
        %v605 = vunpack.c.l.bf16 %v557
        %v606 = vunpack.c.h.bf16 %v557
        %v607 = vunpack.c.l.bf16 %v558
        %v608 = vunpack.c.h.bf16 %v558
        %v609 = vunpack.c.l.bf16 %v559
        %v610 = vunpack.c.h.bf16 %v559
        %v611 = vunpack.c.l.bf16 %v560
        %v612 = vunpack.c.h.bf16 %v560
        %v613 = vunpack.c.l.bf16 %v561
        %v614 = vunpack.c.h.bf16 %v561
        %v615 = vunpack.c.l.bf16 %v562
        %v616 = vunpack.c.h.bf16 %v562
        %v617 = vunpack.c.l.bf16 %v563
        %v618 = vunpack.c.h.bf16 %v563
        %v619 = vunpack.c.l.bf16 %v564
        %v620 = vunpack.c.h.bf16 %v564
        %v621 = vunpack.c.l.bf16 %v565
        %v622 = vunpack.c.h.bf16 %v565
        %v623 = vunpack.c.l.bf16 %v566
        %v624 = vunpack.c.h.bf16 %v566
        %v625 = vunpack.c.l.bf16 %v567
        %v626 = vunpack.c.h.bf16 %v567
        %v627 = vunpack.c.l.bf16 %v568
        %v628 = vunpack.c.h.bf16 %v568
        %v629 = vunpack.c.l.bf16 %v569
        %v630 = vunpack.c.h.bf16 %v569
        %v631 = vunpack.c.l.bf16 %v570
        %v632 = vunpack.c.h.bf16 %v570
        %v633 = vunpack.c.l.bf16 %v571
        %v634 = vunpack.c.h.bf16 %v571
        %v635 = vunpack.c.l.bf16 %v572
        %v636 = vunpack.c.h.bf16 %v572
        %v637 = vld [vmem:[%s372] sm:$0xf]
        %v638 = vld [vmem:[%s372 + $0x4] sm:$0xf]
        %v639 = vld [vmem:[%s372 + $0x8] sm:$0xf]
        %v640 = vld [vmem:[%s372 + $0xc] sm:$0xf]
        %v641 = vld [vmem:[%s372 + $0x10] sm:$0xf]
        %v642 = vld [vmem:[%s372 + $0x14] sm:$0xf]
        %v643 = vld [vmem:[%s372 + $0x18] sm:$0xf]
        %v644 = vld [vmem:[%s372 + $0x1c] sm:$0xf]
        %v645 = vld [vmem:[%s372 + $0x20] sm:$0xf]
        %v646 = vld [vmem:[%s372 + $0x24] sm:$0xf]
        %v647 = vld [vmem:[%s372 + $0x28] sm:$0xf]
        %v648 = vld [vmem:[%s372 + $0x2c] sm:$0xf]
        %v649 = vld [vmem:[%s372 + $0x30] sm:$0xf]
        %v650 = vld [vmem:[%s372 + $0x34] sm:$0xf]
        %v651 = vld [vmem:[%s372 + $0x38] sm:$0xf]
        %v652 = vld [vmem:[%s372 + $0x3c] sm:$0xf]
        %v653 = vld [vmem:[%s372 + $0x40] sm:$0xf]
        %v654 = vld [vmem:[%s372 + $0x44] sm:$0xf]
        %v655 = vld [vmem:[%s372 + $0x48] sm:$0xf]
        %v656 = vld [vmem:[%s372 + $0x4c] sm:$0xf]
        %v657 = vld [vmem:[%s372 + $0x50] sm:$0xf]
        %v658 = vld [vmem:[%s372 + $0x54] sm:$0xf]
        %v659 = vld [vmem:[%s372 + $0x58] sm:$0xf]
        %v660 = vld [vmem:[%s372 + $0x5c] sm:$0xf]
        %v661 = vld [vmem:[%s372 + $0x60] sm:$0xf]
        %v662 = vld [vmem:[%s372 + $0x64] sm:$0xf]
        %v663 = vld [vmem:[%s372 + $0x68] sm:$0xf]
        %v664 = vld [vmem:[%s372 + $0x6c] sm:$0xf]
        %v665 = vld [vmem:[%s372 + $0x70] sm:$0xf]
        %v666 = vld [vmem:[%s372 + $0x74] sm:$0xf]
        %v667 = vld [vmem:[%s372 + $0x78] sm:$0xf]
        %v668 = vld [vmem:[%s372 + $0x7c] sm:$0xf]
        %v669 = vld [vmem:[%s372 + $0x80] sm:$0xf]
        %v670 = vld [vmem:[%s372 + $0x84] sm:$0xf]
        %v671 = vld [vmem:[%s372 + $0x88] sm:$0xf]
        %v672 = vld [vmem:[%s372 + $0x8c] sm:$0xf]
        %v673 = vld [vmem:[%s372 + $0x90] sm:$0xf]
        %v674 = vld [vmem:[%s372 + $0x94] sm:$0xf]
        %v675 = vld [vmem:[%s372 + $0x98] sm:$0xf]
        %v676 = vld [vmem:[%s372 + $0x9c] sm:$0xf]
        %v677 = vld [vmem:[%s372 + $0xa0] sm:$0xf]
        %v678 = vld [vmem:[%s372 + $0xa4] sm:$0xf]
        %v679 = vld [vmem:[%s372 + $0xa8] sm:$0xf]
        %v680 = vld [vmem:[%s372 + $0xac] sm:$0xf]
        %v681 = vld [vmem:[%s372 + $0xb0] sm:$0xf]
        %v682 = vld [vmem:[%s372 + $0xb4] sm:$0xf]
        %v683 = vld [vmem:[%s372 + $0xb8] sm:$0xf]
        %v684 = vld [vmem:[%s372 + $0xbc] sm:$0xf]
        %v685 = vld [vmem:[%s372 + $0xc0] sm:$0xf]
        %v686 = vld [vmem:[%s372 + $0xc4] sm:$0xf]
        %v687 = vld [vmem:[%s372 + $0xc8] sm:$0xf]
        %v688 = vld [vmem:[%s372 + $0xcc] sm:$0xf]
        %v689 = vld [vmem:[%s372 + $0xd0] sm:$0xf]
        %v690 = vld [vmem:[%s372 + $0xd4] sm:$0xf]
        %v691 = vld [vmem:[%s372 + $0xd8] sm:$0xf]
        %v692 = vld [vmem:[%s372 + $0xdc] sm:$0xf]
        %v693 = vld [vmem:[%s372 + $0xe0] sm:$0xf]
        %v694 = vld [vmem:[%s372 + $0xe4] sm:$0xf]
        %v695 = vld [vmem:[%s372 + $0xe8] sm:$0xf]
        %v696 = vld [vmem:[%s372 + $0xec] sm:$0xf]
        %v697 = vld [vmem:[%s372 + $0xf0] sm:$0xf]
        %v698 = vld [vmem:[%s372 + $0xf4] sm:$0xf]
        %v699 = vld [vmem:[%s372 + $0xf8] sm:$0xf]
        %v700 = vld [vmem:[%s372 + $0xfc] sm:$0xf]
        %v701 = vunpack.c.l.bf16 %v637
        %v702 = vunpack.c.l.bf16 %v638
        %v703 = vunpack.c.l.bf16 %v639
        %v704 = vunpack.c.l.bf16 %v640
        %v705 = vunpack.c.l.bf16 %v641
        %v706 = vunpack.c.l.bf16 %v642
        %v707 = vunpack.c.l.bf16 %v643
        %v708 = vunpack.c.l.bf16 %v644
        %v709 = vunpack.c.l.bf16 %v645
        %v710 = vunpack.c.l.bf16 %v646
        %v711 = vunpack.c.l.bf16 %v647
        %v712 = vunpack.c.l.bf16 %v648
        %v713 = vunpack.c.l.bf16 %v649
        %v714 = vunpack.c.l.bf16 %v650
        %v715 = vunpack.c.l.bf16 %v651
        %v716 = vunpack.c.l.bf16 %v652
        %v717 = vunpack.c.l.bf16 %v653
        %v718 = vunpack.c.l.bf16 %v654
        %v719 = vunpack.c.l.bf16 %v655
        %v720 = vunpack.c.l.bf16 %v656
        %v721 = vunpack.c.l.bf16 %v657
        %v722 = vunpack.c.l.bf16 %v658
        %v723 = vunpack.c.l.bf16 %v659
        %v724 = vunpack.c.l.bf16 %v660
        %v725 = vunpack.c.l.bf16 %v661
        %v726 = vunpack.c.l.bf16 %v662
        %v727 = vunpack.c.l.bf16 %v663
        %v728 = vunpack.c.l.bf16 %v664
        %v729 = vunpack.c.l.bf16 %v665
        %v730 = vunpack.c.l.bf16 %v666
        %v731 = vunpack.c.l.bf16 %v667
        %v732 = vunpack.c.l.bf16 %v668
        %v733 = vunpack.c.l.bf16 %v669
        %v734 = vunpack.c.l.bf16 %v670
        %v735 = vunpack.c.l.bf16 %v671
        %v736 = vunpack.c.l.bf16 %v672
        %v737 = vunpack.c.l.bf16 %v673
        %v738 = vunpack.c.l.bf16 %v674
        %v739 = vunpack.c.l.bf16 %v675
        %v740 = vunpack.c.l.bf16 %v676
        %v741 = vunpack.c.l.bf16 %v677
        %v742 = vunpack.c.l.bf16 %v678
        %v743 = vunpack.c.l.bf16 %v679
        %v744 = vunpack.c.l.bf16 %v680
        %v745 = vunpack.c.l.bf16 %v681
        %v746 = vunpack.c.l.bf16 %v682
        %v747 = vunpack.c.l.bf16 %v683
        %v748 = vunpack.c.l.bf16 %v684
        %v749 = vunpack.c.l.bf16 %v685
        %v750 = vunpack.c.l.bf16 %v686
        %v751 = vunpack.c.l.bf16 %v687
        %v752 = vunpack.c.l.bf16 %v688
        %v753 = vunpack.c.l.bf16 %v689
        %v754 = vunpack.c.l.bf16 %v690
        %v755 = vunpack.c.l.bf16 %v691
        %v756 = vunpack.c.l.bf16 %v692
        %v757 = vunpack.c.l.bf16 %v693
        %v758 = vunpack.c.l.bf16 %v694
        %v759 = vunpack.c.l.bf16 %v695
        %v760 = vunpack.c.l.bf16 %v696
        %v761 = vunpack.c.l.bf16 %v697
        %v762 = vunpack.c.l.bf16 %v698
        %v763 = vunpack.c.l.bf16 %v699
        %v764 = vunpack.c.l.bf16 %v700
        %v765 = vld [vmem:[%s428] sm:$0x1]
        %v766 = vld [vmem:[%s428 + $0x1] sm:$0x1]
        %767 = vadd.xlane.f32.xlu0 %v439
        %v768 = vpop.xlane.xlu0 %767
        %769 = vadd.xlane.f32.xlu0 %v440
        %v770 = vpop.xlane.xlu0 %769
        %v771 = vrcp.pop 128.0
        %v772 = vmul.f32 %v768, %v771
        %v773 = vmul.f32 %v770, %v771
        %v774 = vsub.f32 %v439, %v772
        %v775 = vsub.f32 %v440, %v773
        %v776 = vmul.f32 %v774, %v774
        %v777 = vmul.f32 %v775, %v775
        %778 = vadd.xlane.f32.xlu0 %v776
        %v779 = vpop.xlane.xlu0 %778
        %780 = vadd.xlane.f32.xlu0 %v777
        %v781 = vpop.xlane.xlu0 %780
        %v782 = vrcp.pop 127.0
        %v783 = vmul.f32 %v779, %v782
        %v784 = vmul.f32 %v781, %v782
        %v785 = vlaneseq
        %v786 = vshrl.u32 %v785, 7
        %v787 = vsub.s32 2, %v786
        %v788 = vrot.slane %v441, %v787
        %v789 = vmul.f32 %v788, %v774
        %v790 = vmul.f32 %v788, %v775
        %v791 = vrsqrt.pop %v783
        %v792 = vmul.f32 %v783, %v791
        %vm793 = vcmp.eq.f32.partialorder %v783, inf
        %v794 = vsel %vm793, %v783, %v792
        %vm795 = vcmp.eq.f32.partialorder %v783, 0.0
        %v796 = vand.u32 %v783, 2147483648
        %v797 = vsel %vm795, %v796, %v794
        %v798 = vrsqrt.pop %v784
        %v799 = vmul.f32 %v784, %v798
        %vm800 = vcmp.eq.f32.partialorder %v784, inf
        %v801 = vsel %vm800, %v784, %v799
        %vm802 = vcmp.eq.f32.partialorder %v784, 0.0
        %v803 = vand.u32 %v784, 2147483648
        %v804 = vsel %vm802, %v803, %v801
        %v805 = vadd.f32 %v797, 1e-06
        %v806 = vadd.f32 %v804, 1e-06
        %v807 = vrcp.pop %v805
        %v808 = vmul.f32 %v789, %v807
        %v809 = vrcp.pop %v806
        %v810 = vmul.f32 %v790, %v809
        %v811 = vlaneseq
        %v812 = vshrl.u32 %v811, 7
        %v813 = vsub.s32 3, %v812
        %v814 = vrot.slane %v441, %v813
        %v815 = vadd.f32 %v808, %v814
        %v816 = vadd.f32 %v810, %v814
        %v817 = vlaneseq
        %v818 = vshrl.u32 %v817, 7
        %v819 = vsub.s32 0, %v818
        %v820 = vrot.slane %v441, %v819
        %v821 = vlaneseq
        %v822 = vshrl.u32 %v821, 7
        %v823 = vsub.s32 0, %v822
        %v824 = vrot.slane %v442, %v823
        %v825 = vlaneseq
        %v826 = vshrl.u32 %v825, 7
        %v827 = vsub.s32 0, %v826
        %v828 = vrot.slane %v443, %v827
        %829 = vmatprep.subr.mxu0 %v478
        %830 = vmatpush1.msra.mxu0 %v477
        %831 = vmatprep.subr.mxu0 %v482
        %832 = vmatpush1.msra.mxu0 %v481
        %833 = vmatprep.subr.mxu0 %v486
        %834 = vmatpush1.msra.mxu0 %v485
        %835 = vmatprep.subr.mxu0 %v490
        %836 = vmatpush1.msra.mxu0 %v489
        %837 = vmatprep.subr.mxu0 %v494
        %838 = vmatpush1.msra.mxu0 %v493
        %839 = vmatprep.subr.mxu0 %v498
        %840 = vmatpush1.msra.mxu0 %v497
        %841 = vmatprep.subr.mxu0 %v502
        %842 = vmatpush1.msra.mxu0 %v501
        %843 = vmatprep.subr.mxu0 %v506
        %844 = vmatpush1.msra.mxu0 %v505
        %845 = vmatprep.subr.mxu0 %v510
        %846 = vmatpush1.msra.mxu0 %v509
        %847 = vmatprep.subr.mxu0 %v514
        %848 = vmatpush1.msra.mxu0 %v513
        %849 = vmatprep.subr.mxu0 %v518
        %850 = vmatpush1.msra.mxu0 %v517
        %851 = vmatprep.subr.mxu0 %v522
        %852 = vmatpush1.msra.mxu0 %v521
        %853 = vmatprep.subr.mxu0 %v526
        %854 = vmatpush1.msra.mxu0 %v525
        %855 = vmatprep.subr.mxu0 %v530
        %856 = vmatpush1.msra.mxu0 %v529
        %857 = vmatprep.subr.mxu0 %v534
        %858 = vmatpush1.msra.mxu0 %v533
        %859 = vmatprep.subr.mxu0 %v538
        %860 = vmatpush1.msra.mxu0 %v537
        %861 = vmatprep.subr.mxu0 0.0
        %862 = vmatpush1.msra.mxu0 0.0
        %863 = vmatprep.subr.mxu0 0.0
        %864 = vmatpush1.msra.mxu0 0.0
        %865 = vmatprep.subr.mxu0 0.0
        %866 = vmatpush1.msra.mxu0 0.0
        %867 = vmatprep.subr.mxu0 0.0
        %868 = vmatpush1.msra.mxu0 0.0
        %869 = vmatprep.subr.mxu0 0.0
        %870 = vmatpush1.msra.mxu0 0.0
        %871 = vmatprep.subr.mxu0 0.0
        %872 = vmatpush1.msra.mxu0 0.0
        %873 = vmatprep.subr.mxu0 0.0
        %874 = vmatpush1.msra.mxu0 0.0
        %875 = vmatprep.subr.mxu0 0.0
        %876 = vmatpush1.msra.mxu0 0.0
        %877 = vmatprep.subr.mxu0 0.0
        %878 = vmatpush1.msra.mxu0 0.0
        %879 = vmatprep.subr.mxu0 0.0
        %880 = vmatpush1.msra.mxu0 0.0
        %881 = vmatprep.subr.mxu0 0.0
        %882 = vmatpush1.msra.mxu0 0.0
        %883 = vmatprep.subr.mxu0 0.0
        %884 = vmatpush1.msra.mxu0 0.0
        %885 = vmatprep.subr.mxu0 0.0
        %886 = vmatpush1.msra.mxu0 0.0
        %887 = vmatprep.subr.mxu0 0.0
        %888 = vmatpush1.msra.mxu0 0.0
        %889 = vmatprep.subr.mxu0 0.0
        %890 = vmatpush1.msra.mxu0 0.0
        %891 = vmatprep.subr.mxu0 0.0
        %892 = vmatpush1.msra.mxu0 0.0
        %893 = vmatprep.mubr.f32.mxu0 0.0
        %894 = vmatmul.mubr.f32.gmra.mrb[0].mxu0 %v815
        %v895 = vpop.f32.mrb[0].mxu0
        %v896 = vadd.f32 %v820, %v895
        %v897 = vpop.f32.mrb[0].mxu0
        %v898 = vadd.f32 %v824, %v897
        %899 = vmatprep.mubr.f32.mxu0 0.0
        %900 = vmatmul.mubr.f32.gmra.mrb[0].mxu0 %v816
        %v901 = vpop.f32.mrb[0].mxu0
        %v902 = vadd.f32 %v820, %v901
        %v903 = vpop.f32.mrb[0].mxu0
        %v904 = vadd.f32 %v824, %v903
        %905 = vdwg.mxu0
        %906 = vmatprep.subr.mxu0 0.0
        %907 = vmatpush1.msra.mxu0 %v479
        %908 = vmatprep.subr.mxu0 0.0
        %909 = vmatpush1.msra.mxu0 %v483
        %910 = vmatprep.subr.mxu0 0.0
        %911 = vmatpush1.msra.mxu0 %v487
        %912 = vmatprep.subr.mxu0 0.0
        %913 = vmatpush1.msra.mxu0 %v491
        %914 = vmatprep.subr.mxu0 0.0
        %915 = vmatpush1.msra.mxu0 %v495
        %916 = vmatprep.subr.mxu0 0.0
        %917 = vmatpush1.msra.mxu0 %v499
        %918 = vmatprep.subr.mxu0 0.0
        %919 = vmatpush1.msra.mxu0 %v503
        %920 = vmatprep.subr.mxu0 0.0
        %921 = vmatpush1.msra.mxu0 %v507
        %922 = vmatprep.subr.mxu0 0.0
        %923 = vmatpush1.msra.mxu0 %v511
        %924 = vmatprep.subr.mxu0 0.0
        %925 = vmatpush1.msra.mxu0 %v515
        %926 = vmatprep.subr.mxu0 0.0
        %927 = vmatpush1.msra.mxu0 %v519
        %928 = vmatprep.subr.mxu0 0.0
        %929 = vmatpush1.msra.mxu0 %v523
        %930 = vmatprep.subr.mxu0 0.0
        %931 = vmatpush1.msra.mxu0 %v527
        %932 = vmatprep.subr.mxu0 0.0
        %933 = vmatpush1.msra.mxu0 %v531
        %934 = vmatprep.subr.mxu0 0.0
        %935 = vmatpush1.msra.mxu0 %v535
        %936 = vmatprep.subr.mxu0 0.0
        %937 = vmatpush1.msra.mxu0 %v539
        %938 = vmatprep.subr.mxu0 0.0
        %939 = vmatpush1.msra.mxu0 0.0
        %940 = vmatprep.subr.mxu0 0.0
        %941 = vmatpush1.msra.mxu0 0.0
        %942 = vmatprep.subr.mxu0 0.0
        %943 = vmatpush1.msra.mxu0 0.0
        %944 = vmatprep.subr.mxu0 0.0
        %945 = vmatpush1.msra.mxu0 0.0
        %946 = vmatprep.subr.mxu0 0.0
        %947 = vmatpush1.msra.mxu0 0.0
        %948 = vmatprep.subr.mxu0 0.0
        %949 = vmatpush1.msra.mxu0 0.0
        %950 = vmatprep.subr.mxu0 0.0
        %951 = vmatpush1.msra.mxu0 0.0
        %952 = vmatprep.subr.mxu0 0.0
        %953 = vmatpush1.msra.mxu0 0.0
        %954 = vmatprep.subr.mxu0 0.0
        %955 = vmatpush1.msra.mxu0 0.0
        %956 = vmatprep.subr.mxu0 0.0
        %957 = vmatpush1.msra.mxu0 0.0
        %958 = vmatprep.subr.mxu0 0.0
        %959 = vmatpush1.msra.mxu0 0.0
        %960 = vmatprep.subr.mxu0 0.0
        %961 = vmatpush1.msra.mxu0 0.0
        %962 = vmatprep.subr.mxu0 0.0
        %963 = vmatpush1.msra.mxu0 0.0
        %964 = vmatprep.subr.mxu0 0.0
        %965 = vmatpush1.msra.mxu0 0.0
        %966 = vmatprep.subr.mxu0 0.0
        %967 = vmatpush1.msra.mxu0 0.0
        %968 = vmatprep.subr.mxu0 0.0
        %969 = vmatpush1.msra.mxu0 0.0
        %970 = vmatprep.mubr.f32.mxu0 0.0
        %971 = vmatmul.mubr.f32.gmra.mrb[0].mxu0 %v815
        %v972 = vpop.f32.mrb[0].mxu0
        %v973 = vadd.f32 %v828, %v972
        %v974 = vpop.f32.mrb[0].mxu0
        %975 = vmatprep.mubr.f32.mxu0 0.0
        %976 = vmatmul.mubr.f32.gmra.mrb[0].mxu0 %v816
        %v977 = vpop.f32.mrb[0].mxu0
        %v978 = vadd.f32 %v828, %v977
        %v979 = vpop.f32.mrb[0].mxu0
        %980 = vdwg.mxu0
        %vm981 = vcmask 261120
        %v983 = vsel %vm981, %v896, 0
        %v986 = vsel %vm981, %v898, 0
        %988 = vmatprep.subr.mxu0 0.0
        %989 = vmatpush1.xpose.msra.mxu0 %v986
        %990 = vmatprep.subr.mxu0 0.0
        %991 = vmatpush1.xpose.msra.mxu0 0.0
        %992 = vmatprep.subr.mxu0 0.0
        %993 = vmatpush1.xpose.msra.mxu0 0.0
        %994 = vmatprep.subr.mxu0 0.0
        %995 = vmatpush1.xpose.msra.mxu0 0.0
        %996 = vmatprep.subr.mxu0 0.0
        %997 = vmatpush1.xpose.msra.mxu0 0.0
        %998 = vmatprep.subr.mxu0 0.0
        %999 = vmatpush1.xpose.msra.mxu0 0.0
        %1000 = vmatprep.subr.mxu0 0.0
        %1001 = vmatpush1.xpose.msra.mxu0 0.0
        %1002 = vmatprep.subr.mxu0 0.0
        %1003 = vmatpush1.xpose.msra.mxu0 0.0
        %1004 = vmatprep.subr.mxu0 0.0
        %1005 = vmatpush1.xpose.msra.mxu0 0.0
        %1006 = vmatprep.subr.mxu0 0.0
        %1007 = vmatpush1.xpose.msra.mxu0 0.0
        %1008 = vmatprep.subr.mxu0 0.0
        %1009 = vmatpush1.xpose.msra.mxu0 0.0
        %1010 = vmatprep.subr.mxu0 0.0
        %1011 = vmatpush1.xpose.msra.mxu0 0.0
        %1012 = vmatprep.subr.mxu0 0.0
        %1013 = vmatpush1.xpose.msra.mxu0 0.0
        %1014 = vmatprep.subr.mxu0 0.0
        %1015 = vmatpush1.xpose.msra.mxu0 0.0
        %1016 = vmatprep.subr.mxu0 0.0
        %1017 = vmatpush1.xpose.msra.mxu0 0.0
        %1018 = vmatprep.subr.mxu0 0.0
        %1019 = vmatpush1.xpose.msra.mxu0 0.0
        %1020 = vmatprep.subr.mxu0 0.0
        %1021 = vmatpush1.xpose.msra.mxu0 0.0
        %1022 = vmatprep.subr.mxu0 0.0
        %1023 = vmatpush1.xpose.msra.mxu0 0.0
        %1024 = vmatprep.subr.mxu0 0.0
        %1025 = vmatpush1.xpose.msra.mxu0 0.0
        %1026 = vmatprep.subr.mxu0 0.0
        %1027 = vmatpush1.xpose.msra.mxu0 0.0
        %1028 = vmatprep.subr.mxu0 0.0
        %1029 = vmatpush1.xpose.msra.mxu0 0.0
        %1030 = vmatprep.subr.mxu0 0.0
        %1031 = vmatpush1.xpose.msra.mxu0 0.0
        %1032 = vmatprep.subr.mxu0 0.0
        %1033 = vmatpush1.xpose.msra.mxu0 0.0
        %1034 = vmatprep.subr.mxu0 0.0
        %1035 = vmatpush1.xpose.msra.mxu0 0.0
        %1036 = vmatprep.subr.mxu0 0.0
        %1037 = vmatpush1.xpose.msra.mxu0 0.0
        %1038 = vmatprep.subr.mxu0 0.0
        %1039 = vmatpush1.xpose.msra.mxu0 0.0
        %1040 = vmatprep.subr.mxu0 0.0
        %1041 = vmatpush1.xpose.msra.mxu0 0.0
        %1042 = vmatprep.subr.mxu0 0.0
        %1043 = vmatpush1.xpose.msra.mxu0 0.0
        %1044 = vmatprep.subr.mxu0 0.0
        %1045 = vmatpush1.xpose.msra.mxu0 0.0
        %1046 = vmatprep.subr.mxu0 0.0
        %1047 = vmatpush1.xpose.msra.mxu0 0.0
        %1048 = vmatprep.subr.mxu0 0.0
        %1049 = vmatpush1.xpose.msra.mxu0 0.0
        %1050 = vmatprep.subr.mxu0 0.0
        %1051 = vmatpush1.xpose.msra.mxu0 0.0
        %1052 = vmatprep.mubr.f32.mxu0 0.0
        %1053 = vmatmul.mubr.f32.gmra.mrb[0].mxu0 %v983
        %v1054 = vpop.f32.mrb[0].mxu0
        %v1055 = vadd.f32 0.0, %v1054
        %v1056 = vpop.f32.mrb[0].mxu0
        %1057 = vdwg.mxu0
        %v1059 = vsel %vm981, %v902, 0
        %v1062 = vsel %vm981, %v904, 0
        %1064 = vmatprep.subr.mxu0 0.0
        %1065 = vmatpush1.xpose.msra.mxu0 %v1062
        %1066 = vmatprep.subr.mxu0 0.0
        %1067 = vmatpush1.xpose.msra.mxu0 0.0
        %1068 = vmatprep.subr.mxu0 0.0
        %1069 = vmatpush1.xpose.msra.mxu0 0.0
        %1070 = vmatprep.subr.mxu0 0.0
        %1071 = vmatpush1.xpose.msra.mxu0 0.0
        %1072 = vmatprep.subr.mxu0 0.0
        %1073 = vmatpush1.xpose.msra.mxu0 0.0
        %1074 = vmatprep.subr.mxu0 0.0
        %1075 = vmatpush1.xpose.msra.mxu0 0.0
        %1076 = vmatprep.subr.mxu0 0.0
        %1077 = vmatpush1.xpose.msra.mxu0 0.0
        %1078 = vmatprep.subr.mxu0 0.0
        %1079 = vmatpush1.xpose.msra.mxu0 0.0
        %1080 = vmatprep.subr.mxu0 0.0
        %1081 = vmatpush1.xpose.msra.mxu0 0.0
        %1082 = vmatprep.subr.mxu0 0.0
        %1083 = vmatpush1.xpose.msra.mxu0 0.0
        %1084 = vmatprep.subr.mxu0 0.0
        %1085 = vmatpush1.xpose.msra.mxu0 0.0
        %1086 = vmatprep.subr.mxu0 0.0
        %1087 = vmatpush1.xpose.msra.mxu0 0.0
        %1088 = vmatprep.subr.mxu0 0.0
        %1089 = vmatpush1.xpose.msra.mxu0 0.0
        %1090 = vmatprep.subr.mxu0 0.0
        %1091 = vmatpush1.xpose.msra.mxu0 0.0
        %1092 = vmatprep.subr.mxu0 0.0
        %1093 = vmatpush1.xpose.msra.mxu0 0.0
        %1094 = vmatprep.subr.mxu0 0.0
        %1095 = vmatpush1.xpose.msra.mxu0 0.0
        %1096 = vmatprep.subr.mxu0 0.0
        %1097 = vmatpush1.xpose.msra.mxu0 0.0
        %1098 = vmatprep.subr.mxu0 0.0
        %1099 = vmatpush1.xpose.msra.mxu0 0.0
        %1100 = vmatprep.subr.mxu0 0.0
        %1101 = vmatpush1.xpose.msra.mxu0 0.0
        %1102 = vmatprep.subr.mxu0 0.0
        %1103 = vmatpush1.xpose.msra.mxu0 0.0
        %1104 = vmatprep.subr.mxu0 0.0
        %1105 = vmatpush1.xpose.msra.mxu0 0.0
        %1106 = vmatprep.subr.mxu0 0.0
        %1107 = vmatpush1.xpose.msra.mxu0 0.0
        %1108 = vmatprep.subr.mxu0 0.0
        %1109 = vmatpush1.xpose.msra.mxu0 0.0
        %1110 = vmatprep.subr.mxu0 0.0
        %1111 = vmatpush1.xpose.msra.mxu0 0.0
        %1112 = vmatprep.subr.mxu0 0.0
        %1113 = vmatpush1.xpose.msra.mxu0 0.0
        %1114 = vmatprep.subr.mxu0 0.0
        %1115 = vmatpush1.xpose.msra.mxu0 0.0
        %1116 = vmatprep.subr.mxu0 0.0
        %1117 = vmatpush1.xpose.msra.mxu0 0.0
        %1118 = vmatprep.subr.mxu0 0.0
        %1119 = vmatpush1.xpose.msra.mxu0 0.0
        %1120 = vmatprep.subr.mxu0 0.0
        %1121 = vmatpush1.xpose.msra.mxu0 0.0
        %1122 = vmatprep.subr.mxu0 0.0
        %1123 = vmatpush1.xpose.msra.mxu0 0.0
        %1124 = vmatprep.subr.mxu0 0.0
        %1125 = vmatpush1.xpose.msra.mxu0 0.0
        %1126 = vmatprep.subr.mxu0 0.0
        %1127 = vmatpush1.xpose.msra.mxu0 0.0
        %1128 = vmatprep.mubr.f32.mxu0 0.0
        %1129 = vmatmul.mubr.f32.gmra.mrb[0].mxu0 %v1059
        %v1130 = vpop.f32.mrb[0].mxu0
        %v1131 = vadd.f32 0.0, %v1130
        %v1132 = vpop.f32.mrb[0].mxu0
        %1133 = vdwg.mxu0
        %v1134 = vmul.f32 %v1055, 0.17677669
        %v1135 = vmul.f32 %v1131, 0.17677669
        %v1138 = vlaneseq
        %v1139 = vshrl.u32 %v1138, 7
        %v1140 = vsub.s32 0, %v1139
        %v1141 = vrot.slane %v765, %v1140
        %v1142 = vlaneseq
        %v1143 = vshrl.u32 %v1142, 7
        %v1144 = vsub.s32 0, %v1143
        %v1145 = vrot.slane %v766, %v1144
        %v1148 = vadd.f32 %v1134, %v1141
        %v1149 = vadd.f32 %v1135, %v1145
        %vm1150 = vcmask 64512
        %v1151 = vsel %vm1150, %v1148, -inf
        %1152 = vmax.xlane.f32.xlu0 %v1151
        %v1153 = vpop.xlane.xlu0 %1152
        %v1154 = vsel %vm1150, %v1149, -inf
        %1155 = vmax.xlane.f32.xlu0 %v1154
        %v1156 = vpop.xlane.xlu0 %1155
        %v1157 = vsub.f32 %v1148, %v1153
        %v1158 = vsub.f32 %v1149, %v1156
        %v1159 = vmul.f32 %v1157, 1.442695
        %v1160 = vpow.pop %v1159
        %v1161 = vmul.f32 %v1158, 1.442695
        %v1162 = vpow.pop %v1161
        %v1163 = vsel %vm1150, %v1160, 0.0
        %1164 = vadd.xlane.f32.xlu0 %v1163
        %v1165 = vpop.xlane.xlu0 %1164
        %v1166 = vsel %vm1150, %v1162, 0.0
        %1167 = vadd.xlane.f32.xlu0 %v1166
        %v1168 = vpop.xlane.xlu0 %1167
        %v1169 = vrcp.pop %v1165
        %v1170 = vrcp.pop %v1168
        %v1171 = vmul.f32 %v1160, %v1169
        %v1172 = vmul.f32 %v1162, %v1170
        %v1174 = vsel %vm1150, %v1171, 0
        %1176 = vmatprep.subr.mxu0 0.0
        %1177 = vmatpush1.msra.mxu0 %v973
        %1178 = vmatprep.subr.mxu0 0.0
        %1179 = vmatpush1.msra.mxu0 0.0
        %1180 = vmatprep.subr.mxu0 0.0
        %1181 = vmatpush1.msra.mxu0 0.0
        %1182 = vmatprep.subr.mxu0 0.0
        %1183 = vmatpush1.msra.mxu0 0.0
        %1184 = vmatprep.subr.mxu0 0.0
        %1185 = vmatpush1.msra.mxu0 0.0
        %1186 = vmatprep.subr.mxu0 0.0
        %1187 = vmatpush1.msra.mxu0 0.0
        %1188 = vmatprep.subr.mxu0 0.0
        %1189 = vmatpush1.msra.mxu0 0.0
        %1190 = vmatprep.subr.mxu0 0.0
        %1191 = vmatpush1.msra.mxu0 0.0
        %1192 = vmatprep.subr.mxu0 0.0
        %1193 = vmatpush1.msra.mxu0 0.0
        %1194 = vmatprep.subr.mxu0 0.0
        %1195 = vmatpush1.msra.mxu0 0.0
        %1196 = vmatprep.subr.mxu0 0.0
        %1197 = vmatpush1.msra.mxu0 0.0
        %1198 = vmatprep.subr.mxu0 0.0
        %1199 = vmatpush1.msra.mxu0 0.0
        %1200 = vmatprep.subr.mxu0 0.0
        %1201 = vmatpush1.msra.mxu0 0.0
        %1202 = vmatprep.subr.mxu0 0.0
        %1203 = vmatpush1.msra.mxu0 0.0
        %1204 = vmatprep.subr.mxu0 0.0
        %1205 = vmatpush1.msra.mxu0 0.0
        %1206 = vmatprep.subr.mxu0 0.0
        %1207 = vmatpush1.msra.mxu0 0.0
        %1208 = vmatprep.subr.mxu0 0.0
        %1209 = vmatpush1.msra.mxu0 0.0
        %1210 = vmatprep.subr.mxu0 0.0
        %1211 = vmatpush1.msra.mxu0 0.0
        %1212 = vmatprep.subr.mxu0 0.0
        %1213 = vmatpush1.msra.mxu0 0.0
        %1214 = vmatprep.subr.mxu0 0.0
        %1215 = vmatpush1.msra.mxu0 0.0
        %1216 = vmatprep.subr.mxu0 0.0
        %1217 = vmatpush1.msra.mxu0 0.0
        %1218 = vmatprep.subr.mxu0 0.0
        %1219 = vmatpush1.msra.mxu0 0.0
        %1220 = vmatprep.subr.mxu0 0.0
        %1221 = vmatpush1.msra.mxu0 0.0
        %1222 = vmatprep.subr.mxu0 0.0
        %1223 = vmatpush1.msra.mxu0 0.0
        %1224 = vmatprep.subr.mxu0 0.0
        %1225 = vmatpush1.msra.mxu0 0.0
        %1226 = vmatprep.subr.mxu0 0.0
        %1227 = vmatpush1.msra.mxu0 0.0
        %1228 = vmatprep.subr.mxu0 0.0
        %1229 = vmatpush1.msra.mxu0 0.0
        %1230 = vmatprep.subr.mxu0 0.0
        %1231 = vmatpush1.msra.mxu0 0.0
        %1232 = vmatprep.subr.mxu0 0.0
        %1233 = vmatpush1.msra.mxu0 0.0
        %1234 = vmatprep.subr.mxu0 0.0
        %1235 = vmatpush1.msra.mxu0 0.0
        %1236 = vmatprep.subr.mxu0 0.0
        %1237 = vmatpush1.msra.mxu0 0.0
        %1238 = vmatprep.subr.mxu0 0.0
        %1239 = vmatpush1.msra.mxu0 0.0
        %1240 = vmatprep.mubr.f32.mxu0 0.0
        %1241 = vmatmul.mubr.f32.gmra.mrb[0].mxu0 %v1174
        %v1242 = vpop.f32.mrb[0].mxu0
        %v1243 = vadd.f32 0.0, %v1242
        %v1244 = vpop.f32.mrb[0].mxu0
        %1245 = vdwg.mxu0
        %v1247 = vsel %vm1150, %v1172, 0
        %1249 = vmatprep.subr.mxu0 0.0
        %1250 = vmatpush1.msra.mxu0 %v978
        %1251 = vmatprep.subr.mxu0 0.0
        %1252 = vmatpush1.msra.mxu0 0.0
        %1253 = vmatprep.subr.mxu0 0.0
        %1254 = vmatpush1.msra.mxu0 0.0
        %1255 = vmatprep.subr.mxu0 0.0
        %1256 = vmatpush1.msra.mxu0 0.0
        %1257 = vmatprep.subr.mxu0 0.0
        %1258 = vmatpush1.msra.mxu0 0.0
        %1259 = vmatprep.subr.mxu0 0.0
        %1260 = vmatpush1.msra.mxu0 0.0
        %1261 = vmatprep.subr.mxu0 0.0
        %1262 = vmatpush1.msra.mxu0 0.0
        %1263 = vmatprep.subr.mxu0 0.0
        %1264 = vmatpush1.msra.mxu0 0.0
        %1265 = vmatprep.subr.mxu0 0.0
        %1266 = vmatpush1.msra.mxu0 0.0
        %1267 = vmatprep.subr.mxu0 0.0
        %1268 = vmatpush1.msra.mxu0 0.0
        %1269 = vmatprep.subr.mxu0 0.0
        %1270 = vmatpush1.msra.mxu0 0.0
        %1271 = vmatprep.subr.mxu0 0.0
        %1272 = vmatpush1.msra.mxu0 0.0
        %1273 = vmatprep.subr.mxu0 0.0
        %1274 = vmatpush1.msra.mxu0 0.0
        %1275 = vmatprep.subr.mxu0 0.0
        %1276 = vmatpush1.msra.mxu0 0.0
        %1277 = vmatprep.subr.mxu0 0.0
        %1278 = vmatpush1.msra.mxu0 0.0
        %1279 = vmatprep.subr.mxu0 0.0
        %1280 = vmatpush1.msra.mxu0 0.0
        %1281 = vmatprep.subr.mxu0 0.0
        %1282 = vmatpush1.msra.mxu0 0.0
        %1283 = vmatprep.subr.mxu0 0.0
        %1284 = vmatpush1.msra.mxu0 0.0
        %1285 = vmatprep.subr.mxu0 0.0
        %1286 = vmatpush1.msra.mxu0 0.0
        %1287 = vmatprep.subr.mxu0 0.0
        %1288 = vmatpush1.msra.mxu0 0.0
        %1289 = vmatprep.subr.mxu0 0.0
        %1290 = vmatpush1.msra.mxu0 0.0
        %1291 = vmatprep.subr.mxu0 0.0
        %1292 = vmatpush1.msra.mxu0 0.0
        %1293 = vmatprep.subr.mxu0 0.0
        %1294 = vmatpush1.msra.mxu0 0.0
        %1295 = vmatprep.subr.mxu0 0.0
        %1296 = vmatpush1.msra.mxu0 0.0
        %1297 = vmatprep.subr.mxu0 0.0
        %1298 = vmatpush1.msra.mxu0 0.0
        %1299 = vmatprep.subr.mxu0 0.0
        %1300 = vmatpush1.msra.mxu0 0.0
        %1301 = vmatprep.subr.mxu0 0.0
        %1302 = vmatpush1.msra.mxu0 0.0
        %1303 = vmatprep.subr.mxu0 0.0
        %1304 = vmatpush1.msra.mxu0 0.0
        %1305 = vmatprep.subr.mxu0 0.0
        %1306 = vmatpush1.msra.mxu0 0.0
        %1307 = vmatprep.subr.mxu0 0.0
        %1308 = vmatpush1.msra.mxu0 0.0
        %1309 = vmatprep.subr.mxu0 0.0
        %1310 = vmatpush1.msra.mxu0 0.0
        %1311 = vmatprep.subr.mxu0 0.0
        %1312 = vmatpush1.msra.mxu0 0.0
        %1313 = vmatprep.mubr.f32.mxu0 0.0
        %1314 = vmatmul.mubr.f32.gmra.mrb[0].mxu0 %v1247
        %v1315 = vpop.f32.mrb[0].mxu0
        %v1316 = vadd.f32 0.0, %v1315
        %v1317 = vpop.f32.mrb[0].mxu0
        %1318 = vdwg.mxu0
        %1319 = vrot.lane.b32.xlu0 %v896, 96
        %v1320 = vpop.permute.xlu0 %1319
        %1321 = vrot.lane.b32.xlu0 %v898, 96
        %v1322 = vpop.permute.xlu0 %1321
        %v1323 = vsel %vm981, %v1320, 0
        %v1325 = vsel %vm981, %v1322, 0
        %1327 = vmatprep.subr.mxu0 0.0
        %1328 = vmatpush1.xpose.msra.mxu0 %v1325
        %1329 = vmatprep.subr.mxu0 0.0
        %1330 = vmatpush1.xpose.msra.mxu0 0.0
        %1331 = vmatprep.subr.mxu0 0.0
        %1332 = vmatpush1.xpose.msra.mxu0 0.0
        %1333 = vmatprep.subr.mxu0 0.0
        %1334 = vmatpush1.xpose.msra.mxu0 0.0
        %1335 = vmatprep.subr.mxu0 0.0
        %1336 = vmatpush1.xpose.msra.mxu0 0.0
        %1337 = vmatprep.subr.mxu0 0.0
        %1338 = vmatpush1.xpose.msra.mxu0 0.0
        %1339 = vmatprep.subr.mxu0 0.0
        %1340 = vmatpush1.xpose.msra.mxu0 0.0
        %1341 = vmatprep.subr.mxu0 0.0
        %1342 = vmatpush1.xpose.msra.mxu0 0.0
        %1343 = vmatprep.subr.mxu0 0.0
        %1344 = vmatpush1.xpose.msra.mxu0 0.0
        %1345 = vmatprep.subr.mxu0 0.0
        %1346 = vmatpush1.xpose.msra.mxu0 0.0
        %1347 = vmatprep.subr.mxu0 0.0
        %1348 = vmatpush1.xpose.msra.mxu0 0.0
        %1349 = vmatprep.subr.mxu0 0.0
        %1350 = vmatpush1.xpose.msra.mxu0 0.0
        %1351 = vmatprep.subr.mxu0 0.0
        %1352 = vmatpush1.xpose.msra.mxu0 0.0
        %1353 = vmatprep.subr.mxu0 0.0
        %1354 = vmatpush1.xpose.msra.mxu0 0.0
        %1355 = vmatprep.subr.mxu0 0.0
        %1356 = vmatpush1.xpose.msra.mxu0 0.0
        %1357 = vmatprep.subr.mxu0 0.0
        %1358 = vmatpush1.xpose.msra.mxu0 0.0
        %1359 = vmatprep.subr.mxu0 0.0
        %1360 = vmatpush1.xpose.msra.mxu0 0.0
        %1361 = vmatprep.subr.mxu0 0.0
        %1362 = vmatpush1.xpose.msra.mxu0 0.0
        %1363 = vmatprep.subr.mxu0 0.0
        %1364 = vmatpush1.xpose.msra.mxu0 0.0
        %1365 = vmatprep.subr.mxu0 0.0
        %1366 = vmatpush1.xpose.msra.mxu0 0.0
        %1367 = vmatprep.subr.mxu0 0.0
        %1368 = vmatpush1.xpose.msra.mxu0 0.0
        %1369 = vmatprep.subr.mxu0 0.0
        %1370 = vmatpush1.xpose.msra.mxu0 0.0
        %1371 = vmatprep.subr.mxu0 0.0
        %1372 = vmatpush1.xpose.msra.mxu0 0.0
        %1373 = vmatprep.subr.mxu0 0.0
        %1374 = vmatpush1.xpose.msra.mxu0 0.0
        %1375 = vmatprep.subr.mxu0 0.0
        %1376 = vmatpush1.xpose.msra.mxu0 0.0
        %1377 = vmatprep.subr.mxu0 0.0
        %1378 = vmatpush1.xpose.msra.mxu0 0.0
        %1379 = vmatprep.subr.mxu0 0.0
        %1380 = vmatpush1.xpose.msra.mxu0 0.0
        %1381 = vmatprep.subr.mxu0 0.0
        %1382 = vmatpush1.xpose.msra.mxu0 0.0
        %1383 = vmatprep.subr.mxu0 0.0
        %1384 = vmatpush1.xpose.msra.mxu0 0.0
        %1385 = vmatprep.subr.mxu0 0.0
        %1386 = vmatpush1.xpose.msra.mxu0 0.0
        %1387 = vmatprep.subr.mxu0 0.0
        %1388 = vmatpush1.xpose.msra.mxu0 0.0
        %1389 = vmatprep.subr.mxu0 0.0
        %1390 = vmatpush1.xpose.msra.mxu0 0.0
        %1391 = vmatprep.mubr.f32.mxu0 0.0
        %1392 = vmatmul.mubr.f32.gmra.mrb[0].mxu0 %v1323
        %v1393 = vpop.f32.mrb[0].mxu0
        %v1394 = vadd.f32 0.0, %v1393
        %v1395 = vpop.f32.mrb[0].mxu0
        %1396 = vdwg.mxu0
        %1397 = vrot.lane.b32.xlu0 %v902, 96
        %v1398 = vpop.permute.xlu0 %1397
        %1399 = vrot.lane.b32.xlu0 %v904, 96
        %v1400 = vpop.permute.xlu0 %1399
        %v1401 = vsel %vm981, %v1398, 0
        %v1403 = vsel %vm981, %v1400, 0
        %1405 = vmatprep.subr.mxu0 0.0
        %1406 = vmatpush1.xpose.msra.mxu0 %v1403
        %1407 = vmatprep.subr.mxu0 0.0
        %1408 = vmatpush1.xpose.msra.mxu0 0.0
        %1409 = vmatprep.subr.mxu0 0.0
        %1410 = vmatpush1.xpose.msra.mxu0 0.0
        %1411 = vmatprep.subr.mxu0 0.0
        %1412 = vmatpush1.xpose.msra.mxu0 0.0
        %1413 = vmatprep.subr.mxu0 0.0
        %1414 = vmatpush1.xpose.msra.mxu0 0.0
        %1415 = vmatprep.subr.mxu0 0.0
        %1416 = vmatpush1.xpose.msra.mxu0 0.0
        %1417 = vmatprep.subr.mxu0 0.0
        %1418 = vmatpush1.xpose.msra.mxu0 0.0
        %1419 = vmatprep.subr.mxu0 0.0
        %1420 = vmatpush1.xpose.msra.mxu0 0.0
        %1421 = vmatprep.subr.mxu0 0.0
        %1422 = vmatpush1.xpose.msra.mxu0 0.0
        %1423 = vmatprep.subr.mxu0 0.0
        %1424 = vmatpush1.xpose.msra.mxu0 0.0
        %1425 = vmatprep.subr.mxu0 0.0
        %1426 = vmatpush1.xpose.msra.mxu0 0.0
        %1427 = vmatprep.subr.mxu0 0.0
        %1428 = vmatpush1.xpose.msra.mxu0 0.0
        %1429 = vmatprep.subr.mxu0 0.0
        %1430 = vmatpush1.xpose.msra.mxu0 0.0
        %1431 = vmatprep.subr.mxu0 0.0
        %1432 = vmatpush1.xpose.msra.mxu0 0.0
        %1433 = vmatprep.subr.mxu0 0.0
        %1434 = vmatpush1.xpose.msra.mxu0 0.0
        %1435 = vmatprep.subr.mxu0 0.0
        %1436 = vmatpush1.xpose.msra.mxu0 0.0
        %1437 = vmatprep.subr.mxu0 0.0
        %1438 = vmatpush1.xpose.msra.mxu0 0.0
        %1439 = vmatprep.subr.mxu0 0.0
        %1440 = vmatpush1.xpose.msra.mxu0 0.0
        %1441 = vmatprep.subr.mxu0 0.0
        %1442 = vmatpush1.xpose.msra.mxu0 0.0
        %1443 = vmatprep.subr.mxu0 0.0
        %1444 = vmatpush1.xpose.msra.mxu0 0.0
        %1445 = vmatprep.subr.mxu0 0.0
        %1446 = vmatpush1.xpose.msra.mxu0 0.0
        %1447 = vmatprep.subr.mxu0 0.0
        %1448 = vmatpush1.xpose.msra.mxu0 0.0
        %1449 = vmatprep.subr.mxu0 0.0
        %1450 = vmatpush1.xpose.msra.mxu0 0.0
        %1451 = vmatprep.subr.mxu0 0.0
        %1452 = vmatpush1.xpose.msra.mxu0 0.0
        %1453 = vmatprep.subr.mxu0 0.0
        %1454 = vmatpush1.xpose.msra.mxu0 0.0
        %1455 = vmatprep.subr.mxu0 0.0
        %1456 = vmatpush1.xpose.msra.mxu0 0.0
        %1457 = vmatprep.subr.mxu0 0.0
        %1458 = vmatpush1.xpose.msra.mxu0 0.0
        %1459 = vmatprep.subr.mxu0 0.0
        %1460 = vmatpush1.xpose.msra.mxu0 0.0
        %1461 = vmatprep.subr.mxu0 0.0
        %1462 = vmatpush1.xpose.msra.mxu0 0.0
        %1463 = vmatprep.subr.mxu0 0.0
        %1464 = vmatpush1.xpose.msra.mxu0 0.0
        %1465 = vmatprep.subr.mxu0 0.0
        %1466 = vmatpush1.xpose.msra.mxu0 0.0
        %1467 = vmatprep.subr.mxu0 0.0
        %1468 = vmatpush1.xpose.msra.mxu0 0.0
        %1469 = vmatprep.mubr.f32.mxu0 0.0
        %1470 = vmatmul.mubr.f32.gmra.mrb[0].mxu0 %v1401
        %v1471 = vpop.f32.mrb[0].mxu0
        %v1472 = vadd.f32 0.0, %v1471
        %v1473 = vpop.f32.mrb[0].mxu0
        %1474 = vdwg.mxu0
        %v1475 = vmul.f32 %v1394, 0.17677669
        %v1476 = vmul.f32 %v1472, 0.17677669
        %v1477 = vadd.f32 %v1475, %v1141
        %v1478 = vadd.f32 %v1476, %v1145
        %v1479 = vsel %vm1150, %v1477, -inf
        %1480 = vmax.xlane.f32.xlu0 %v1479
        %v1481 = vpop.xlane.xlu0 %1480
        %v1482 = vsel %vm1150, %v1478, -inf
        %1483 = vmax.xlane.f32.xlu0 %v1482
        %v1484 = vpop.xlane.xlu0 %1483
        %v1485 = vsub.f32 %v1477, %v1481
        %v1486 = vsub.f32 %v1478, %v1484
        %v1487 = vmul.f32 %v1485, 1.442695
        %v1488 = vpow.pop %v1487
        %v1489 = vmul.f32 %v1486, 1.442695
        %v1490 = vpow.pop %v1489
        %v1491 = vsel %vm1150, %v1488, 0.0
        %1492 = vadd.xlane.f32.xlu0 %v1491
        %v1493 = vpop.xlane.xlu0 %1492
        %v1494 = vsel %vm1150, %v1490, 0.0
        %1495 = vadd.xlane.f32.xlu0 %v1494
        %v1496 = vpop.xlane.xlu0 %1495
        %v1497 = vrcp.pop %v1493
        %v1498 = vrcp.pop %v1496
        %v1499 = vmul.f32 %v1488, %v1497
        %v1500 = vmul.f32 %v1490, %v1498
        %1502 = vrot.lane.b32.xlu0 %v973, 96
        %v1503 = vpop.permute.xlu0 %1502
        %v1506 = vsel %vm1150, %v1499, 0
        %1508 = vmatprep.subr.mxu0 0.0
        %1509 = vmatpush1.msra.mxu0 %v1503
        %1510 = vmatprep.subr.mxu0 0.0
        %1511 = vmatpush1.msra.mxu0 0.0
        %1512 = vmatprep.subr.mxu0 0.0
        %1513 = vmatpush1.msra.mxu0 0.0
        %1514 = vmatprep.subr.mxu0 0.0
        %1515 = vmatpush1.msra.mxu0 0.0
        %1516 = vmatprep.subr.mxu0 0.0
        %1517 = vmatpush1.msra.mxu0 0.0
        %1518 = vmatprep.subr.mxu0 0.0
        %1519 = vmatpush1.msra.mxu0 0.0
        %1520 = vmatprep.subr.mxu0 0.0
        %1521 = vmatpush1.msra.mxu0 0.0
        %1522 = vmatprep.subr.mxu0 0.0
        %1523 = vmatpush1.msra.mxu0 0.0
        %1524 = vmatprep.subr.mxu0 0.0
        %1525 = vmatpush1.msra.mxu0 0.0
        %1526 = vmatprep.subr.mxu0 0.0
        %1527 = vmatpush1.msra.mxu0 0.0
        %1528 = vmatprep.subr.mxu0 0.0
        %1529 = vmatpush1.msra.mxu0 0.0
        %1530 = vmatprep.subr.mxu0 0.0
        %1531 = vmatpush1.msra.mxu0 0.0
        %1532 = vmatprep.subr.mxu0 0.0
        %1533 = vmatpush1.msra.mxu0 0.0
        %1534 = vmatprep.subr.mxu0 0.0
        %1535 = vmatpush1.msra.mxu0 0.0
        %1536 = vmatprep.subr.mxu0 0.0
        %1537 = vmatpush1.msra.mxu0 0.0
        %1538 = vmatprep.subr.mxu0 0.0
        %1539 = vmatpush1.msra.mxu0 0.0
        %1540 = vmatprep.subr.mxu0 0.0
        %1541 = vmatpush1.msra.mxu0 0.0
        %1542 = vmatprep.subr.mxu0 0.0
        %1543 = vmatpush1.msra.mxu0 0.0
        %1544 = vmatprep.subr.mxu0 0.0
        %1545 = vmatpush1.msra.mxu0 0.0
        %1546 = vmatprep.subr.mxu0 0.0
        %1547 = vmatpush1.msra.mxu0 0.0
        %1548 = vmatprep.subr.mxu0 0.0
        %1549 = vmatpush1.msra.mxu0 0.0
        %1550 = vmatprep.subr.mxu0 0.0
        %1551 = vmatpush1.msra.mxu0 0.0
        %1552 = vmatprep.subr.mxu0 0.0
        %1553 = vmatpush1.msra.mxu0 0.0
        %1554 = vmatprep.subr.mxu0 0.0
        %1555 = vmatpush1.msra.mxu0 0.0
        %1556 = vmatprep.subr.mxu0 0.0
        %1557 = vmatpush1.msra.mxu0 0.0
        %1558 = vmatprep.subr.mxu0 0.0
        %1559 = vmatpush1.msra.mxu0 0.0
        %1560 = vmatprep.subr.mxu0 0.0
        %1561 = vmatpush1.msra.mxu0 0.0
        %1562 = vmatprep.subr.mxu0 0.0
        %1563 = vmatpush1.msra.mxu0 0.0
        %1564 = vmatprep.subr.mxu0 0.0
        %1565 = vmatpush1.msra.mxu0 0.0
        %1566 = vmatprep.subr.mxu0 0.0
        %1567 = vmatpush1.msra.mxu0 0.0
        %1568 = vmatprep.subr.mxu0 0.0
        %1569 = vmatpush1.msra.mxu0 0.0
        %1570 = vmatprep.subr.mxu0 0.0
        %1571 = vmatpush1.msra.mxu0 0.0
        %1572 = vmatprep.mubr.f32.mxu0 0.0
        %1573 = vmatmul.mubr.f32.gmra.mrb[0].mxu0 %v1506
        %v1574 = vpop.f32.mrb[0].mxu0
        %v1575 = vadd.f32 0.0, %v1574
        %v1576 = vpop.f32.mrb[0].mxu0
        %1577 = vdwg.mxu0
        %1579 = vrot.lane.b32.xlu0 %v978, 96
        %v1580 = vpop.permute.xlu0 %1579
        %v1583 = vsel %vm1150, %v1500, 0
        %1585 = vmatprep.subr.mxu0 0.0
        %1586 = vmatpush1.msra.mxu0 %v1580
        %1587 = vmatprep.subr.mxu0 0.0
        %1588 = vmatpush1.msra.mxu0 0.0
        %1589 = vmatprep.subr.mxu0 0.0
        %1590 = vmatpush1.msra.mxu0 0.0
        %1591 = vmatprep.subr.mxu0 0.0
        %1592 = vmatpush1.msra.mxu0 0.0
        %1593 = vmatprep.subr.mxu0 0.0
        %1594 = vmatpush1.msra.mxu0 0.0
        %1595 = vmatprep.subr.mxu0 0.0
        %1596 = vmatpush1.msra.mxu0 0.0
        %1597 = vmatprep.subr.mxu0 0.0
        %1598 = vmatpush1.msra.mxu0 0.0
        %1599 = vmatprep.subr.mxu0 0.0
        %1600 = vmatpush1.msra.mxu0 0.0
        %1601 = vmatprep.subr.mxu0 0.0
        %1602 = vmatpush1.msra.mxu0 0.0
        %1603 = vmatprep.subr.mxu0 0.0
        %1604 = vmatpush1.msra.mxu0 0.0
        %1605 = vmatprep.subr.mxu0 0.0
        %1606 = vmatpush1.msra.mxu0 0.0
        %1607 = vmatprep.subr.mxu0 0.0
        %1608 = vmatpush1.msra.mxu0 0.0
        %1609 = vmatprep.subr.mxu0 0.0
        %1610 = vmatpush1.msra.mxu0 0.0
        %1611 = vmatprep.subr.mxu0 0.0
        %1612 = vmatpush1.msra.mxu0 0.0
        %1613 = vmatprep.subr.mxu0 0.0
        %1614 = vmatpush1.msra.mxu0 0.0
        %1615 = vmatprep.subr.mxu0 0.0
        %1616 = vmatpush1.msra.mxu0 0.0
        %1617 = vmatprep.subr.mxu0 0.0
        %1618 = vmatpush1.msra.mxu0 0.0
        %1619 = vmatprep.subr.mxu0 0.0
        %1620 = vmatpush1.msra.mxu0 0.0
        %1621 = vmatprep.subr.mxu0 0.0
        %1622 = vmatpush1.msra.mxu0 0.0
        %1623 = vmatprep.subr.mxu0 0.0
        %1624 = vmatpush1.msra.mxu0 0.0
        %1625 = vmatprep.subr.mxu0 0.0
        %1626 = vmatpush1.msra.mxu0 0.0
        %1627 = vmatprep.subr.mxu0 0.0
        %1628 = vmatpush1.msra.mxu0 0.0
        %1629 = vmatprep.subr.mxu0 0.0
        %1630 = vmatpush1.msra.mxu0 0.0
        %1631 = vmatprep.subr.mxu0 0.0
        %1632 = vmatpush1.msra.mxu0 0.0
        %1633 = vmatprep.subr.mxu0 0.0
        %1634 = vmatpush1.msra.mxu0 0.0
        %1635 = vmatprep.subr.mxu0 0.0
        %1636 = vmatpush1.msra.mxu0 0.0
        %1637 = vmatprep.subr.mxu0 0.0
        %1638 = vmatpush1.msra.mxu0 0.0
        %1639 = vmatprep.subr.mxu0 0.0
        %1640 = vmatpush1.msra.mxu0 0.0
        %1641 = vmatprep.subr.mxu0 0.0
        %1642 = vmatpush1.msra.mxu0 0.0
        %1643 = vmatprep.subr.mxu0 0.0
        %1644 = vmatpush1.msra.mxu0 0.0
        %1645 = vmatprep.subr.mxu0 0.0
        %1646 = vmatpush1.msra.mxu0 0.0
        %1647 = vmatprep.subr.mxu0 0.0
        %1648 = vmatpush1.msra.mxu0 0.0
        %1649 = vmatprep.mubr.f32.mxu0 0.0
        %1650 = vmatmul.mubr.f32.gmra.mrb[0].mxu0 %v1583
        %v1651 = vpop.f32.mrb[0].mxu0
        %v1652 = vadd.f32 0.0, %v1651
        %v1653 = vpop.f32.mrb[0].mxu0
        %1654 = vdwg.mxu0
        %v1656 = vsel %vm981, %v1575, 0
        %v1659 = vsel %vm981, %v1652, 0
        %1661 = vmatprep.subr.mxu0 0.0
        %1662 = vmatpush1.msra.mxu0 %v496
        %1663 = vmatprep.subr.mxu0 0.0
        %1664 = vmatpush1.msra.mxu0 %v500
        %1665 = vmatprep.subr.mxu0 0.0
        %1666 = vmatpush1.msra.mxu0 %v504
        %1667 = vmatprep.subr.mxu0 0.0
        %1668 = vmatpush1.msra.mxu0 %v508
        %1669 = vmatprep.subr.mxu0 0.0
        %1670 = vmatpush1.msra.mxu0 0.0
        %1671 = vmatprep.subr.mxu0 0.0
        %1672 = vmatpush1.msra.mxu0 0.0
        %1673 = vmatprep.subr.mxu0 0.0
        %1674 = vmatpush1.msra.mxu0 0.0
        %1675 = vmatprep.subr.mxu0 0.0
        %1676 = vmatpush1.msra.mxu0 0.0
        %1677 = vmatprep.subr.mxu0 0.0
        %1678 = vmatpush1.msra.mxu0 0.0
        %1679 = vmatprep.subr.mxu0 0.0
        %1680 = vmatpush1.msra.mxu0 0.0
        %1681 = vmatprep.subr.mxu0 0.0
        %1682 = vmatpush1.msra.mxu0 0.0
        %1683 = vmatprep.subr.mxu0 0.0
        %1684 = vmatpush1.msra.mxu0 0.0
        %1685 = vmatprep.subr.mxu0 0.0
        %1686 = vmatpush1.msra.mxu0 0.0
        %1687 = vmatprep.subr.mxu0 0.0
        %1688 = vmatpush1.msra.mxu0 0.0
        %1689 = vmatprep.subr.mxu0 0.0
        %1690 = vmatpush1.msra.mxu0 0.0
        %1691 = vmatprep.subr.mxu0 0.0
        %1692 = vmatpush1.msra.mxu0 0.0
        %1693 = vmatprep.subr.mxu0 0.0
        %1694 = vmatpush1.msra.mxu0 0.0
        %1695 = vmatprep.subr.mxu0 0.0
        %1696 = vmatpush1.msra.mxu0 0.0
        %1697 = vmatprep.subr.mxu0 0.0
        %1698 = vmatpush1.msra.mxu0 0.0
        %1699 = vmatprep.subr.mxu0 0.0
        %1700 = vmatpush1.msra.mxu0 0.0
        %1701 = vmatprep.subr.mxu0 0.0
        %1702 = vmatpush1.msra.mxu0 0.0
        %1703 = vmatprep.subr.mxu0 0.0
        %1704 = vmatpush1.msra.mxu0 0.0
        %1705 = vmatprep.subr.mxu0 0.0
        %1706 = vmatpush1.msra.mxu0 0.0
        %1707 = vmatprep.subr.mxu0 0.0
        %1708 = vmatpush1.msra.mxu0 0.0
        %1709 = vmatprep.subr.mxu0 0.0
        %1710 = vmatpush1.msra.mxu0 0.0
        %1711 = vmatprep.subr.mxu0 0.0
        %1712 = vmatpush1.msra.mxu0 0.0
        %1713 = vmatprep.subr.mxu0 0.0
        %1714 = vmatpush1.msra.mxu0 0.0
        %1715 = vmatprep.subr.mxu0 0.0
        %1716 = vmatpush1.msra.mxu0 0.0
        %1717 = vmatprep.subr.mxu0 0.0
        %1718 = vmatpush1.msra.mxu0 0.0
        %1719 = vmatprep.subr.mxu0 0.0
        %1720 = vmatpush1.msra.mxu0 0.0
        %1721 = vmatprep.subr.mxu0 0.0
        %1722 = vmatpush1.msra.mxu0 0.0
        %1723 = vmatprep.subr.mxu0 0.0
        %1724 = vmatpush1.msra.mxu0 0.0
        %1725 = vmatprep.mubr.f32.mxu0 0.0
        %1726 = vmatmul.mubr.f32.gmra.mrb[0].mxu0 %v1656
        %v1727 = vpop.f32.mrb[0].mxu0
        %v1728 = vadd.f32 0.0, %v1727
        %v1729 = vpop.f32.mrb[0].mxu0
        %1730 = vmatprep.mubr.f32.mxu0 0.0
        %1731 = vmatmul.mubr.f32.gmra.mrb[0].mxu0 %v1659
        %v1732 = vpop.f32.mrb[0].mxu0
        %v1733 = vadd.f32 0.0, %v1732
        %v1734 = vpop.f32.mrb[0].mxu0
        %1735 = vdwg.mxu0
        %v1737 = vsel %vm981, %v1243, 0
        %v1740 = vsel %vm981, %v1316, 0
        %1742 = vmatprep.subr.mxu0 0.0
        %1743 = vmatpush1.msra.mxu0 %v480
        %1744 = vmatprep.subr.mxu0 0.0
        %1745 = vmatpush1.msra.mxu0 %v484
        %1746 = vmatprep.subr.mxu0 0.0
        %1747 = vmatpush1.msra.mxu0 %v488
        %1748 = vmatprep.subr.mxu0 0.0
        %1749 = vmatpush1.msra.mxu0 %v492
        %1750 = vmatprep.subr.mxu0 0.0
        %1751 = vmatpush1.msra.mxu0 0.0
        %1752 = vmatprep.subr.mxu0 0.0
        %1753 = vmatpush1.msra.mxu0 0.0
        %1754 = vmatprep.subr.mxu0 0.0
        %1755 = vmatpush1.msra.mxu0 0.0
        %1756 = vmatprep.subr.mxu0 0.0
        %1757 = vmatpush1.msra.mxu0 0.0
        %1758 = vmatprep.subr.mxu0 0.0
        %1759 = vmatpush1.msra.mxu0 0.0
        %1760 = vmatprep.subr.mxu0 0.0
        %1761 = vmatpush1.msra.mxu0 0.0
        %1762 = vmatprep.subr.mxu0 0.0
        %1763 = vmatpush1.msra.mxu0 0.0
        %1764 = vmatprep.subr.mxu0 0.0
        %1765 = vmatpush1.msra.mxu0 0.0
        %1766 = vmatprep.subr.mxu0 0.0
        %1767 = vmatpush1.msra.mxu0 0.0
        %1768 = vmatprep.subr.mxu0 0.0
        %1769 = vmatpush1.msra.mxu0 0.0
        %1770 = vmatprep.subr.mxu0 0.0
        %1771 = vmatpush1.msra.mxu0 0.0
        %1772 = vmatprep.subr.mxu0 0.0
        %1773 = vmatpush1.msra.mxu0 0.0
        %1774 = vmatprep.subr.mxu0 0.0
        %1775 = vmatpush1.msra.mxu0 0.0
        %1776 = vmatprep.subr.mxu0 0.0
        %1777 = vmatpush1.msra.mxu0 0.0
        %1778 = vmatprep.subr.mxu0 0.0
        %1779 = vmatpush1.msra.mxu0 0.0
        %1780 = vmatprep.subr.mxu0 0.0
        %1781 = vmatpush1.msra.mxu0 0.0
        %1782 = vmatprep.subr.mxu0 0.0
        %1783 = vmatpush1.msra.mxu0 0.0
        %1784 = vmatprep.subr.mxu0 0.0
        %1785 = vmatpush1.msra.mxu0 0.0
        %1786 = vmatprep.subr.mxu0 0.0
        %1787 = vmatpush1.msra.mxu0 0.0
        %1788 = vmatprep.subr.mxu0 0.0
        %1789 = vmatpush1.msra.mxu0 0.0
        %1790 = vmatprep.subr.mxu0 0.0
        %1791 = vmatpush1.msra.mxu0 0.0
        %1792 = vmatprep.subr.mxu0 0.0
        %1793 = vmatpush1.msra.mxu0 0.0
        %1794 = vmatprep.subr.mxu0 0.0
        %1795 = vmatpush1.msra.mxu0 0.0
        %1796 = vmatprep.subr.mxu0 0.0
        %1797 = vmatpush1.msra.mxu0 0.0
        %1798 = vmatprep.subr.mxu0 0.0
        %1799 = vmatpush1.msra.mxu0 0.0
        %1800 = vmatprep.subr.mxu0 0.0
        %1801 = vmatpush1.msra.mxu0 0.0
        %1802 = vmatprep.subr.mxu0 0.0
        %1803 = vmatpush1.msra.mxu0 0.0
        %1804 = vmatprep.subr.mxu0 0.0
        %1805 = vmatpush1.msra.mxu0 0.0
        %1806 = vmatprep.mubr.f32.mxu0 0.0
        %1807 = vmatmul.mubr.f32.gmra.mrb[0].mxu0 %v1737
        %v1808 = vpop.f32.mrb[0].mxu0
        %v1809 = vadd.f32 %v1728, %v1808
        %v1810 = vpop.f32.mrb[0].mxu0
        %1811 = vmatprep.mubr.f32.mxu0 0.0
        %1812 = vmatmul.mubr.f32.gmra.mrb[0].mxu0 %v1740
        %v1813 = vpop.f32.mrb[0].mxu0
        %v1814 = vadd.f32 %v1733, %v1813
        %v1815 = vpop.f32.mrb[0].mxu0
        %1816 = vdwg.mxu0
        %1817 = vrot.lane.b32.xlu0 %v896, 64
        %v1818 = vpop.permute.xlu0 %1817
        %1819 = vrot.lane.b32.xlu0 %v898, 64
        %v1820 = vpop.permute.xlu0 %1819
        %v1821 = vsel %vm981, %v1818, 0
        %v1823 = vsel %vm981, %v1820, 0
        %1825 = vmatprep.subr.mxu0 0.0
        %1826 = vmatpush1.xpose.msra.mxu0 %v1823
        %1827 = vmatprep.subr.mxu0 0.0
        %1828 = vmatpush1.xpose.msra.mxu0 0.0
        %1829 = vmatprep.subr.mxu0 0.0
        %1830 = vmatpush1.xpose.msra.mxu0 0.0
        %1831 = vmatprep.subr.mxu0 0.0
        %1832 = vmatpush1.xpose.msra.mxu0 0.0
        %1833 = vmatprep.subr.mxu0 0.0
        %1834 = vmatpush1.xpose.msra.mxu0 0.0
        %1835 = vmatprep.subr.mxu0 0.0
        %1836 = vmatpush1.xpose.msra.mxu0 0.0
        %1837 = vmatprep.subr.mxu0 0.0
        %1838 = vmatpush1.xpose.msra.mxu0 0.0
        %1839 = vmatprep.subr.mxu0 0.0
        %1840 = vmatpush1.xpose.msra.mxu0 0.0
        %1841 = vmatprep.subr.mxu0 0.0
        %1842 = vmatpush1.xpose.msra.mxu0 0.0
        %1843 = vmatprep.subr.mxu0 0.0
        %1844 = vmatpush1.xpose.msra.mxu0 0.0
        %1845 = vmatprep.subr.mxu0 0.0
        %1846 = vmatpush1.xpose.msra.mxu0 0.0
        %1847 = vmatprep.subr.mxu0 0.0
        %1848 = vmatpush1.xpose.msra.mxu0 0.0
        %1849 = vmatprep.subr.mxu0 0.0
        %1850 = vmatpush1.xpose.msra.mxu0 0.0
        %1851 = vmatprep.subr.mxu0 0.0
        %1852 = vmatpush1.xpose.msra.mxu0 0.0
        %1853 = vmatprep.subr.mxu0 0.0
        %1854 = vmatpush1.xpose.msra.mxu0 0.0
        %1855 = vmatprep.subr.mxu0 0.0
        %1856 = vmatpush1.xpose.msra.mxu0 0.0
        %1857 = vmatprep.subr.mxu0 0.0
        %1858 = vmatpush1.xpose.msra.mxu0 0.0
        %1859 = vmatprep.subr.mxu0 0.0
        %1860 = vmatpush1.xpose.msra.mxu0 0.0
        %1861 = vmatprep.subr.mxu0 0.0
        %1862 = vmatpush1.xpose.msra.mxu0 0.0
        %1863 = vmatprep.subr.mxu0 0.0
        %1864 = vmatpush1.xpose.msra.mxu0 0.0
        %1865 = vmatprep.subr.mxu0 0.0
        %1866 = vmatpush1.xpose.msra.mxu0 0.0
        %1867 = vmatprep.subr.mxu0 0.0
        %1868 = vmatpush1.xpose.msra.mxu0 0.0
        %1869 = vmatprep.subr.mxu0 0.0
        %1870 = vmatpush1.xpose.msra.mxu0 0.0
        %1871 = vmatprep.subr.mxu0 0.0
        %1872 = vmatpush1.xpose.msra.mxu0 0.0
        %1873 = vmatprep.subr.mxu0 0.0
        %1874 = vmatpush1.xpose.msra.mxu0 0.0
        %1875 = vmatprep.subr.mxu0 0.0
        %1876 = vmatpush1.xpose.msra.mxu0 0.0
        %1877 = vmatprep.subr.mxu0 0.0
        %1878 = vmatpush1.xpose.msra.mxu0 0.0
        %1879 = vmatprep.subr.mxu0 0.0
        %1880 = vmatpush1.xpose.msra.mxu0 0.0
        %1881 = vmatprep.subr.mxu0 0.0
        %1882 = vmatpush1.xpose.msra.mxu0 0.0
        %1883 = vmatprep.subr.mxu0 0.0
        %1884 = vmatpush1.xpose.msra.mxu0 0.0
        %1885 = vmatprep.subr.mxu0 0.0
        %1886 = vmatpush1.xpose.msra.mxu0 0.0
        %1887 = vmatprep.subr.mxu0 0.0
        %1888 = vmatpush1.xpose.msra.mxu0 0.0
        %1889 = vmatprep.mubr.f32.mxu0 0.0
        %1890 = vmatmul.mubr.f32.gmra.mrb[0].mxu0 %v1821
        %v1891 = vpop.f32.mrb[0].mxu0
        %v1892 = vadd.f32 0.0, %v1891
        %v1893 = vpop.f32.mrb[0].mxu0
        %1894 = vdwg.mxu0
        %1895 = vrot.lane.b32.xlu0 %v902, 64
        %v1896 = vpop.permute.xlu0 %1895
        %1897 = vrot.lane.b32.xlu0 %v904, 64
        %v1898 = vpop.permute.xlu0 %1897
        %v1899 = vsel %vm981, %v1896, 0
        %v1901 = vsel %vm981, %v1898, 0
        %1903 = vmatprep.subr.mxu0 0.0
        %1904 = vmatpush1.xpose.msra.mxu0 %v1901
        %1905 = vmatprep.subr.mxu0 0.0
        %1906 = vmatpush1.xpose.msra.mxu0 0.0
        %1907 = vmatprep.subr.mxu0 0.0
        %1908 = vmatpush1.xpose.msra.mxu0 0.0
        %1909 = vmatprep.subr.mxu0 0.0
        %1910 = vmatpush1.xpose.msra.mxu0 0.0
        %1911 = vmatprep.subr.mxu0 0.0
        %1912 = vmatpush1.xpose.msra.mxu0 0.0
        %1913 = vmatprep.subr.mxu0 0.0
        %1914 = vmatpush1.xpose.msra.mxu0 0.0
        %1915 = vmatprep.subr.mxu0 0.0
        %1916 = vmatpush1.xpose.msra.mxu0 0.0
        %1917 = vmatprep.subr.mxu0 0.0
        %1918 = vmatpush1.xpose.msra.mxu0 0.0
        %1919 = vmatprep.subr.mxu0 0.0
        %1920 = vmatpush1.xpose.msra.mxu0 0.0
        %1921 = vmatprep.subr.mxu0 0.0
        %1922 = vmatpush1.xpose.msra.mxu0 0.0
        %1923 = vmatprep.subr.mxu0 0.0
        %1924 = vmatpush1.xpose.msra.mxu0 0.0
        %1925 = vmatprep.subr.mxu0 0.0
        %1926 = vmatpush1.xpose.msra.mxu0 0.0
        %1927 = vmatprep.subr.mxu0 0.0
        %1928 = vmatpush1.xpose.msra.mxu0 0.0
        %1929 = vmatprep.subr.mxu0 0.0
        %1930 = vmatpush1.xpose.msra.mxu0 0.0
        %1931 = vmatprep.subr.mxu0 0.0
        %1932 = vmatpush1.xpose.msra.mxu0 0.0
        %1933 = vmatprep.subr.mxu0 0.0
        %1934 = vmatpush1.xpose.msra.mxu0 0.0
        %1935 = vmatprep.subr.mxu0 0.0
        %1936 = vmatpush1.xpose.msra.mxu0 0.0
        %1937 = vmatprep.subr.mxu0 0.0
        %1938 = vmatpush1.xpose.msra.mxu0 0.0
        %1939 = vmatprep.subr.mxu0 0.0
        %1940 = vmatpush1.xpose.msra.mxu0 0.0
        %1941 = vmatprep.subr.mxu0 0.0
        %1942 = vmatpush1.xpose.msra.mxu0 0.0
        %1943 = vmatprep.subr.mxu0 0.0
        %1944 = vmatpush1.xpose.msra.mxu0 0.0
        %1945 = vmatprep.subr.mxu0 0.0
        %1946 = vmatpush1.xpose.msra.mxu0 0.0
        %1947 = vmatprep.subr.mxu0 0.0
        %1948 = vmatpush1.xpose.msra.mxu0 0.0
        %1949 = vmatprep.subr.mxu0 0.0
        %1950 = vmatpush1.xpose.msra.mxu0 0.0
        %1951 = vmatprep.subr.mxu0 0.0
        %1952 = vmatpush1.xpose.msra.mxu0 0.0
        %1953 = vmatprep.subr.mxu0 0.0
        %1954 = vmatpush1.xpose.msra.mxu0 0.0
        %1955 = vmatprep.subr.mxu0 0.0
        %1956 = vmatpush1.xpose.msra.mxu0 0.0
        %1957 = vmatprep.subr.mxu0 0.0
        %1958 = vmatpush1.xpose.msra.mxu0 0.0
        %1959 = vmatprep.subr.mxu0 0.0
        %1960 = vmatpush1.xpose.msra.mxu0 0.0
        %1961 = vmatprep.subr.mxu0 0.0
        %1962 = vmatpush1.xpose.msra.mxu0 0.0
        %1963 = vmatprep.subr.mxu0 0.0
        %1964 = vmatpush1.xpose.msra.mxu0 0.0
        %1965 = vmatprep.subr.mxu0 0.0
        %1966 = vmatpush1.xpose.msra.mxu0 0.0
        %1967 = vmatprep.mubr.f32.mxu0 0.0
        %1968 = vmatmul.mubr.f32.gmra.mrb[0].mxu0 %v1899
        %v1969 = vpop.f32.mrb[0].mxu0
        %v1970 = vadd.f32 0.0, %v1969
        %v1971 = vpop.f32.mrb[0].mxu0
        %1972 = vdwg.mxu0
        %v1973 = vmul.f32 %v1892, 0.17677669
        %v1974 = vmul.f32 %v1970, 0.17677669
        %v1975 = vadd.f32 %v1973, %v1141
        %v1976 = vadd.f32 %v1974, %v1145
        %v1977 = vsel %vm1150, %v1975, -inf
        %1978 = vmax.xlane.f32.xlu0 %v1977
        %v1979 = vpop.xlane.xlu0 %1978
        %v1980 = vsel %vm1150, %v1976, -inf
        %1981 = vmax.xlane.f32.xlu0 %v1980
        %v1982 = vpop.xlane.xlu0 %1981
        %v1983 = vsub.f32 %v1975, %v1979
        %v1984 = vsub.f32 %v1976, %v1982
        %v1985 = vmul.f32 %v1983, 1.442695
        %v1986 = vpow.pop %v1985
        %v1987 = vmul.f32 %v1984, 1.442695
        %v1988 = vpow.pop %v1987
        %v1989 = vsel %vm1150, %v1986, 0.0
        %1990 = vadd.xlane.f32.xlu0 %v1989
        %v1991 = vpop.xlane.xlu0 %1990
        %v1992 = vsel %vm1150, %v1988, 0.0
        %1993 = vadd.xlane.f32.xlu0 %v1992
        %v1994 = vpop.xlane.xlu0 %1993
        %v1995 = vrcp.pop %v1991
        %v1996 = vrcp.pop %v1994
        %v1997 = vmul.f32 %v1986, %v1995
        %v1998 = vmul.f32 %v1988, %v1996
        %1999 = vrot.lane.b32.xlu0 %v973, 64
        %v2000 = vpop.permute.xlu0 %1999
        %v2003 = vsel %vm1150, %v1997, 0
        %2005 = vmatprep.subr.mxu0 0.0
        %2006 = vmatpush1.msra.mxu0 %v2000
        %2007 = vmatprep.subr.mxu0 0.0
        %2008 = vmatpush1.msra.mxu0 0.0
        %2009 = vmatprep.subr.mxu0 0.0
        %2010 = vmatpush1.msra.mxu0 0.0
        %2011 = vmatprep.subr.mxu0 0.0
        %2012 = vmatpush1.msra.mxu0 0.0
        %2013 = vmatprep.subr.mxu0 0.0
        %2014 = vmatpush1.msra.mxu0 0.0
        %2015 = vmatprep.subr.mxu0 0.0
        %2016 = vmatpush1.msra.mxu0 0.0
        %2017 = vmatprep.subr.mxu0 0.0
        %2018 = vmatpush1.msra.mxu0 0.0
        %2019 = vmatprep.subr.mxu0 0.0
        %2020 = vmatpush1.msra.mxu0 0.0
        %2021 = vmatprep.subr.mxu0 0.0
        %2022 = vmatpush1.msra.mxu0 0.0
        %2023 = vmatprep.subr.mxu0 0.0
        %2024 = vmatpush1.msra.mxu0 0.0
        %2025 = vmatprep.subr.mxu0 0.0
        %2026 = vmatpush1.msra.mxu0 0.0
        %2027 = vmatprep.subr.mxu0 0.0
        %2028 = vmatpush1.msra.mxu0 0.0
        %2029 = vmatprep.subr.mxu0 0.0
        %2030 = vmatpush1.msra.mxu0 0.0
        %2031 = vmatprep.subr.mxu0 0.0
        %2032 = vmatpush1.msra.mxu0 0.0
        %2033 = vmatprep.subr.mxu0 0.0
        %2034 = vmatpush1.msra.mxu0 0.0
        %2035 = vmatprep.subr.mxu0 0.0
        %2036 = vmatpush1.msra.mxu0 0.0
        %2037 = vmatprep.subr.mxu0 0.0
        %2038 = vmatpush1.msra.mxu0 0.0
        %2039 = vmatprep.subr.mxu0 0.0
        %2040 = vmatpush1.msra.mxu0 0.0
        %2041 = vmatprep.subr.mxu0 0.0
        %2042 = vmatpush1.msra.mxu0 0.0
        %2043 = vmatprep.subr.mxu0 0.0
        %2044 = vmatpush1.msra.mxu0 0.0
        %2045 = vmatprep.subr.mxu0 0.0
        %2046 = vmatpush1.msra.mxu0 0.0
        %2047 = vmatprep.subr.mxu0 0.0
        %2048 = vmatpush1.msra.mxu0 0.0
        %2049 = vmatprep.subr.mxu0 0.0
        %2050 = vmatpush1.msra.mxu0 0.0
        %2051 = vmatprep.subr.mxu0 0.0
        %2052 = vmatpush1.msra.mxu0 0.0
        %2053 = vmatprep.subr.mxu0 0.0
        %2054 = vmatpush1.msra.mxu0 0.0
        %2055 = vmatprep.subr.mxu0 0.0
        %2056 = vmatpush1.msra.mxu0 0.0
        %2057 = vmatprep.subr.mxu0 0.0
        %2058 = vmatpush1.msra.mxu0 0.0
        %2059 = vmatprep.subr.mxu0 0.0
        %2060 = vmatpush1.msra.mxu0 0.0
        %2061 = vmatprep.subr.mxu0 0.0
        %2062 = vmatpush1.msra.mxu0 0.0
        %2063 = vmatprep.subr.mxu0 0.0
        %2064 = vmatpush1.msra.mxu0 0.0
        %2065 = vmatprep.subr.mxu0 0.0
        %2066 = vmatpush1.msra.mxu0 0.0
        %2067 = vmatprep.subr.mxu0 0.0
        %2068 = vmatpush1.msra.mxu0 0.0
        %2069 = vmatprep.mubr.f32.mxu0 0.0
        %2070 = vmatmul.mubr.f32.gmra.mrb[0].mxu0 %v2003
        %v2071 = vpop.f32.mrb[0].mxu0
        %v2072 = vadd.f32 0.0, %v2071
        %v2073 = vpop.f32.mrb[0].mxu0
        %2074 = vdwg.mxu0
        %2075 = vrot.lane.b32.xlu0 %v978, 64
        %v2076 = vpop.permute.xlu0 %2075
        %v2079 = vsel %vm1150, %v1998, 0
        %2081 = vmatprep.subr.mxu0 0.0
        %2082 = vmatpush1.msra.mxu0 %v2076
        %2083 = vmatprep.subr.mxu0 0.0
        %2084 = vmatpush1.msra.mxu0 0.0
        %2085 = vmatprep.subr.mxu0 0.0
        %2086 = vmatpush1.msra.mxu0 0.0
        %2087 = vmatprep.subr.mxu0 0.0
        %2088 = vmatpush1.msra.mxu0 0.0
        %2089 = vmatprep.subr.mxu0 0.0
        %2090 = vmatpush1.msra.mxu0 0.0
        %2091 = vmatprep.subr.mxu0 0.0
        %2092 = vmatpush1.msra.mxu0 0.0
        %2093 = vmatprep.subr.mxu0 0.0
        %2094 = vmatpush1.msra.mxu0 0.0
        %2095 = vmatprep.subr.mxu0 0.0
        %2096 = vmatpush1.msra.mxu0 0.0
        %2097 = vmatprep.subr.mxu0 0.0
        %2098 = vmatpush1.msra.mxu0 0.0
        %2099 = vmatprep.subr.mxu0 0.0
        %2100 = vmatpush1.msra.mxu0 0.0
        %2101 = vmatprep.subr.mxu0 0.0
        %2102 = vmatpush1.msra.mxu0 0.0
        %2103 = vmatprep.subr.mxu0 0.0
        %2104 = vmatpush1.msra.mxu0 0.0
        %2105 = vmatprep.subr.mxu0 0.0
        %2106 = vmatpush1.msra.mxu0 0.0
        %2107 = vmatprep.subr.mxu0 0.0
        %2108 = vmatpush1.msra.mxu0 0.0
        %2109 = vmatprep.subr.mxu0 0.0
        %2110 = vmatpush1.msra.mxu0 0.0
        %2111 = vmatprep.subr.mxu0 0.0
        %2112 = vmatpush1.msra.mxu0 0.0
        %2113 = vmatprep.subr.mxu0 0.0
        %2114 = vmatpush1.msra.mxu0 0.0
        %2115 = vmatprep.subr.mxu0 0.0
        %2116 = vmatpush1.msra.mxu0 0.0
        %2117 = vmatprep.subr.mxu0 0.0
        %2118 = vmatpush1.msra.mxu0 0.0
        %2119 = vmatprep.subr.mxu0 0.0
        %2120 = vmatpush1.msra.mxu0 0.0
        %2121 = vmatprep.subr.mxu0 0.0
        %2122 = vmatpush1.msra.mxu0 0.0
        %2123 = vmatprep.subr.mxu0 0.0
        %2124 = vmatpush1.msra.mxu0 0.0
        %2125 = vmatprep.subr.mxu0 0.0
        %2126 = vmatpush1.msra.mxu0 0.0
        %2127 = vmatprep.subr.mxu0 0.0
        %2128 = vmatpush1.msra.mxu0 0.0
        %2129 = vmatprep.subr.mxu0 0.0
        %2130 = vmatpush1.msra.mxu0 0.0
        %2131 = vmatprep.subr.mxu0 0.0
        %2132 = vmatpush1.msra.mxu0 0.0
        %2133 = vmatprep.subr.mxu0 0.0
        %2134 = vmatpush1.msra.mxu0 0.0
        %2135 = vmatprep.subr.mxu0 0.0
        %2136 = vmatpush1.msra.mxu0 0.0
        %2137 = vmatprep.subr.mxu0 0.0
        %2138 = vmatpush1.msra.mxu0 0.0
        %2139 = vmatprep.subr.mxu0 0.0
        %2140 = vmatpush1.msra.mxu0 0.0
        %2141 = vmatprep.subr.mxu0 0.0
        %2142 = vmatpush1.msra.mxu0 0.0
        %2143 = vmatprep.subr.mxu0 0.0
        %2144 = vmatpush1.msra.mxu0 0.0
        %2145 = vmatprep.mubr.f32.mxu0 0.0
        %2146 = vmatmul.mubr.f32.gmra.mrb[0].mxu0 %v2079
        %v2147 = vpop.f32.mrb[0].mxu0
        %v2148 = vadd.f32 0.0, %v2147
        %v2149 = vpop.f32.mrb[0].mxu0
        %2150 = vdwg.mxu0
        %v2152 = vsel %vm981, %v2072, 0
        %v2155 = vsel %vm981, %v2148, 0
        %2157 = vmatprep.subr.mxu0 0.0
        %2158 = vmatpush1.msra.mxu0 %v512
        %2159 = vmatprep.subr.mxu0 0.0
        %2160 = vmatpush1.msra.mxu0 %v516
        %2161 = vmatprep.subr.mxu0 0.0
        %2162 = vmatpush1.msra.mxu0 %v520
        %2163 = vmatprep.subr.mxu0 0.0
        %2164 = vmatpush1.msra.mxu0 %v524
        %2165 = vmatprep.subr.mxu0 0.0
        %2166 = vmatpush1.msra.mxu0 0.0
        %2167 = vmatprep.subr.mxu0 0.0
        %2168 = vmatpush1.msra.mxu0 0.0
        %2169 = vmatprep.subr.mxu0 0.0
        %2170 = vmatpush1.msra.mxu0 0.0
        %2171 = vmatprep.subr.mxu0 0.0
        %2172 = vmatpush1.msra.mxu0 0.0
        %2173 = vmatprep.subr.mxu0 0.0
        %2174 = vmatpush1.msra.mxu0 0.0
        %2175 = vmatprep.subr.mxu0 0.0
        %2176 = vmatpush1.msra.mxu0 0.0
        %2177 = vmatprep.subr.mxu0 0.0
        %2178 = vmatpush1.msra.mxu0 0.0
        %2179 = vmatprep.subr.mxu0 0.0
        %2180 = vmatpush1.msra.mxu0 0.0
        %2181 = vmatprep.subr.mxu0 0.0
        %2182 = vmatpush1.msra.mxu0 0.0
        %2183 = vmatprep.subr.mxu0 0.0
        %2184 = vmatpush1.msra.mxu0 0.0
        %2185 = vmatprep.subr.mxu0 0.0
        %2186 = vmatpush1.msra.mxu0 0.0
        %2187 = vmatprep.subr.mxu0 0.0
        %2188 = vmatpush1.msra.mxu0 0.0
        %2189 = vmatprep.subr.mxu0 0.0
        %2190 = vmatpush1.msra.mxu0 0.0
        %2191 = vmatprep.subr.mxu0 0.0
        %2192 = vmatpush1.msra.mxu0 0.0
        %2193 = vmatprep.subr.mxu0 0.0
        %2194 = vmatpush1.msra.mxu0 0.0
        %2195 = vmatprep.subr.mxu0 0.0
        %2196 = vmatpush1.msra.mxu0 0.0
        %2197 = vmatprep.subr.mxu0 0.0
        %2198 = vmatpush1.msra.mxu0 0.0
        %2199 = vmatprep.subr.mxu0 0.0
        %2200 = vmatpush1.msra.mxu0 0.0
        %2201 = vmatprep.subr.mxu0 0.0
        %2202 = vmatpush1.msra.mxu0 0.0
        %2203 = vmatprep.subr.mxu0 0.0
        %2204 = vmatpush1.msra.mxu0 0.0
        %2205 = vmatprep.subr.mxu0 0.0
        %2206 = vmatpush1.msra.mxu0 0.0
        %2207 = vmatprep.subr.mxu0 0.0
        %2208 = vmatpush1.msra.mxu0 0.0
        %2209 = vmatprep.subr.mxu0 0.0
        %2210 = vmatpush1.msra.mxu0 0.0
        %2211 = vmatprep.subr.mxu0 0.0
        %2212 = vmatpush1.msra.mxu0 0.0
        %2213 = vmatprep.subr.mxu0 0.0
        %2214 = vmatpush1.msra.mxu0 0.0
        %2215 = vmatprep.subr.mxu0 0.0
        %2216 = vmatpush1.msra.mxu0 0.0
        %2217 = vmatprep.subr.mxu0 0.0
        %2218 = vmatpush1.msra.mxu0 0.0
        %2219 = vmatprep.subr.mxu0 0.0
        %2220 = vmatpush1.msra.mxu0 0.0
        %2221 = vmatprep.mubr.f32.mxu0 0.0
        %2222 = vmatmul.mubr.f32.gmra.mrb[0].mxu0 %v2152
        %v2223 = vpop.f32.mrb[0].mxu0
        %v2224 = vadd.f32 0.0, %v2223
        %v2225 = vpop.f32.mrb[0].mxu0
        %2226 = vmatprep.mubr.f32.mxu0 0.0
        %2227 = vmatmul.mubr.f32.gmra.mrb[0].mxu0 %v2155
        %v2228 = vpop.f32.mrb[0].mxu0
        %v2229 = vadd.f32 0.0, %v2228
        %v2230 = vpop.f32.mrb[0].mxu0
        %2231 = vdwg.mxu0
        %v2232 = vadd.f32 %v1809, %v2224
        %v2233 = vadd.f32 %v1814, %v2229
        %2234 = vrot.lane.b32.xlu0 %v896, 32
        %v2235 = vpop.permute.xlu0 %2234
        %2236 = vrot.lane.b32.xlu0 %v898, 32
        %v2237 = vpop.permute.xlu0 %2236
        %v2238 = vsel %vm981, %v2235, 0
        %v2240 = vsel %vm981, %v2237, 0
        %2242 = vmatprep.subr.mxu0 0.0
        %2243 = vmatpush1.xpose.msra.mxu0 %v2240
        %2244 = vmatprep.subr.mxu0 0.0
        %2245 = vmatpush1.xpose.msra.mxu0 0.0
        %2246 = vmatprep.subr.mxu0 0.0
        %2247 = vmatpush1.xpose.msra.mxu0 0.0
        %2248 = vmatprep.subr.mxu0 0.0
        %2249 = vmatpush1.xpose.msra.mxu0 0.0
        %2250 = vmatprep.subr.mxu0 0.0
        %2251 = vmatpush1.xpose.msra.mxu0 0.0
        %2252 = vmatprep.subr.mxu0 0.0
        %2253 = vmatpush1.xpose.msra.mxu0 0.0
        %2254 = vmatprep.subr.mxu0 0.0
        %2255 = vmatpush1.xpose.msra.mxu0 0.0
        %2256 = vmatprep.subr.mxu0 0.0
        %2257 = vmatpush1.xpose.msra.mxu0 0.0
        %2258 = vmatprep.subr.mxu0 0.0
        %2259 = vmatpush1.xpose.msra.mxu0 0.0
        %2260 = vmatprep.subr.mxu0 0.0
        %2261 = vmatpush1.xpose.msra.mxu0 0.0
        %2262 = vmatprep.subr.mxu0 0.0
        %2263 = vmatpush1.xpose.msra.mxu0 0.0
        %2264 = vmatprep.subr.mxu0 0.0
        %2265 = vmatpush1.xpose.msra.mxu0 0.0
        %2266 = vmatprep.subr.mxu0 0.0
        %2267 = vmatpush1.xpose.msra.mxu0 0.0
        %2268 = vmatprep.subr.mxu0 0.0
        %2269 = vmatpush1.xpose.msra.mxu0 0.0
        %2270 = vmatprep.subr.mxu0 0.0
        %2271 = vmatpush1.xpose.msra.mxu0 0.0
        %2272 = vmatprep.subr.mxu0 0.0
        %2273 = vmatpush1.xpose.msra.mxu0 0.0
        %2274 = vmatprep.subr.mxu0 0.0
        %2275 = vmatpush1.xpose.msra.mxu0 0.0
        %2276 = vmatprep.subr.mxu0 0.0
        %2277 = vmatpush1.xpose.msra.mxu0 0.0
        %2278 = vmatprep.subr.mxu0 0.0
        %2279 = vmatpush1.xpose.msra.mxu0 0.0
        %2280 = vmatprep.subr.mxu0 0.0
        %2281 = vmatpush1.xpose.msra.mxu0 0.0
        %2282 = vmatprep.subr.mxu0 0.0
        %2283 = vmatpush1.xpose.msra.mxu0 0.0
        %2284 = vmatprep.subr.mxu0 0.0
        %2285 = vmatpush1.xpose.msra.mxu0 0.0
        %2286 = vmatprep.subr.mxu0 0.0
        %2287 = vmatpush1.xpose.msra.mxu0 0.0
        %2288 = vmatprep.subr.mxu0 0.0
        %2289 = vmatpush1.xpose.msra.mxu0 0.0
        %2290 = vmatprep.subr.mxu0 0.0
        %2291 = vmatpush1.xpose.msra.mxu0 0.0
        %2292 = vmatprep.subr.mxu0 0.0
        %2293 = vmatpush1.xpose.msra.mxu0 0.0
        %2294 = vmatprep.subr.mxu0 0.0
        %2295 = vmatpush1.xpose.msra.mxu0 0.0
        %2296 = vmatprep.subr.mxu0 0.0
        %2297 = vmatpush1.xpose.msra.mxu0 0.0
        %2298 = vmatprep.subr.mxu0 0.0
        %2299 = vmatpush1.xpose.msra.mxu0 0.0
        %2300 = vmatprep.subr.mxu0 0.0
        %2301 = vmatpush1.xpose.msra.mxu0 0.0
        %2302 = vmatprep.subr.mxu0 0.0
        %2303 = vmatpush1.xpose.msra.mxu0 0.0
        %2304 = vmatprep.subr.mxu0 0.0
        %2305 = vmatpush1.xpose.msra.mxu0 0.0
        %2306 = vmatprep.mubr.f32.mxu0 0.0
        %2307 = vmatmul.mubr.f32.gmra.mrb[0].mxu0 %v2238
        %v2308 = vpop.f32.mrb[0].mxu0
        %v2309 = vadd.f32 0.0, %v2308
        %v2310 = vpop.f32.mrb[0].mxu0
        %2311 = vdwg.mxu0
        %2312 = vrot.lane.b32.xlu0 %v902, 32
        %v2313 = vpop.permute.xlu0 %2312
        %2314 = vrot.lane.b32.xlu0 %v904, 32
        %v2315 = vpop.permute.xlu0 %2314
        %v2316 = vsel %vm981, %v2313, 0
        %v2318 = vsel %vm981, %v2315, 0
        %2320 = vmatprep.subr.mxu0 0.0
        %2321 = vmatpush1.xpose.msra.mxu0 %v2318
        %2322 = vmatprep.subr.mxu0 0.0
        %2323 = vmatpush1.xpose.msra.mxu0 0.0
        %2324 = vmatprep.subr.mxu0 0.0
        %2325 = vmatpush1.xpose.msra.mxu0 0.0
        %2326 = vmatprep.subr.mxu0 0.0
        %2327 = vmatpush1.xpose.msra.mxu0 0.0
        %2328 = vmatprep.subr.mxu0 0.0
        %2329 = vmatpush1.xpose.msra.mxu0 0.0
        %2330 = vmatprep.subr.mxu0 0.0
        %2331 = vmatpush1.xpose.msra.mxu0 0.0
        %2332 = vmatprep.subr.mxu0 0.0
        %2333 = vmatpush1.xpose.msra.mxu0 0.0
        %2334 = vmatprep.subr.mxu0 0.0
        %2335 = vmatpush1.xpose.msra.mxu0 0.0
        %2336 = vmatprep.subr.mxu0 0.0
        %2337 = vmatpush1.xpose.msra.mxu0 0.0
        %2338 = vmatprep.subr.mxu0 0.0
        %2339 = vmatpush1.xpose.msra.mxu0 0.0
        %2340 = vmatprep.subr.mxu0 0.0
        %2341 = vmatpush1.xpose.msra.mxu0 0.0
        %2342 = vmatprep.subr.mxu0 0.0
        %2343 = vmatpush1.xpose.msra.mxu0 0.0
        %2344 = vmatprep.subr.mxu0 0.0
        %2345 = vmatpush1.xpose.msra.mxu0 0.0
        %2346 = vmatprep.subr.mxu0 0.0
        %2347 = vmatpush1.xpose.msra.mxu0 0.0
        %2348 = vmatprep.subr.mxu0 0.0
        %2349 = vmatpush1.xpose.msra.mxu0 0.0
        %2350 = vmatprep.subr.mxu0 0.0
        %2351 = vmatpush1.xpose.msra.mxu0 0.0
        %2352 = vmatprep.subr.mxu0 0.0
        %2353 = vmatpush1.xpose.msra.mxu0 0.0
        %2354 = vmatprep.subr.mxu0 0.0
        %2355 = vmatpush1.xpose.msra.mxu0 0.0
        %2356 = vmatprep.subr.mxu0 0.0
        %2357 = vmatpush1.xpose.msra.mxu0 0.0
        %2358 = vmatprep.subr.mxu0 0.0
        %2359 = vmatpush1.xpose.msra.mxu0 0.0
        %2360 = vmatprep.subr.mxu0 0.0
        %2361 = vmatpush1.xpose.msra.mxu0 0.0
        %2362 = vmatprep.subr.mxu0 0.0
        %2363 = vmatpush1.xpose.msra.mxu0 0.0
        %2364 = vmatprep.subr.mxu0 0.0
        %2365 = vmatpush1.xpose.msra.mxu0 0.0
        %2366 = vmatprep.subr.mxu0 0.0
        %2367 = vmatpush1.xpose.msra.mxu0 0.0
        %2368 = vmatprep.subr.mxu0 0.0
        %2369 = vmatpush1.xpose.msra.mxu0 0.0
        %2370 = vmatprep.subr.mxu0 0.0
        %2371 = vmatpush1.xpose.msra.mxu0 0.0
        %2372 = vmatprep.subr.mxu0 0.0
        %2373 = vmatpush1.xpose.msra.mxu0 0.0
        %2374 = vmatprep.subr.mxu0 0.0
        %2375 = vmatpush1.xpose.msra.mxu0 0.0
        %2376 = vmatprep.subr.mxu0 0.0
        %2377 = vmatpush1.xpose.msra.mxu0 0.0
        %2378 = vmatprep.subr.mxu0 0.0
        %2379 = vmatpush1.xpose.msra.mxu0 0.0
        %2380 = vmatprep.subr.mxu0 0.0
        %2381 = vmatpush1.xpose.msra.mxu0 0.0
        %2382 = vmatprep.subr.mxu0 0.0
        %2383 = vmatpush1.xpose.msra.mxu0 0.0
        %2384 = vmatprep.mubr.f32.mxu0 0.0
        %2385 = vmatmul.mubr.f32.gmra.mrb[0].mxu0 %v2316
        %v2386 = vpop.f32.mrb[0].mxu0
        %v2387 = vadd.f32 0.0, %v2386
        %v2388 = vpop.f32.mrb[0].mxu0
        %2389 = vdwg.mxu0
        %v2390 = vmul.f32 %v2309, 0.17677669
        %v2391 = vmul.f32 %v2387, 0.17677669
        %v2392 = vadd.f32 %v2390, %v1141
        %v2393 = vadd.f32 %v2391, %v1145
        %v2394 = vsel %vm1150, %v2392, -inf
        %2395 = vmax.xlane.f32.xlu0 %v2394
        %v2396 = vpop.xlane.xlu0 %2395
        %v2397 = vsel %vm1150, %v2393, -inf
        %2398 = vmax.xlane.f32.xlu0 %v2397
        %v2399 = vpop.xlane.xlu0 %2398
        %v2400 = vsub.f32 %v2392, %v2396
        %v2401 = vsub.f32 %v2393, %v2399
        %v2402 = vmul.f32 %v2400, 1.442695
        %v2403 = vpow.pop %v2402
        %v2404 = vmul.f32 %v2401, 1.442695
        %v2405 = vpow.pop %v2404
        %v2406 = vsel %vm1150, %v2403, 0.0
        %2407 = vadd.xlane.f32.xlu0 %v2406
        %v2408 = vpop.xlane.xlu0 %2407
        %v2409 = vsel %vm1150, %v2405, 0.0
        %2410 = vadd.xlane.f32.xlu0 %v2409
        %v2411 = vpop.xlane.xlu0 %2410
        %v2412 = vrcp.pop %v2408
        %v2413 = vrcp.pop %v2411
        %v2414 = vmul.f32 %v2403, %v2412
        %v2415 = vmul.f32 %v2405, %v2413
        %2416 = vrot.lane.b32.xlu0 %v973, 32
        %v2417 = vpop.permute.xlu0 %2416
        %v2420 = vsel %vm1150, %v2414, 0
        %2422 = vmatprep.subr.mxu0 0.0
        %2423 = vmatpush1.msra.mxu0 %v2417
        %2424 = vmatprep.subr.mxu0 0.0
        %2425 = vmatpush1.msra.mxu0 0.0
        %2426 = vmatprep.subr.mxu0 0.0
        %2427 = vmatpush1.msra.mxu0 0.0
        %2428 = vmatprep.subr.mxu0 0.0
        %2429 = vmatpush1.msra.mxu0 0.0
        %2430 = vmatprep.subr.mxu0 0.0
        %2431 = vmatpush1.msra.mxu0 0.0
        %2432 = vmatprep.subr.mxu0 0.0
        %2433 = vmatpush1.msra.mxu0 0.0
        %2434 = vmatprep.subr.mxu0 0.0
        %2435 = vmatpush1.msra.mxu0 0.0
        %2436 = vmatprep.subr.mxu0 0.0
        %2437 = vmatpush1.msra.mxu0 0.0
        %2438 = vmatprep.subr.mxu0 0.0
        %2439 = vmatpush1.msra.mxu0 0.0
        %2440 = vmatprep.subr.mxu0 0.0
        %2441 = vmatpush1.msra.mxu0 0.0
        %2442 = vmatprep.subr.mxu0 0.0
        %2443 = vmatpush1.msra.mxu0 0.0
        %2444 = vmatprep.subr.mxu0 0.0
        %2445 = vmatpush1.msra.mxu0 0.0
        %2446 = vmatprep.subr.mxu0 0.0
        %2447 = vmatpush1.msra.mxu0 0.0
        %2448 = vmatprep.subr.mxu0 0.0
        %2449 = vmatpush1.msra.mxu0 0.0
        %2450 = vmatprep.subr.mxu0 0.0
        %2451 = vmatpush1.msra.mxu0 0.0
        %2452 = vmatprep.subr.mxu0 0.0
        %2453 = vmatpush1.msra.mxu0 0.0
        %2454 = vmatprep.subr.mxu0 0.0
        %2455 = vmatpush1.msra.mxu0 0.0
        %2456 = vmatprep.subr.mxu0 0.0
        %2457 = vmatpush1.msra.mxu0 0.0
        %2458 = vmatprep.subr.mxu0 0.0
        %2459 = vmatpush1.msra.mxu0 0.0
        %2460 = vmatprep.subr.mxu0 0.0
        %2461 = vmatpush1.msra.mxu0 0.0
        %2462 = vmatprep.subr.mxu0 0.0
        %2463 = vmatpush1.msra.mxu0 0.0
        %2464 = vmatprep.subr.mxu0 0.0
        %2465 = vmatpush1.msra.mxu0 0.0
        %2466 = vmatprep.subr.mxu0 0.0
        %2467 = vmatpush1.msra.mxu0 0.0
        %2468 = vmatprep.subr.mxu0 0.0
        %2469 = vmatpush1.msra.mxu0 0.0
        %2470 = vmatprep.subr.mxu0 0.0
        %2471 = vmatpush1.msra.mxu0 0.0
        %2472 = vmatprep.subr.mxu0 0.0
        %2473 = vmatpush1.msra.mxu0 0.0
        %2474 = vmatprep.subr.mxu0 0.0
        %2475 = vmatpush1.msra.mxu0 0.0
        %2476 = vmatprep.subr.mxu0 0.0
        %2477 = vmatpush1.msra.mxu0 0.0
        %2478 = vmatprep.subr.mxu0 0.0
        %2479 = vmatpush1.msra.mxu0 0.0
        %2480 = vmatprep.subr.mxu0 0.0
        %2481 = vmatpush1.msra.mxu0 0.0
        %2482 = vmatprep.subr.mxu0 0.0
        %2483 = vmatpush1.msra.mxu0 0.0
        %2484 = vmatprep.subr.mxu0 0.0
        %2485 = vmatpush1.msra.mxu0 0.0
        %2486 = vmatprep.mubr.f32.mxu0 0.0
        %2487 = vmatmul.mubr.f32.gmra.mrb[0].mxu0 %v2420
        %v2488 = vpop.f32.mrb[0].mxu0
        %v2489 = vadd.f32 0.0, %v2488
        %v2490 = vpop.f32.mrb[0].mxu0
        %2491 = vdwg.mxu0
        %2492 = vrot.lane.b32.xlu0 %v978, 32
        %v2493 = vpop.permute.xlu0 %2492
        %v2496 = vsel %vm1150, %v2415, 0
        %2498 = vmatprep.subr.mxu0 0.0
        %2499 = vmatpush1.msra.mxu0 %v2493
        %2500 = vmatprep.subr.mxu0 0.0
        %2501 = vmatpush1.msra.mxu0 0.0
        %2502 = vmatprep.subr.mxu0 0.0
        %2503 = vmatpush1.msra.mxu0 0.0
        %2504 = vmatprep.subr.mxu0 0.0
        %2505 = vmatpush1.msra.mxu0 0.0
        %2506 = vmatprep.subr.mxu0 0.0
        %2507 = vmatpush1.msra.mxu0 0.0
        %2508 = vmatprep.subr.mxu0 0.0
        %2509 = vmatpush1.msra.mxu0 0.0
        %2510 = vmatprep.subr.mxu0 0.0
        %2511 = vmatpush1.msra.mxu0 0.0
        %2512 = vmatprep.subr.mxu0 0.0
        %2513 = vmatpush1.msra.mxu0 0.0
        %2514 = vmatprep.subr.mxu0 0.0
        %2515 = vmatpush1.msra.mxu0 0.0
        %2516 = vmatprep.subr.mxu0 0.0
        %2517 = vmatpush1.msra.mxu0 0.0
        %2518 = vmatprep.subr.mxu0 0.0
        %2519 = vmatpush1.msra.mxu0 0.0
        %2520 = vmatprep.subr.mxu0 0.0
        %2521 = vmatpush1.msra.mxu0 0.0
        %2522 = vmatprep.subr.mxu0 0.0
        %2523 = vmatpush1.msra.mxu0 0.0
        %2524 = vmatprep.subr.mxu0 0.0
        %2525 = vmatpush1.msra.mxu0 0.0
        %2526 = vmatprep.subr.mxu0 0.0
        %2527 = vmatpush1.msra.mxu0 0.0
        %2528 = vmatprep.subr.mxu0 0.0
        %2529 = vmatpush1.msra.mxu0 0.0
        %2530 = vmatprep.subr.mxu0 0.0
        %2531 = vmatpush1.msra.mxu0 0.0
        %2532 = vmatprep.subr.mxu0 0.0
        %2533 = vmatpush1.msra.mxu0 0.0
        %2534 = vmatprep.subr.mxu0 0.0
        %2535 = vmatpush1.msra.mxu0 0.0
        %2536 = vmatprep.subr.mxu0 0.0
        %2537 = vmatpush1.msra.mxu0 0.0
        %2538 = vmatprep.subr.mxu0 0.0
        %2539 = vmatpush1.msra.mxu0 0.0
        %2540 = vmatprep.subr.mxu0 0.0
        %2541 = vmatpush1.msra.mxu0 0.0
        %2542 = vmatprep.subr.mxu0 0.0
        %2543 = vmatpush1.msra.mxu0 0.0
        %2544 = vmatprep.subr.mxu0 0.0
        %2545 = vmatpush1.msra.mxu0 0.0
        %2546 = vmatprep.subr.mxu0 0.0
        %2547 = vmatpush1.msra.mxu0 0.0
        %2548 = vmatprep.subr.mxu0 0.0
        %2549 = vmatpush1.msra.mxu0 0.0
        %2550 = vmatprep.subr.mxu0 0.0
        %2551 = vmatpush1.msra.mxu0 0.0
        %2552 = vmatprep.subr.mxu0 0.0
        %2553 = vmatpush1.msra.mxu0 0.0
        %2554 = vmatprep.subr.mxu0 0.0
        %2555 = vmatpush1.msra.mxu0 0.0
        %2556 = vmatprep.subr.mxu0 0.0
        %2557 = vmatpush1.msra.mxu0 0.0
        %2558 = vmatprep.subr.mxu0 0.0
        %2559 = vmatpush1.msra.mxu0 0.0
        %2560 = vmatprep.subr.mxu0 0.0
        %2561 = vmatpush1.msra.mxu0 0.0
        %2562 = vmatprep.mubr.f32.mxu0 0.0
        %2563 = vmatmul.mubr.f32.gmra.mrb[0].mxu0 %v2496
        %v2564 = vpop.f32.mrb[0].mxu0
        %v2565 = vadd.f32 0.0, %v2564
        %v2566 = vpop.f32.mrb[0].mxu0
        %2567 = vdwg.mxu0
        %v2569 = vsel %vm981, %v2489, 0
        %v2572 = vsel %vm981, %v2565, 0
        %2574 = vmatprep.subr.mxu0 0.0
        %2575 = vmatpush1.msra.mxu0 %v528
        %2576 = vmatprep.subr.mxu0 0.0
        %2577 = vmatpush1.msra.mxu0 %v532
        %2578 = vmatprep.subr.mxu0 0.0
        %2579 = vmatpush1.msra.mxu0 %v536
        %2580 = vmatprep.subr.mxu0 0.0
        %2581 = vmatpush1.msra.mxu0 %v540
        %2582 = vmatprep.subr.mxu0 0.0
        %2583 = vmatpush1.msra.mxu0 0.0
        %2584 = vmatprep.subr.mxu0 0.0
        %2585 = vmatpush1.msra.mxu0 0.0
        %2586 = vmatprep.subr.mxu0 0.0
        %2587 = vmatpush1.msra.mxu0 0.0
        %2588 = vmatprep.subr.mxu0 0.0
        %2589 = vmatpush1.msra.mxu0 0.0
        %2590 = vmatprep.subr.mxu0 0.0
        %2591 = vmatpush1.msra.mxu0 0.0
        %2592 = vmatprep.subr.mxu0 0.0
        %2593 = vmatpush1.msra.mxu0 0.0
        %2594 = vmatprep.subr.mxu0 0.0
        %2595 = vmatpush1.msra.mxu0 0.0
        %2596 = vmatprep.subr.mxu0 0.0
        %2597 = vmatpush1.msra.mxu0 0.0
        %2598 = vmatprep.subr.mxu0 0.0
        %2599 = vmatpush1.msra.mxu0 0.0
        %2600 = vmatprep.subr.mxu0 0.0
        %2601 = vmatpush1.msra.mxu0 0.0
        %2602 = vmatprep.subr.mxu0 0.0
        %2603 = vmatpush1.msra.mxu0 0.0
        %2604 = vmatprep.subr.mxu0 0.0
        %2605 = vmatpush1.msra.mxu0 0.0
        %2606 = vmatprep.subr.mxu0 0.0
        %2607 = vmatpush1.msra.mxu0 0.0
        %2608 = vmatprep.subr.mxu0 0.0
        %2609 = vmatpush1.msra.mxu0 0.0
        %2610 = vmatprep.subr.mxu0 0.0
        %2611 = vmatpush1.msra.mxu0 0.0
        %2612 = vmatprep.subr.mxu0 0.0
        %2613 = vmatpush1.msra.mxu0 0.0
        %2614 = vmatprep.subr.mxu0 0.0
        %2615 = vmatpush1.msra.mxu0 0.0
        %2616 = vmatprep.subr.mxu0 0.0
        %2617 = vmatpush1.msra.mxu0 0.0
        %2618 = vmatprep.subr.mxu0 0.0
        %2619 = vmatpush1.msra.mxu0 0.0
        %2620 = vmatprep.subr.mxu0 0.0
        %2621 = vmatpush1.msra.mxu0 0.0
        %2622 = vmatprep.subr.mxu0 0.0
        %2623 = vmatpush1.msra.mxu0 0.0
        %2624 = vmatprep.subr.mxu0 0.0
        %2625 = vmatpush1.msra.mxu0 0.0
        %2626 = vmatprep.subr.mxu0 0.0
        %2627 = vmatpush1.msra.mxu0 0.0
        %2628 = vmatprep.subr.mxu0 0.0
        %2629 = vmatpush1.msra.mxu0 0.0
        %2630 = vmatprep.subr.mxu0 0.0
        %2631 = vmatpush1.msra.mxu0 0.0
        %2632 = vmatprep.subr.mxu0 0.0
        %2633 = vmatpush1.msra.mxu0 0.0
        %2634 = vmatprep.subr.mxu0 0.0
        %2635 = vmatpush1.msra.mxu0 0.0
        %2636 = vmatprep.subr.mxu0 0.0
        %2637 = vmatpush1.msra.mxu0 0.0
        %2638 = vmatprep.mubr.f32.mxu0 0.0
        %2639 = vmatmul.mubr.f32.gmra.mrb[0].mxu0 %v2569
        %v2640 = vpop.f32.mrb[0].mxu0
        %v2641 = vadd.f32 0.0, %v2640
        %v2642 = vpop.f32.mrb[0].mxu0
        %2643 = vmatprep.mubr.f32.mxu0 0.0
        %2644 = vmatmul.mubr.f32.gmra.mrb[0].mxu0 %v2572
        %v2645 = vpop.f32.mrb[0].mxu0
        %v2646 = vadd.f32 0.0, %v2645
        %v2647 = vpop.f32.mrb[0].mxu0
        %2648 = vdwg.mxu0
        %v2649 = vadd.f32 %v2232, %v2641
        %v2650 = vadd.f32 %v2233, %v2646
        %v2651 = vadd.f32 %v439, %v2649
        %v2652 = vadd.f32 %v440, %v2650
        %v2653 = vlaneseq
        %v2654 = vshrl.u32 %v2653, 7
        %v2655 = vsub.s32 4, %v2654
        %v2656 = vrot.slane %v441, %v2655
        %v2657 = vadd.f32 %v2651, %v2656
        %v2658 = vadd.f32 %v2652, %v2656
        %2659 = vadd.xlane.f32.xlu0 %v2657
        %v2660 = vpop.xlane.xlu0 %2659
        %2661 = vadd.xlane.f32.xlu0 %v2658
        %v2662 = vpop.xlane.xlu0 %2661
        %v2663 = vmul.f32 %v2660, %v771
        %v2664 = vmul.f32 %v2662, %v771
        %v2665 = vsub.f32 %v2657, %v2663
        %v2666 = vsub.f32 %v2658, %v2664
        %v2667 = vmul.f32 %v2665, %v2665
        %v2668 = vmul.f32 %v2666, %v2666
        %2669 = vadd.xlane.f32.xlu0 %v2667
        %v2670 = vpop.xlane.xlu0 %2669
        %2671 = vadd.xlane.f32.xlu0 %v2668
        %v2672 = vpop.xlane.xlu0 %2671
        %v2673 = vmul.f32 %v2670, %v782
        %v2674 = vmul.f32 %v2672, %v782
        %v2675 = vlaneseq
        %v2676 = vshrl.u32 %v2675, 7
        %v2677 = vsub.s32 5, %v2676
        %v2678 = vrot.slane %v441, %v2677
        %v2679 = vmul.f32 %v2678, %v2665
        %v2680 = vmul.f32 %v2678, %v2666
        %v2681 = vrsqrt.pop %v2673
        %v2682 = vmul.f32 %v2673, %v2681
        %vm2683 = vcmp.eq.f32.partialorder %v2673, inf
        %v2684 = vsel %vm2683, %v2673, %v2682
        %vm2685 = vcmp.eq.f32.partialorder %v2673, 0.0
        %v2686 = vand.u32 %v2673, 2147483648
        %v2687 = vsel %vm2685, %v2686, %v2684
        %v2688 = vrsqrt.pop %v2674
        %v2689 = vmul.f32 %v2674, %v2688
        %vm2690 = vcmp.eq.f32.partialorder %v2674, inf
        %v2691 = vsel %vm2690, %v2674, %v2689
        %vm2692 = vcmp.eq.f32.partialorder %v2674, 0.0
        %v2693 = vand.u32 %v2674, 2147483648
        %v2694 = vsel %vm2692, %v2693, %v2691
        %v2695 = vadd.f32 %v2687, 1e-06
        %v2696 = vadd.f32 %v2694, 1e-06
        %v2697 = vrcp.pop %v2695
        %v2698 = vmul.f32 %v2679, %v2697
        %v2699 = vrcp.pop %v2696
        %v2700 = vmul.f32 %v2680, %v2699
        %v2701 = vlaneseq
        %v2702 = vshrl.u32 %v2701, 7
        %v2703 = vsub.s32 6, %v2702
        %v2704 = vrot.slane %v441, %v2703
        %v2705 = vadd.f32 %v2698, %v2704
        %v2706 = vadd.f32 %v2700, %v2704
        %v2707 = vlaneseq
        %v2708 = vshrl.u32 %v2707, 7
        %v2709 = vsub.s32 1, %v2708
        %v2710 = vrot.slane %v441, %v2709
        %v2711 = vlaneseq
        %v2712 = vshrl.u32 %v2711, 7
        %v2713 = vsub.s32 1, %v2712
        %v2714 = vrot.slane %v442, %v2713
        %v2715 = vlaneseq
        %v2716 = vshrl.u32 %v2715, 7
        %v2717 = vsub.s32 1, %v2716
        %v2718 = vrot.slane %v443, %v2717
        %v2719 = vlaneseq
        %v2720 = vshrl.u32 %v2719, 7
        %v2721 = vsub.s32 1, %v2720
        %v2722 = vrot.slane %v444, %v2721
        %2723 = vmatprep.subr.mxu0 %v574
        %2724 = vmatpush1.msra.mxu0 %v573
        %2725 = vmatprep.subr.mxu0 %v578
        %2726 = vmatpush1.msra.mxu0 %v577
        %2727 = vmatprep.subr.mxu0 %v582
        %2728 = vmatpush1.msra.mxu0 %v581
        %2729 = vmatprep.subr.mxu0 %v586
        %2730 = vmatpush1.msra.mxu0 %v585
        %2731 = vmatprep.subr.mxu0 %v590
        %2732 = vmatpush1.msra.mxu0 %v589
        %2733 = vmatprep.subr.mxu0 %v594
        %2734 = vmatpush1.msra.mxu0 %v593
        %2735 = vmatprep.subr.mxu0 %v598
        %2736 = vmatpush1.msra.mxu0 %v597
        %2737 = vmatprep.subr.mxu0 %v602
        %2738 = vmatpush1.msra.mxu0 %v601
        %2739 = vmatprep.subr.mxu0 %v606
        %2740 = vmatpush1.msra.mxu0 %v605
        %2741 = vmatprep.subr.mxu0 %v610
        %2742 = vmatpush1.msra.mxu0 %v609
        %2743 = vmatprep.subr.mxu0 %v614
        %2744 = vmatpush1.msra.mxu0 %v613
        %2745 = vmatprep.subr.mxu0 %v618
        %2746 = vmatpush1.msra.mxu0 %v617
        %2747 = vmatprep.subr.mxu0 %v622
        %2748 = vmatpush1.msra.mxu0 %v621
        %2749 = vmatprep.subr.mxu0 %v626
        %2750 = vmatpush1.msra.mxu0 %v625
        %2751 = vmatprep.subr.mxu0 %v630
        %2752 = vmatpush1.msra.mxu0 %v629
        %2753 = vmatprep.subr.mxu0 %v634
        %2754 = vmatpush1.msra.mxu0 %v633
        %2755 = vmatprep.subr.mxu0 0.0
        %2756 = vmatpush1.msra.mxu0 0.0
        %2757 = vmatprep.subr.mxu0 0.0
        %2758 = vmatpush1.msra.mxu0 0.0
        %2759 = vmatprep.subr.mxu0 0.0
        %2760 = vmatpush1.msra.mxu0 0.0
        %2761 = vmatprep.subr.mxu0 0.0
        %2762 = vmatpush1.msra.mxu0 0.0
        %2763 = vmatprep.subr.mxu0 0.0
        %2764 = vmatpush1.msra.mxu0 0.0
        %2765 = vmatprep.subr.mxu0 0.0
        %2766 = vmatpush1.msra.mxu0 0.0
        %2767 = vmatprep.subr.mxu0 0.0
        %2768 = vmatpush1.msra.mxu0 0.0
        %2769 = vmatprep.subr.mxu0 0.0
        %2770 = vmatpush1.msra.mxu0 0.0
        %2771 = vmatprep.subr.mxu0 0.0
        %2772 = vmatpush1.msra.mxu0 0.0
        %2773 = vmatprep.subr.mxu0 0.0
        %2774 = vmatpush1.msra.mxu0 0.0
        %2775 = vmatprep.subr.mxu0 0.0
        %2776 = vmatpush1.msra.mxu0 0.0
        %2777 = vmatprep.subr.mxu0 0.0
        %2778 = vmatpush1.msra.mxu0 0.0
        %2779 = vmatprep.subr.mxu0 0.0
        %2780 = vmatpush1.msra.mxu0 0.0
        %2781 = vmatprep.subr.mxu0 0.0
        %2782 = vmatpush1.msra.mxu0 0.0
        %2783 = vmatprep.subr.mxu0 0.0
        %2784 = vmatpush1.msra.mxu0 0.0
        %2785 = vmatprep.subr.mxu0 0.0
        %2786 = vmatpush1.msra.mxu0 0.0
        %2787 = vmatprep.mubr.f32.mxu0 0.0
        %2788 = vmatmul.mubr.f32.gmra.mrb[0].mxu0 %v2705
        %v2789 = vpop.f32.mrb[0].mxu0
        %v2790 = vadd.f32 %v2710, %v2789
        %v2791 = vpop.f32.mrb[0].mxu0
        %v2792 = vadd.f32 %v2714, %v2791
        %2793 = vmatprep.mubr.f32.mxu0 0.0
        %2794 = vmatmul.mubr.f32.gmra.mrb[0].mxu0 %v2706
        %v2795 = vpop.f32.mrb[0].mxu0
        %v2796 = vadd.f32 %v2710, %v2795
        %v2797 = vpop.f32.mrb[0].mxu0
        %v2798 = vadd.f32 %v2714, %v2797
        %2799 = vdwg.mxu0
        %2800 = vmatprep.subr.mxu0 %v576
        %2801 = vmatpush1.msra.mxu0 %v575
        %2802 = vmatprep.subr.mxu0 %v580
        %2803 = vmatpush1.msra.mxu0 %v579
        %2804 = vmatprep.subr.mxu0 %v584
        %2805 = vmatpush1.msra.mxu0 %v583
        %2806 = vmatprep.subr.mxu0 %v588
        %2807 = vmatpush1.msra.mxu0 %v587
        %2808 = vmatprep.subr.mxu0 %v592
        %2809 = vmatpush1.msra.mxu0 %v591
        %2810 = vmatprep.subr.mxu0 %v596
        %2811 = vmatpush1.msra.mxu0 %v595
        %2812 = vmatprep.subr.mxu0 %v600
        %2813 = vmatpush1.msra.mxu0 %v599
        %2814 = vmatprep.subr.mxu0 %v604
        %2815 = vmatpush1.msra.mxu0 %v603
        %2816 = vmatprep.subr.mxu0 %v608
        %2817 = vmatpush1.msra.mxu0 %v607
        %2818 = vmatprep.subr.mxu0 %v612
        %2819 = vmatpush1.msra.mxu0 %v611
        %2820 = vmatprep.subr.mxu0 %v616
        %2821 = vmatpush1.msra.mxu0 %v615
        %2822 = vmatprep.subr.mxu0 %v620
        %2823 = vmatpush1.msra.mxu0 %v619
        %2824 = vmatprep.subr.mxu0 %v624
        %2825 = vmatpush1.msra.mxu0 %v623
        %2826 = vmatprep.subr.mxu0 %v628
        %2827 = vmatpush1.msra.mxu0 %v627
        %2828 = vmatprep.subr.mxu0 %v632
        %2829 = vmatpush1.msra.mxu0 %v631
        %2830 = vmatprep.subr.mxu0 %v636
        %2831 = vmatpush1.msra.mxu0 %v635
        %2832 = vmatprep.subr.mxu0 0.0
        %2833 = vmatpush1.msra.mxu0 0.0
        %2834 = vmatprep.subr.mxu0 0.0
        %2835 = vmatpush1.msra.mxu0 0.0
        %2836 = vmatprep.subr.mxu0 0.0
        %2837 = vmatpush1.msra.mxu0 0.0
        %2838 = vmatprep.subr.mxu0 0.0
        %2839 = vmatpush1.msra.mxu0 0.0
        %2840 = vmatprep.subr.mxu0 0.0
        %2841 = vmatpush1.msra.mxu0 0.0
        %2842 = vmatprep.subr.mxu0 0.0
        %2843 = vmatpush1.msra.mxu0 0.0
        %2844 = vmatprep.subr.mxu0 0.0
        %2845 = vmatpush1.msra.mxu0 0.0
        %2846 = vmatprep.subr.mxu0 0.0
        %2847 = vmatpush1.msra.mxu0 0.0
        %2848 = vmatprep.subr.mxu0 0.0
        %2849 = vmatpush1.msra.mxu0 0.0
        %2850 = vmatprep.subr.mxu0 0.0
        %2851 = vmatpush1.msra.mxu0 0.0
        %2852 = vmatprep.subr.mxu0 0.0
        %2853 = vmatpush1.msra.mxu0 0.0
        %2854 = vmatprep.subr.mxu0 0.0
        %2855 = vmatpush1.msra.mxu0 0.0
        %2856 = vmatprep.subr.mxu0 0.0
        %2857 = vmatpush1.msra.mxu0 0.0
        %2858 = vmatprep.subr.mxu0 0.0
        %2859 = vmatpush1.msra.mxu0 0.0
        %2860 = vmatprep.subr.mxu0 0.0
        %2861 = vmatpush1.msra.mxu0 0.0
        %2862 = vmatprep.subr.mxu0 0.0
        %2863 = vmatpush1.msra.mxu0 0.0
        %2864 = vmatprep.mubr.f32.mxu0 0.0
        %2865 = vmatmul.mubr.f32.gmra.mrb[0].mxu0 %v2705
        %v2866 = vpop.f32.mrb[0].mxu0
        %v2867 = vadd.f32 %v2718, %v2866
        %v2868 = vpop.f32.mrb[0].mxu0
        %v2869 = vadd.f32 %v2722, %v2868
        %2870 = vmatprep.mubr.f32.mxu0 0.0
        %2871 = vmatmul.mubr.f32.gmra.mrb[0].mxu0 %v2706
        %v2872 = vpop.f32.mrb[0].mxu0
        %v2873 = vadd.f32 %v2718, %v2872
        %v2874 = vpop.f32.mrb[0].mxu0
        %v2875 = vadd.f32 %v2722, %v2874
        %2876 = vdwg.mxu0
        %v2877 = vmul.f32 %v2790, 0.5
        %v2878 = vmul.f32 %v2792, 0.5
        %v2879 = vmul.f32 %v2867, 0.5
        %v2880 = vmul.f32 %v2869, 0.5
        %v2881 = vmul.f32 %v2796, 0.5
        %v2882 = vmul.f32 %v2798, 0.5
        %v2883 = vmul.f32 %v2873, 0.5
        %v2884 = vmul.f32 %v2875, 0.5
        %v2885 = vmul.f32 %v2790, %v2790
        %v2886 = vmul.f32 %v2792, %v2792
        %v2887 = vmul.f32 %v2867, %v2867
        %v2888 = vmul.f32 %v2869, %v2869
        %v2889 = vmul.f32 %v2796, %v2796
        %v2890 = vmul.f32 %v2798, %v2798
        %v2891 = vmul.f32 %v2873, %v2873
        %v2892 = vmul.f32 %v2875, %v2875
        %v2893 = vmul.f32 %v2790, %v2885
        %v2894 = vmul.f32 %v2792, %v2886
        %v2895 = vmul.f32 %v2867, %v2887
        %v2896 = vmul.f32 %v2869, %v2888
        %v2897 = vmul.f32 %v2796, %v2889
        %v2898 = vmul.f32 %v2798, %v2890
        %v2899 = vmul.f32 %v2873, %v2891
        %v2900 = vmul.f32 %v2875, %v2892
        %v2901 = vmul.f32 %v2893, 0.044715
        %v2902 = vmul.f32 %v2894, 0.044715
        %v2903 = vmul.f32 %v2895, 0.044715
        %v2904 = vmul.f32 %v2896, 0.044715
        %v2905 = vmul.f32 %v2897, 0.044715
        %v2906 = vmul.f32 %v2898, 0.044715
        %v2907 = vmul.f32 %v2899, 0.044715
        %v2908 = vmul.f32 %v2900, 0.044715
        %v2909 = vadd.f32 %v2790, %v2901
        %v2910 = vadd.f32 %v2792, %v2902
        %v2911 = vadd.f32 %v2867, %v2903
        %v2912 = vadd.f32 %v2869, %v2904
        %v2913 = vadd.f32 %v2796, %v2905
        %v2914 = vadd.f32 %v2798, %v2906
        %v2915 = vadd.f32 %v2873, %v2907
        %v2916 = vadd.f32 %v2875, %v2908
        %v2917 = vmul.f32 %v2909, 0.7978846
        %v2918 = vmul.f32 %v2910, 0.7978846
        %v2919 = vmul.f32 %v2911, 0.7978846
        %v2920 = vmul.f32 %v2912, 0.7978846
        %v2921 = vmul.f32 %v2913, 0.7978846
        %v2922 = vmul.f32 %v2914, 0.7978846
        %v2923 = vmul.f32 %v2915, 0.7978846
        %v2924 = vmul.f32 %v2916, 0.7978846
        %v2925 = vtanh.pop %v2917
        %v2926 = vtanh.pop %v2918
        %v2927 = vtanh.pop %v2919
        %v2928 = vtanh.pop %v2920
        %v2929 = vtanh.pop %v2921
        %v2930 = vtanh.pop %v2922
        %v2931 = vtanh.pop %v2923
        %v2932 = vtanh.pop %v2924
        %v2933 = vadd.f32 %v2925, 1.0
        %v2934 = vadd.f32 %v2926, 1.0
        %v2935 = vadd.f32 %v2927, 1.0
        %v2936 = vadd.f32 %v2928, 1.0
        %v2937 = vadd.f32 %v2929, 1.0
        %v2938 = vadd.f32 %v2930, 1.0
        %v2939 = vadd.f32 %v2931, 1.0
        %v2940 = vadd.f32 %v2932, 1.0
        %v2941 = vmul.f32 %v2877, %v2933
        %v2942 = vmul.f32 %v2878, %v2934
        %v2943 = vmul.f32 %v2879, %v2935
        %v2944 = vmul.f32 %v2880, %v2936
        %v2945 = vmul.f32 %v2881, %v2937
        %v2946 = vmul.f32 %v2882, %v2938
        %v2947 = vmul.f32 %v2883, %v2939
        %v2948 = vmul.f32 %v2884, %v2940
        %v2949 = vlaneseq
        %v2950 = vshrl.u32 %v2949, 7
        %v2951 = vsub.s32 7, %v2950
        %v2952 = vrot.slane %v441, %v2951
        %2953 = vmatprep.subr.mxu0 0.0
        %2954 = vmatpush1.msra.mxu0 %v701
        %2955 = vmatprep.subr.mxu0 0.0
        %2956 = vmatpush1.msra.mxu0 %v702
        %2957 = vmatprep.subr.mxu0 0.0
        %2958 = vmatpush1.msra.mxu0 %v703
        %2959 = vmatprep.subr.mxu0 0.0
        %2960 = vmatpush1.msra.mxu0 %v704
        %2961 = vmatprep.subr.mxu0 0.0
        %2962 = vmatpush1.msra.mxu0 %v705
        %2963 = vmatprep.subr.mxu0 0.0
        %2964 = vmatpush1.msra.mxu0 %v706
        %2965 = vmatprep.subr.mxu0 0.0
        %2966 = vmatpush1.msra.mxu0 %v707
        %2967 = vmatprep.subr.mxu0 0.0
        %2968 = vmatpush1.msra.mxu0 %v708
        %2969 = vmatprep.subr.mxu0 0.0
        %2970 = vmatpush1.msra.mxu0 %v709
        %2971 = vmatprep.subr.mxu0 0.0
        %2972 = vmatpush1.msra.mxu0 %v710
        %2973 = vmatprep.subr.mxu0 0.0
        %2974 = vmatpush1.msra.mxu0 %v711
        %2975 = vmatprep.subr.mxu0 0.0
        %2976 = vmatpush1.msra.mxu0 %v712
        %2977 = vmatprep.subr.mxu0 0.0
        %2978 = vmatpush1.msra.mxu0 %v713
        %2979 = vmatprep.subr.mxu0 0.0
        %2980 = vmatpush1.msra.mxu0 %v714
        %2981 = vmatprep.subr.mxu0 0.0
        %2982 = vmatpush1.msra.mxu0 %v715
        %2983 = vmatprep.subr.mxu0 0.0
        %2984 = vmatpush1.msra.mxu0 %v716
        %2985 = vmatprep.subr.mxu0 0.0
        %2986 = vmatpush1.msra.mxu0 %v717
        %2987 = vmatprep.subr.mxu0 0.0
        %2988 = vmatpush1.msra.mxu0 %v718
        %2989 = vmatprep.subr.mxu0 0.0
        %2990 = vmatpush1.msra.mxu0 %v719
        %2991 = vmatprep.subr.mxu0 0.0
        %2992 = vmatpush1.msra.mxu0 %v720
        %2993 = vmatprep.subr.mxu0 0.0
        %2994 = vmatpush1.msra.mxu0 %v721
        %2995 = vmatprep.subr.mxu0 0.0
        %2996 = vmatpush1.msra.mxu0 %v722
        %2997 = vmatprep.subr.mxu0 0.0
        %2998 = vmatpush1.msra.mxu0 %v723
        %2999 = vmatprep.subr.mxu0 0.0
        %3000 = vmatpush1.msra.mxu0 %v724
        %3001 = vmatprep.subr.mxu0 0.0
        %3002 = vmatpush1.msra.mxu0 %v725
        %3003 = vmatprep.subr.mxu0 0.0
        %3004 = vmatpush1.msra.mxu0 %v726
        %3005 = vmatprep.subr.mxu0 0.0
        %3006 = vmatpush1.msra.mxu0 %v727
        %3007 = vmatprep.subr.mxu0 0.0
        %3008 = vmatpush1.msra.mxu0 %v728
        %3009 = vmatprep.subr.mxu0 0.0
        %3010 = vmatpush1.msra.mxu0 %v729
        %3011 = vmatprep.subr.mxu0 0.0
        %3012 = vmatpush1.msra.mxu0 %v730
        %3013 = vmatprep.subr.mxu0 0.0
        %3014 = vmatpush1.msra.mxu0 %v731
        %3015 = vmatprep.subr.mxu0 0.0
        %3016 = vmatpush1.msra.mxu0 %v732
        %3017 = vmatprep.mubr.f32.mxu0 %v2942
        %3018 = vmatmul.mubr.f32.gmra.mrb[0].mxu0 %v2941
        %v3019 = vpop.f32.mrb[0].mxu0
        %v3020 = vadd.f32 %v2952, %v3019
        %v3021 = vpop.f32.mrb[0].mxu0
        %3022 = vmatprep.mubr.f32.mxu0 %v2946
        %3023 = vmatmul.mubr.f32.gmra.mrb[0].mxu0 %v2945
        %v3024 = vpop.f32.mrb[0].mxu0
        %v3025 = vadd.f32 %v2952, %v3024
        %v3026 = vpop.f32.mrb[0].mxu0
        %3027 = vdwg.mxu0
        %3028 = vmatprep.subr.mxu0 0.0
        %3029 = vmatpush1.msra.mxu0 %v733
        %3030 = vmatprep.subr.mxu0 0.0
        %3031 = vmatpush1.msra.mxu0 %v734
        %3032 = vmatprep.subr.mxu0 0.0
        %3033 = vmatpush1.msra.mxu0 %v735
        %3034 = vmatprep.subr.mxu0 0.0
        %3035 = vmatpush1.msra.mxu0 %v736
        %3036 = vmatprep.subr.mxu0 0.0
        %3037 = vmatpush1.msra.mxu0 %v737
        %3038 = vmatprep.subr.mxu0 0.0
        %3039 = vmatpush1.msra.mxu0 %v738
        %3040 = vmatprep.subr.mxu0 0.0
        %3041 = vmatpush1.msra.mxu0 %v739
        %3042 = vmatprep.subr.mxu0 0.0
        %3043 = vmatpush1.msra.mxu0 %v740
        %3044 = vmatprep.subr.mxu0 0.0
        %3045 = vmatpush1.msra.mxu0 %v741
        %3046 = vmatprep.subr.mxu0 0.0
        %3047 = vmatpush1.msra.mxu0 %v742
        %3048 = vmatprep.subr.mxu0 0.0
        %3049 = vmatpush1.msra.mxu0 %v743
        %3050 = vmatprep.subr.mxu0 0.0
        %3051 = vmatpush1.msra.mxu0 %v744
        %3052 = vmatprep.subr.mxu0 0.0
        %3053 = vmatpush1.msra.mxu0 %v745
        %3054 = vmatprep.subr.mxu0 0.0
        %3055 = vmatpush1.msra.mxu0 %v746
        %3056 = vmatprep.subr.mxu0 0.0
        %3057 = vmatpush1.msra.mxu0 %v747
        %3058 = vmatprep.subr.mxu0 0.0
        %3059 = vmatpush1.msra.mxu0 %v748
        %3060 = vmatprep.subr.mxu0 0.0
        %3061 = vmatpush1.msra.mxu0 %v749
        %3062 = vmatprep.subr.mxu0 0.0
        %3063 = vmatpush1.msra.mxu0 %v750
        %3064 = vmatprep.subr.mxu0 0.0
        %3065 = vmatpush1.msra.mxu0 %v751
        %3066 = vmatprep.subr.mxu0 0.0
        %3067 = vmatpush1.msra.mxu0 %v752
        %3068 = vmatprep.subr.mxu0 0.0
        %3069 = vmatpush1.msra.mxu0 %v753
        %3070 = vmatprep.subr.mxu0 0.0
        %3071 = vmatpush1.msra.mxu0 %v754
        %3072 = vmatprep.subr.mxu0 0.0
        %3073 = vmatpush1.msra.mxu0 %v755
        %3074 = vmatprep.subr.mxu0 0.0
        %3075 = vmatpush1.msra.mxu0 %v756
        %3076 = vmatprep.subr.mxu0 0.0
        %3077 = vmatpush1.msra.mxu0 %v757
        %3078 = vmatprep.subr.mxu0 0.0
        %3079 = vmatpush1.msra.mxu0 %v758
        %3080 = vmatprep.subr.mxu0 0.0
        %3081 = vmatpush1.msra.mxu0 %v759
        %3082 = vmatprep.subr.mxu0 0.0
        %3083 = vmatpush1.msra.mxu0 %v760
        %3084 = vmatprep.subr.mxu0 0.0
        %3085 = vmatpush1.msra.mxu0 %v761
        %3086 = vmatprep.subr.mxu0 0.0
        %3087 = vmatpush1.msra.mxu0 %v762
        %3088 = vmatprep.subr.mxu0 0.0
        %3089 = vmatpush1.msra.mxu0 %v763
        %3090 = vmatprep.subr.mxu0 0.0
        %3091 = vmatpush1.msra.mxu0 %v764
        %3092 = vmatprep.mubr.f32.mxu0 %v2944
        %3093 = vmatmul.mubr.f32.gmra.mrb[0].mxu0 %v2943
        %v3094 = vpop.f32.mrb[0].mxu0
        %v3095 = vadd.f32 %v3020, %v3094
        %v3096 = vpop.f32.mrb[0].mxu0
        %3097 = vmatprep.mubr.f32.mxu0 %v2948
        %3098 = vmatmul.mubr.f32.gmra.mrb[0].mxu0 %v2947
        %v3099 = vpop.f32.mrb[0].mxu0
        %v3100 = vadd.f32 %v3025, %v3099
        %v3101 = vpop.f32.mrb[0].mxu0
        %3102 = vdwg.mxu0
        %v3103 = vadd.f32 %v2657, %v3095
        %v3104 = vadd.f32 %v2658, %v3100
        %3105 = vst [vmem:[#allocation11] sm:$0xff] %v3103
        %3106 = vst [vmem:[#allocation11 + $0x8] sm:$0xff] %v3104
        // Predicated region
        $region69: #{tpu_custom_call.1} parent=43 // pred_check
          %p3107 = pneg %p211
        $region70: #{tpu_custom_call.1} parent=43 // pred_check_branch
          %3109 = sbr.rel (%p3107) target = $region72
        $region71: #{tpu_custom_call.1} parent=43 // pred_region
          %s3110 = smul.u32 2, %s29
          %s3112 = ssub.s32 256, 256
          %3113 = vsyncadd [#allocation4], %s3112
          %s3114 = smul.addr %s3110, 128
          %s3115 = scalar_lea.hbm %s6, %s3114
          %s3116 = sshll.u32 [#allocation11], 4
          %s3117 = int_to_ptr.vmem [resolvable:$true] %s3116
          %3122 = dma.vmem_to_hbm [thread:$0]  %s3117, 256, %s3115, [#allocation4], 128, 128, 8
        $region72: #{tpu_custom_call.1} parent=43 // pred_fallthru
          _
        // Predicated region
        $region73: #{tpu_custom_call.1} parent=43 // pred_check
          %p3123 = pneg %p211
        $region74: #{tpu_custom_call.1} parent=43 // pred_check_branch
          %3125 = sbr.rel (%p3123) target = $region76
        $region75: #{tpu_custom_call.1} parent=43 // pred_region
          %3126 = dma.done [#allocation4], 256
        $region76: #{tpu_custom_call.1} parent=43 // pred_fallthru
          _
      $region44: #{tpu_custom_call.1} parent=5 // pred_fallthru
        _
      %p3127 = scmp.le.s32.totalorder 2, %s20
      // Predicated region
      $region77: #{tpu_custom_call.1} parent=5 // pred_check
        %p3128 = pneg %p3127
      $region78: #{tpu_custom_call.1} parent=5 // pred_check_branch
        %3130 = sbr.rel (%p3128) target = $region80
      $region79: #{tpu_custom_call.1} parent=5 // pred_region
        %s3131 = ssub.s32 %s20, 2
      $region80: #{tpu_custom_call.1} parent=5 // pred_fallthru
        _
    $region6: #{tpu_custom_call.1} parent=1 // loop_footer
      %s24 = sadd.s32 1, %s20
    $region7: #{tpu_custom_call.1} parent=1 // loop_footer_branch
      %19 = sbr.rel target = $region3
    $region8: #{tpu_custom_call.1} parent=1 // loop_exit
      _
    %3132 = vsyncpa [#allocation3], 1
    %s3133 = scalar_lea.sflag [#allocation3], 1
    %3134 = vsyncpa %s3133, 1
    %3135 = vsyncpa [#allocation6], 1
    %s3136 = scalar_lea.sflag [#allocation6], 1
    %3137 = vsyncpa %s3136, 1
    %3138 = vsyncpa [#allocation9], 1
    %s3139 = scalar_lea.sflag [#allocation9], 1
    %3140 = vsyncpa %s3139, 1
    %3141 = vsyncpa [#allocation4], 1
    %s3142 = scalar_lea.sflag [#allocation4], 1
    %3143 = vsyncpa %s3142, 1

</llo_original>
